<compile_context>
chip_gen: v5e
topology: v5e:2x2
jax: 0.10.0
libtpu: 0.0.40
codegen_flags: <defaults>
</compile_context>

<pallas_src>
import functools
import math

import jax
import jax.numpy as jnp
from jax import lax
from jax.experimental import pallas as pl
from jax.experimental.pallas import tpu as pltpu


# --------------------------------------------------------------------------- kernel

def _fused_encdec_kernel(cols_ref, cw_ref, cb_ref, w1_ref, b1_ref, g_ref, beta_ref,
                         w2_ref, b2_ref, o_ref, acc_ref, *, inv_spatial):
    """Fused patchify-conv -> spatial mean -> MLP classification head.

    Grid: (N // BN, S // TS); axis 0 = batch block ("parallel"), axis 1 = row-tile
    reduction ("arbitrary"). Block views:
      cols_ref: (BN, TS, K)  bf16 im2col rows of BN samples
      cw_ref:   (K, C)  bf16 conv weight        cb_ref: (1, C) f32 conv bias
      w1_ref:   (C, H4) bf16                    b1/g/beta: (1, H4) f32
      w2_ref:   (H4, NCp) bf16                  b2_ref: (1, NCp) f32 (NCp = classes pad 128)
      o_ref:    (BN, 1, NCp) f32 logits
      acc_ref:  (BN, C) f32 VMEM scratch: running spatial sum of the conv output
    """
    s = pl.program_id(1)

    @pl.when(s == 0)
    def _init():
        acc_ref[...] = jnp.zeros_like(acc_ref)

    # Patchify conv on this row tile: bf16 operands into the MXU, f32 accumulation.
    bn, ts, k = cols_ref.shape
    feat = jnp.dot(cols_ref[...].reshape(bn * ts, k), cw_ref[...],
                   preferred_element_type=jnp.float32)               # (BN*TS, C)
    # Running per-sample spatial sum (sublane reduction -> (BN, C)).
    acc_ref[...] += feat.reshape(bn, ts, -1).sum(axis=1)

    @pl.when(s == pl.num_programs(1) - 1)
    def _finalize():
        # Spatial mean == xx.mean((-1, -2)); conv bias is a per-channel constant so it
        # commutes with the mean and is added once here.
        pooled = acc_ref[...] * inv_spatial + cb_ref[...]             # (BN, C) f32

        # Linear(in_dim, in_dim * mlp_ratio): bf16 operands, f32 accumulation.
        h = jnp.dot(pooled.astype(jnp.bfloat16), w1_ref[...],
                    preferred_element_type=jnp.float32) + b1_ref[...]
        # nn.GELU() (exact, erf-based) -- elementwise stays f32.
        h = 0.5 * h * (1.0 + lax.erf(h * jnp.float32(1.0 / math.sqrt(2.0))))
        # nn.LayerNorm(eps=1e-5), biased variance -- f32.
        mu = jnp.mean(h, axis=-1, keepdims=True)
        var = jnp.mean(jnp.square(h - mu), axis=-1, keepdims=True)
        h = (h - mu) * lax.rsqrt(var + 1e-5)
        h = h * g_ref[...] + beta_ref[...]
        # Linear(in_dim * mlp_ratio, num_classes_padded) -> lane-dense (128-wide) store.
        logits = jnp.dot(h.astype(jnp.bfloat16), w2_ref[...],
                         preferred_element_type=jnp.float32) + b2_ref[...]
        o_ref[...] = logits.reshape(o_ref.shape)


# --------------------------------------------------------------------------- tiling helpers

def _pick_batch_block(n, target=8):
    """Largest divisor of n up to `target`, preferring to keep >= 2 grid steps on the
    batch axis so the 'parallel' dim still shards across both v7x TensorCores."""
    divisors = [d for d in range(1, n + 1) if n % d == 0 and d <= target]
    keep_two = [d for d in divisors if n // d >= 2]
    pool = keep_two if keep_two else divisors
    return max(pool) if pool else 1


def _pick_row_tile(s_total, bytes_per_row, budget_bytes=2 << 20):
    """Largest multiple-of-16 divisor of S whose bf16 cols chunk fits ~budget_bytes."""
    target = max(16, budget_bytes // max(bytes_per_row, 1))
    divs16 = [t for t in range(16, s_total + 1, 16) if s_total % t == 0]
    if not divs16:
        return s_total                       # full-extent fallback (block dim == array dim)
    fits = [t for t in divs16 if t <= target]
    return max(fits) if fits else min(divs16)


def _vmem_limit_bytes():
    """Generation-aware VMEM budget: ~3/4 of physical (≈96 MiB v5e/v6e, ≈48 MiB v7x)."""
    try:
        cap = int(pltpu.get_tpu_info().vmem_capacity_bytes)
    except Exception:
        cap = 64 * 1024 * 1024               # conservative fallback, safe on all gens
    return min((cap * 3) // 4, 112 * 1024 * 1024)


# --------------------------------------------------------------------------- wrapper

def encoder_decoder_forward(x, params, *, crop_size, patch, num_classes,
                            row_tile=None, batch_block=None, cols_budget_bytes=2 << 20):
    """EncoderDecoder.forward(x) for dataset='inaturalist', cls_head='naive'.

    x: (N, C, H, W) NCHW float32. Returns {'label': (N, num_classes) f32 logits}.
    """
    N, C, H, W = x.shape
    assert H % crop_size == 0 and W % crop_size == 0
    # Chip + per-chip patchify-conv + un-chip is, for the mean-pool classification head,
    # exactly a spatial permutation of the plain patchify-conv on the full image
    # (requires crop_size % patch == 0), so the chip/un-chip rearranges are folded away.
    assert crop_size % patch == 0 and H % patch == 0 and W % patch == 0

    Hp, Wp = H // patch, W // patch
    S = Hp * Wp                  # spatial positions per sample
    K = C * patch * patch        # im2col contraction dim

    # Chipping + im2col composed into one reshape/transpose, cast to bf16 for the MXU.
    # allow_input_fusion below lets XLA fuse this producer into the pallas_call so no
    # separate `cols` copy has to land in HBM. Row order within a sample is irrelevant
    # (mean pool); K is flattened (c, ph, pw) to match conv_w's layout.
    cols = (x.reshape(N, C, Hp, patch, Wp, patch)
             .transpose(0, 2, 4, 1, 3, 5)
             .reshape(N, S, K)
             .astype(jnp.bfloat16))

    feat_ch = params["conv_w"].shape[1]
    hidden = params["cls_w1"].shape[1]

    # Lane-pad the class dimension to a multiple of 128 (unmasked vst stores); padded
    # weight/bias columns are zero and padded logits are sliced off below.
    ncp = ((num_classes + 127) // 128) * 128
    w2p = jnp.pad(params["cls_w2"], ((0, 0), (0, ncp - num_classes))).astype(jnp.bfloat16)
    b2p = jnp.pad(params["cls_b2"], ((0, 0), (0, ncp - num_classes)))

    bn = batch_block if batch_block is not None else _pick_batch_block(N)
    assert N % bn == 0, f"batch block {bn} must divide batch {N}"
    ts = row_tile if row_tile is not None else _pick_row_tile(S, bn * K * 2, cols_budget_bytes)
    assert S % ts == 0, f"row tile {ts} must divide spatial size {S}"
    grid = (N // bn, S // ts)

    operands = (
        cols,
        params["conv_w"].astype(jnp.bfloat16), params["conv_b"],
        params["cls_w1"].astype(jnp.bfloat16), params["cls_b1"],
        params["ln_g"], params["ln_b"],
        w2p, b2p,
    )

    # Weights / biases: single block, constant index_map, single-buffered VMEM-resident.
    resident = lambda n, s: (0, 0)
    wspec = lambda shape: pl.BlockSpec(shape, resident, pipeline_mode=pl.Buffered(1))

    cost = pl.CostEstimate(
        flops=2 * N * S * K * feat_ch + 2 * N * (feat_ch * hidden + hidden * ncp),
        transcendentals=N * hidden,
        bytes_accessed=(N * S * K * 2 + K * feat_ch * 2 + feat_ch * hidden * 2
                        + hidden * ncp * 2 + (3 * hidden + feat_ch + ncp) * 4
                        + N * ncp * 4),
    )

    kernel = functools.partial(_fused_encdec_kernel, inv_spatial=1.0 / float(S))

    logits_padded = pl.pallas_call(
        kernel,
        out_shape=jax.ShapeDtypeStruct((N, 1, ncp), jnp.float32),
        grid_spec=pltpu.PrefetchScalarGridSpec(
            num_scalar_prefetch=0,
            grid=grid,
            in_specs=[
                pl.BlockSpec((bn, ts, K), lambda n, s: (n, s, 0)),   # im2col row tile
                wspec((K, feat_ch)),                                 # conv weight (bf16)
                wspec((1, feat_ch)),                                 # conv bias (f32)
                wspec((feat_ch, hidden)),                            # cls_w1 (bf16)
                wspec((1, hidden)),                                  # cls_b1
                wspec((1, hidden)),                                  # LayerNorm gamma
                wspec((1, hidden)),                                  # LayerNorm beta
                wspec((hidden, ncp)),                                # cls_w2 (bf16, padded)
                wspec((1, ncp)),                                     # cls_b2 (padded)
            ],
            out_specs=pl.BlockSpec((bn, 1, ncp), lambda n, s: (n, 0, 0)),
            scratch_shapes=[pltpu.VMEM((bn, feat_ch), jnp.float32)],
        ),
        compiler_params=pltpu.CompilerParams(
            # Batch-block axis shards across TensorCores (v7x megacore); the row-tile
            # axis is a reduction feeding a VMEM accumulator -> "arbitrary".
            dimension_semantics=("parallel", "arbitrary"),
            vmem_limit_bytes=_vmem_limit_bytes(),
            # Let XLA fuse the im2col transpose / bf16 casts / class padding into the
            # custom call instead of materializing extra HBM copies.
            allow_input_fusion=[True] * len(operands),
        ),
        cost_estimate=cost,
    )(*operands)
    return {"label": logits_padded[:, 0, :num_classes]}


# --------------------------------------------------------------------------- params

def make_params(key, in_ch, patch, feat_ch, num_classes, mlp_ratio):
    """Deterministic synthetic parameters (AbstractModel._initialize_weights style)."""
    k1, k2, k3 = jax.random.split(key, 3)
    fan_in_conv = in_ch * patch * patch
    hidden = feat_ch * mlp_ratio
    return {
        # Conv2d: kaiming_normal_ weight, zero bias. Layout is (C*k*k, Cout): importing
        # real PyTorch Conv2d weights requires w.reshape(Cout, C*k*k).T to match.
        "conv_w": jax.random.normal(k1, (fan_in_conv, feat_ch), jnp.float32)
        * math.sqrt(2.0 / fan_in_conv),
        "conv_b": jnp.zeros((1, feat_ch), jnp.float32),
        # ClassificationDecoder MLP (deterministic Linear-like init)
        "cls_w1": jax.random.normal(k2, (feat_ch, hidden), jnp.float32)
        * (1.0 / math.sqrt(feat_ch)),
        "cls_b1": jnp.zeros((1, hidden), jnp.float32),
        "ln_g": jnp.ones((1, hidden), jnp.float32),
        "ln_b": jnp.zeros((1, hidden), jnp.float32),
        "cls_w2": jax.random.normal(k3, (hidden, num_classes), jnp.float32)
        * (1.0 / math.sqrt(hidden)),
        "cls_b2": jnp.zeros((1, num_classes), jnp.float32),
    }


# --------------------------------------------------------------------------- reference

def _reference_forward(x, params, *, patch):
    """Pure-JAX reference mirroring the kernel's bf16-operand / f32-accumulate matmuls."""
    N, C, H, W = x.shape
    Hp, Wp = H // patch, W // patch
    cols = (x.reshape(N, C, Hp, patch, Wp, patch)
             .transpose(0, 2, 4, 1, 3, 5)
             .reshape(N, Hp * Wp, C * patch * patch)
             .astype(jnp.bfloat16))
    feat = jnp.einsum("nsk,kc->nsc", cols, params["conv_w"].astype(jnp.bfloat16),
                      preferred_element_type=jnp.float32)
    pooled = jnp.mean(feat, axis=1) + params["conv_b"]
    h = jnp.dot(pooled.astype(jnp.bfloat16), params["cls_w1"].astype(jnp.bfloat16),
                preferred_element_type=jnp.float32) + params["cls_b1"]
    h = 0.5 * h * (1.0 + lax.erf(h / jnp.sqrt(jnp.float32(2.0))))
    mu = jnp.mean(h, axis=-1, keepdims=True)
    var = jnp.mean((h - mu) ** 2, axis=-1, keepdims=True)
    h = (h - mu) * lax.rsqrt(var + 1e-5) * params["ln_g"] + params["ln_b"]
    return jnp.dot(h.astype(jnp.bfloat16), params["cls_w2"].astype(jnp.bfloat16),
                   preferred_element_type=jnp.float32) + params["cls_b2"]


# --------------------------------------------------------------------------- main

if __name__ == "__main__":
    key = jax.random.PRNGKey(0)
    kx, kp = jax.random.split(key)

    # in_ch=3, spatial=64, crop_size=32 -> n_chip=2 (exercises the chipping path),
    # patch=4 -> 256 spatial positions per sample, feat_ch lane-dense (multiple of 128).
    C, crop_size, patch = 3, 32, 4
    feat_ch, num_classes, mlp_ratio = 128, 10, 4
    params = make_params(kp, C, patch, feat_ch, num_classes, mlp_ratio)

    # Three configs: (a) N=2, auto tiles (single reduction step, byte-budgeted tile),
    # (b) N=2 with a forced small row tile (exercises the multi-step accumulator path),
    # (c) N=8, auto (exercises the batched BN>1 head path with grid axis 0 length 2).
    configs = [(2, None), (2, 64), (8, None)]
    for N, rt in configs:
        x = jax.random.normal(jax.random.fold_in(kx, N * 1000 + (rt or 0)),
                              (N, C, 64, 64), jnp.float32)            # layout: NCHW
        fwd = jax.jit(functools.partial(
            encoder_decoder_forward,
            crop_size=crop_size, patch=patch, num_classes=num_classes, row_tile=rt))
        out = fwd(x, params)
        logits = jax.block_until_ready(out["label"])

        assert logits.shape == (N, num_classes)
        assert bool(jnp.all(jnp.isfinite(logits)))

        ref = _reference_forward(x, params, patch=patch)
        err = float(jnp.max(jnp.abs(logits - ref)))
        # Loose bound: covers accumulation-order and XLA-vs-Mosaic bf16 matmul deltas.
        assert err < 1e-1, f"kernel/reference mismatch (N={N}, row_tile={rt}): {err}"

    print("KERNEL_OK")
</pallas_src>

<mosaic_0001>
module attributes {stable_mosaic.version = 11 : i64} {
  func.func @_fused_encdec_kernel(%arg0: i32, %arg1: i32, %arg2: memref<1x256x48xbf16, #tpu.memory_space<vmem>>, %arg3: memref<48x128xbf16, #tpu.memory_space<vmem>>, %arg4: memref<1x128xf32, #tpu.memory_space<vmem>>, %arg5: memref<128x512xbf16, #tpu.memory_space<vmem>>, %arg6: memref<1x512xf32, #tpu.memory_space<vmem>>, %arg7: memref<1x512xf32, #tpu.memory_space<vmem>>, %arg8: memref<1x512xf32, #tpu.memory_space<vmem>>, %arg9: memref<512x128xbf16, #tpu.memory_space<vmem>>, %arg10: memref<1x128xf32, #tpu.memory_space<vmem>>, %arg11: memref<1x1x128xf32, #tpu.memory_space<vmem>>, %arg12: memref<1x128xf32, #tpu.memory_space<vmem>>) attributes {dimension_semantics = [#tpu.dimension_semantics<parallel>, #tpu.dimension_semantics<arbitrary>], iteration_bounds = array<i64: 2, 1>, scalar_prefetch = 0 : i64, scratch_operands = 1 : i64, tpu.core_type = #tpu.core_type<tc>, window_params = [{transform_indices = @transform_0, window_bounds = array<i64: 1, 256, 48>}, {pipeline_mode = #tpu.pipeline_mode<synchronous>, transform_indices = @transform_1, window_bounds = array<i64: 48, 128>}, {pipeline_mode = #tpu.pipeline_mode<synchronous>, transform_indices = @transform_2, window_bounds = array<i64: 1, 128>}, {pipeline_mode = #tpu.pipeline_mode<synchronous>, transform_indices = @transform_3, window_bounds = array<i64: 128, 512>}, {pipeline_mode = #tpu.pipeline_mode<synchronous>, transform_indices = @transform_4, window_bounds = array<i64: 1, 512>}, {pipeline_mode = #tpu.pipeline_mode<synchronous>, transform_indices = @transform_5, window_bounds = array<i64: 1, 512>}, {pipeline_mode = #tpu.pipeline_mode<synchronous>, transform_indices = @transform_6, window_bounds = array<i64: 1, 512>}, {pipeline_mode = #tpu.pipeline_mode<synchronous>, transform_indices = @transform_7, window_bounds = array<i64: 512, 128>}, {pipeline_mode = #tpu.pipeline_mode<synchronous>, transform_indices = @transform_8, window_bounds = array<i64: 1, 128>}, {transform_indices = @transform_9, window_bounds = array<i64: 1, 1, 128>}]} {
    %c0_i32 = arith.constant 0 : i32
    %0 = arith.cmpi eq, %arg1, %c0_i32 : i32
    %1 = arith.extui %0 : i1 to i32
    %c0_i32_0 = arith.constant 0 : i32
    %2 = arith.cmpi ne, %1, %c0_i32_0 : i32
    scf.if %2 {
      %cst_12 = arith.constant 0.000000e+00 : f32
      %15 = vector.broadcast %cst_12 : f32 to vector<1x128xf32>
      %c0_13 = arith.constant 0 : index
      %c0_14 = arith.constant 0 : index
      %16 = vector.load %arg12[%c0_13, %c0_14] : memref<1x128xf32, #tpu.memory_space<vmem>>, vector<1x128xf32>
      tpu.vector_store %arg12[%c0_13, %c0_14], %15 {strides = array<i32>} : memref<1x128xf32, #tpu.memory_space<vmem>>, vector<1x128xf32>,
    } else {
    }
    %c0 = arith.constant 0 : index
    %c0_1 = arith.constant 0 : index
    %c0_2 = arith.constant 0 : index
    %3 = vector.load %arg2[%c0, %c0_1, %c0_2] : memref<1x256x48xbf16, #tpu.memory_space<vmem>>, vector<1x256x48xbf16>
    %4 = vector.shape_cast %3 : vector<1x256x48xbf16> to vector<256x48xbf16>
    %c0_3 = arith.constant 0 : index
    %c0_4 = arith.constant 0 : index
    %5 = vector.load %arg3[%c0_3, %c0_4] : memref<48x128xbf16, #tpu.memory_space<vmem>>, vector<48x128xbf16>
    %cst = arith.constant dense<0.000000e+00> : vector<256x128xf32>
    %6 = tpu.matmul %4, %5, %cst {dimension_numbers = #tpu.dot_dimension_numbers<[1], [0], [0], [1], [0, 0, 1, 1], [], []>} : vector<256x48xbf16>, vector<48x128xbf16>, vector<256x128xf32> -> vector<256x128xf32>
    %c0_5 = arith.constant 0 : index
    %c0_6 = arith.constant 0 : index
    %7 = vector.load %arg12[%c0_5, %c0_6] : memref<1x128xf32, #tpu.memory_space<vmem>>, vector<1x128xf32>
    %8 = vector.shape_cast %6 : vector<256x128xf32> to vector<1x256x128xf32>
    %cst_7 = arith.constant dense<0.000000e+00> : vector<1x128xf32>
    %9 = vector.multi_reduction <add>, %8, %cst_7 [1] : vector<1x256x128xf32> to vector<1x128xf32>
    %10 = arith.addf %7, %9 : vector<1x128xf32>
    %c0_8 = arith.constant 0 : index
    %c0_9 = arith.constant 0 : index
    %11 = vector.load %arg12[%c0_8, %c0_9] : memref<1x128xf32, #tpu.memory_space<vmem>>, vector<1x128xf32>
    tpu.vector_store %arg12[%c0_8, %c0_9], %10 {strides = array<i32>} : memref<1x128xf32, #tpu.memory_space<vmem>>, vector<1x128xf32>,
    %c0_i32_10 = arith.constant 0 : i32
    %12 = arith.cmpi eq, %arg1, %c0_i32_10 : i32
    %13 = arith.extui %12 : i1 to i32
    %c0_i32_11 = arith.constant 0 : i32
    %14 = arith.cmpi ne, %13, %c0_i32_11 : i32
    scf.if %14 {
      %c0_12 = arith.constant 0 : index
      %c0_13 = arith.constant 0 : index
      %15 = vector.load %arg12[%c0_12, %c0_13] : memref<1x128xf32, #tpu.memory_space<vmem>>, vector<1x128xf32>
      %cst_14 = arith.constant 3.906250e-03 : f32
      %16 = vector.broadcast %cst_14 : f32 to vector<1x128xf32>
      %17 = arith.mulf %15, %16 : vector<1x128xf32>
      %c0_15 = arith.constant 0 : index
      %c0_16 = arith.constant 0 : index
      %18 = vector.load %arg4[%c0_15, %c0_16] : memref<1x128xf32, #tpu.memory_space<vmem>>, vector<1x128xf32>
      %19 = arith.addf %17, %18 : vector<1x128xf32>
      %20 = arith.truncf %19 : vector<1x128xf32> to vector<1x128xbf16>
      %c0_17 = arith.constant 0 : index
      %c0_18 = arith.constant 0 : index
      %21 = vector.load %arg5[%c0_17, %c0_18] : memref<128x512xbf16, #tpu.memory_space<vmem>>, vector<128x512xbf16>
      %cst_19 = arith.constant dense<0.000000e+00> : vector<1x512xf32>
      %22 = tpu.matmul %20, %21, %cst_19 {dimension_numbers = #tpu.dot_dimension_numbers<[1], [0], [0], [1], [0, 0, 1, 1], [], []>} : vector<1x128xbf16>, vector<128x512xbf16>, vector<1x512xf32> -> vector<1x512xf32>
      %c0_20 = arith.constant 0 : index
      %c0_21 = arith.constant 0 : index
      %23 = vector.load %arg6[%c0_20, %c0_21] : memref<1x512xf32, #tpu.memory_space<vmem>>, vector<1x512xf32>
      %24 = arith.addf %22, %23 : vector<1x512xf32>
      %cst_22 = arith.constant 5.000000e-01 : f32
      %25 = vector.broadcast %cst_22 : f32 to vector<1x512xf32>
      %26 = arith.mulf %25, %24 : vector<1x512xf32>
      %cst_23 = arith.constant 0.707106769 : f32
      %27 = vector.broadcast %cst_23 : f32 to vector<1x512xf32>
      %28 = arith.mulf %24, %27 : vector<1x512xf32>
      %29 = math.erf %28 : vector<1x512xf32>
      %cst_24 = arith.constant 1.000000e+00 : f32
      %30 = vector.broadcast %cst_24 : f32 to vector<1x512xf32>
      %31 = arith.addf %30, %29 : vector<1x512xf32>
      %32 = arith.mulf %26, %31 : vector<1x512xf32>
      %cst_25 = arith.constant dense<0.000000e+00> : vector<1xf32>
      %33 = vector.multi_reduction <add>, %32, %cst_25 [1] : vector<1x512xf32> to vector<1xf32>
      %34 = vector.shape_cast %33 : vector<1xf32> to vector<1x1xf32>
      %cst_26 = arith.constant 5.120000e+02 : f32
      %35 = vector.broadcast %cst_26 : f32 to vector<1x1xf32>
      %36 = arith.divf %34, %35 : vector<1x1xf32>
      %37 = vector.broadcast %36 : vector<1x1xf32> to vector<1x512xf32>
      %38 = arith.subf %32, %37 : vector<1x512xf32>
      %39 = arith.mulf %38, %38 : vector<1x512xf32>
      %cst_27 = arith.constant dense<0.000000e+00> : vector<1xf32>
      %40 = vector.multi_reduction <add>, %39, %cst_27 [1] : vector<1x512xf32> to vector<1xf32>
      %41 = vector.shape_cast %40 : vector<1xf32> to vector<1x1xf32>
      %cst_28 = arith.constant 5.120000e+02 : f32
      %42 = vector.broadcast %cst_28 : f32 to vector<1x1xf32>
      %43 = arith.divf %41, %42 : vector<1x1xf32>
      %44 = vector.broadcast %36 : vector<1x1xf32> to vector<1x512xf32>
      %45 = arith.subf %32, %44 : vector<1x512xf32>
      %cst_29 = arith.constant 9.99999974E-6 : f32
      %46 = vector.broadcast %cst_29 : f32 to vector<1x1xf32>
      %47 = arith.addf %43, %46 : vector<1x1xf32>
      %48 = math.rsqrt %47 : vector<1x1xf32>
      %49 = vector.broadcast %48 : vector<1x1xf32> to vector<1x512xf32>
      %50 = arith.mulf %45, %49 : vector<1x512xf32>
      %c0_30 = arith.constant 0 : index
      %c0_31 = arith.constant 0 : index
      %51 = vector.load %arg7[%c0_30, %c0_31] : memref<1x512xf32, #tpu.memory_space<vmem>>, vector<1x512xf32>
      %52 = arith.mulf %50, %51 : vector<1x512xf32>
      %c0_32 = arith.constant 0 : index
      %c0_33 = arith.constant 0 : index
      %53 = vector.load %arg8[%c0_32, %c0_33] : memref<1x512xf32, #tpu.memory_space<vmem>>, vector<1x512xf32>
      %54 = arith.addf %52, %53 : vector<1x512xf32>
      %55 = arith.truncf %54 : vector<1x512xf32> to vector<1x512xbf16>
      %c0_34 = arith.constant 0 : index
      %c0_35 = arith.constant 0 : index
      %56 = vector.load %arg9[%c0_34, %c0_35] : memref<512x128xbf16, #tpu.memory_space<vmem>>, vector<512x128xbf16>
      %cst_36 = arith.constant dense<0.000000e+00> : vector<1x128xf32>
      %57 = tpu.matmul %55, %56, %cst_36 {dimension_numbers = #tpu.dot_dimension_numbers<[1], [0], [0], [1], [0, 0, 1, 1], [], []>} : vector<1x512xbf16>, vector<512x128xbf16>, vector<1x128xf32> -> vector<1x128xf32>
      %c0_37 = arith.constant 0 : index
      %c0_38 = arith.constant 0 : index
      %58 = vector.load %arg10[%c0_37, %c0_38] : memref<1x128xf32, #tpu.memory_space<vmem>>, vector<1x128xf32>
      %59 = arith.addf %57, %58 : vector<1x128xf32>
      %60 = vector.shape_cast %59 : vector<1x128xf32> to vector<1x1x128xf32>
      %c0_39 = arith.constant 0 : index
      %c0_40 = arith.constant 0 : index
      %c0_41 = arith.constant 0 : index
      %61 = vector.load %arg11[%c0_39, %c0_40, %c0_41] : memref<1x1x128xf32, #tpu.memory_space<vmem>>, vector<1x1x128xf32>
      tpu.vector_store %arg11[%c0_39, %c0_40, %c0_41], %60 {strides = array<i32>} : memref<1x1x128xf32, #tpu.memory_space<vmem>>, vector<1x1x128xf32>,
    } else {
    }
    return
  }
  func.func @transform_0(%arg0: i32, %arg1: i32) -> (i32, i32, i32) {
    %c0_i32 = arith.constant 0 : i32
    %c0_i32_0 = arith.constant 0 : i32
    return %arg0, %arg1, %c0_i32 : i32, i32, i32
  }
  func.func @transform_1(%arg0: i32, %arg1: i32) -> (i32, i32) {
    %c0_i32 = arith.constant 0 : i32
    %c0_i32_0 = arith.constant 0 : i32
    %c0_i32_1 = arith.constant 0 : i32
    return %c0_i32, %c0_i32_0 : i32, i32
  }
  func.func @transform_2(%arg0: i32, %arg1: i32) -> (i32, i32) {
    %c0_i32 = arith.constant 0 : i32
    %c0_i32_0 = arith.constant 0 : i32
    %c0_i32_1 = arith.constant 0 : i32
    return %c0_i32, %c0_i32_0 : i32, i32
  }
  func.func @transform_3(%arg0: i32, %arg1: i32) -> (i32, i32) {
    %c0_i32 = arith.constant 0 : i32
    %c0_i32_0 = arith.constant 0 : i32
    %c0_i32_1 = arith.constant 0 : i32
    return %c0_i32, %c0_i32_0 : i32, i32
  }
  func.func @transform_4(%arg0: i32, %arg1: i32) -> (i32, i32) {
    %c0_i32 = arith.constant 0 : i32
    %c0_i32_0 = arith.constant 0 : i32
    %c0_i32_1 = arith.constant 0 : i32
    return %c0_i32, %c0_i32_0 : i32, i32
  }
  func.func @transform_5(%arg0: i32, %arg1: i32) -> (i32, i32) {
    %c0_i32 = arith.constant 0 : i32
    %c0_i32_0 = arith.constant 0 : i32
    %c0_i32_1 = arith.constant 0 : i32
    return %c0_i32, %c0_i32_0 : i32, i32
  }
  func.func @transform_6(%arg0: i32, %arg1: i32) -> (i32, i32) {
    %c0_i32 = arith.constant 0 : i32
    %c0_i32_0 = arith.constant 0 : i32
    %c0_i32_1 = arith.constant 0 : i32
    return %c0_i32, %c0_i32_0 : i32, i32
  }
  func.func @transform_7(%arg0: i32, %arg1: i32) -> (i32, i32) {
    %c0_i32 = arith.constant 0 : i32
    %c0_i32_0 = arith.constant 0 : i32
    %c0_i32_1 = arith.constant 0 : i32
    return %c0_i32, %c0_i32_0 : i32, i32
  }
  func.func @transform_8(%arg0: i32, %arg1: i32) -> (i32, i32) {
    %c0_i32 = arith.constant 0 : i32
    %c0_i32_0 = arith.constant 0 : i32
    %c0_i32_1 = arith.constant 0 : i32
    return %c0_i32, %c0_i32_0 : i32, i32
  }
  func.func @transform_9(%arg0: i32, %arg1: i32) -> (i32, i32, i32) {
    %c0_i32 = arith.constant 0 : i32
    %c0_i32_0 = arith.constant 0 : i32
    %c0_i32_1 = arith.constant 0 : i32
    return %arg0, %c0_i32, %c0_i32_0 : i32, i32, i32
  }
}

</mosaic_0001>

<llo_original>
// kernel: encoder_decoder_forward.2
$region0: #{encoder_decoder_forward.2}
  #allocation0 [shape = 'u32[]', space=smem, size = 0x4, offset = 0x4, fixed_abs, tag = 'smem constant byte address 0x4 - core index']
  #allocation1 [shape = 'u32[72,128]{1,0:T(1,128)}', space=vmem, size = 0x9000, scoped, tag = 'internal scratch']
  #allocation2 [shape = 'f32[1,128]{1,0:T(1,128)}', space=vmem, size = 0x200, scoped, tag = 'scratch operand']
  #allocation3 [shape = 'u32[2048]{0}', space=vmem, size = 0x2000, scoped, tag = 'scoped memory for encoder_decoder_forward.2']
  #allocation4 [shape = 'u32[2048]{0}', space=vmem, size = 0x2000, scoped, tag = 'scoped memory for encoder_decoder_forward.2']
  #allocation5 [shape = 'u32[2048]{0}', space=vmem, size = 0x2000, scoped, tag = 'scoped memory for encoder_decoder_forward.2']
  #allocation6 [shape = 'u32[2048]{0}', space=vmem, size = 0x2000, scoped, tag = 'scoped memory for encoder_decoder_forward.2']
  #allocation7 [shape = 'u32[2048]{0}', space=vmem, size = 0x2000, scoped, tag = 'scoped memory for encoder_decoder_forward.2']
  #allocation8 [shape = 'u32[2048]{0}', space=vmem, size = 0x2000, scoped, tag = 'scoped memory for encoder_decoder_forward.2']
  #allocation9 [shape = 'u32[2048]{0}', space=vmem, size = 0x2000, scoped, tag = 'scoped memory for encoder_decoder_forward.2']
  #allocation10 [shape = 'u32[2048]{0}', space=vmem, size = 0x2000, scoped, tag = 'scoped memory for encoder_decoder_forward.2']
  #allocation11 [shape = 'u32[2048]{0}', space=vmem, size = 0x2000, scoped, tag = 'scoped memory for encoder_decoder_forward.2']
  #allocation12 [shape = 'u32[2048]{0}', space=vmem, size = 0x2000, scoped, tag = 'scoped memory for encoder_decoder_forward.2']
  %s0 = inlined_call_operand.vmem [shape: bf16[2,256,48], index: 0, kind: input, shape index: {}]
  %s1 = inlined_call_operand.vmem [shape: f32[1,128], index: 1, kind: input, shape index: {}]
  %s2 = inlined_call_operand.vmem [shape: f32[1,512], index: 2, kind: input, shape index: {}]
  %s3 = inlined_call_operand.vmem [shape: f32[1,512], index: 3, kind: input, shape index: {}]
  %s4 = inlined_call_operand.vmem [shape: f32[1,512], index: 4, kind: input, shape index: {}]
  %s5 = inlined_call_operand.vmem [shape: bf16[512,10], index: 5, kind: input, shape index: {}]
  %s6 = inlined_call_operand.<no memory space> [shape: bf16[], index: 6, kind: input, shape index: {}]
  %s7 = inlined_call_operand.vmem [shape: f32[128,512], index: 7, kind: input, shape index: {}]
  %s8 = inlined_call_operand.vmem [shape: f32[48,128], index: 8, kind: input, shape index: {}]
  %s9 = inlined_call_operand.vmem [shape: f32[1,10], index: 9, kind: input, shape index: {}]
  %s10 = inlined_call_operand.<no memory space> [shape: f32[], index: 10, kind: input, shape index: {}]
  %s11 = inlined_call_operand.hbm [shape: f32[2,1,128], index: 11, kind: output, shape index: {}]
  %s12 = sld [smem:[#allocation0]]
  $region77: #{encoder_decoder_forward.2} parent=0
    _
  %s14 = ssub.s32 1, %s12
  %s15 = scalar_select 0, %s14, %s12
  %v16 = vstv %s6
  %v17 = vunpack.i.l.bf16 %v16
  %v19 = vunpack.i.h.bf16 %v16
  %v21 = vstv %s10
  $region1: #{encoder_decoder_forward.2} parent=0
    #allocation13 [shape = 'u8[1024]{0}', space=vmem, size = 0x400, scoped, tag = 'output window, operand 0']
    #allocation14 [shape = 's32[2]{0}', space=sflag, size = 0x8, scoped, tag = 'scoped memory for encoder_decoder_forward.2']
    %22 = vsyncpa [#allocation14], 0
    %s23 = scalar_lea.sflag [#allocation14], 1
    %24 = vsyncpa %s23, 0
    loop: start=0, step=1, limit=4
    $region2: #{encoder_decoder_forward.2} parent=1 // loop_pre_header
      _
    $region3: #{encoder_decoder_forward.2} parent=1 // loop_header
      %s26 = sphi 0, %s30
      %p27 = scmp.ge.s32.totalorder %s26, 4
      %s33 = sphi 0, %s45
      %s34 = sphi 0, %s41
      %s35 = sphi 0, %s33
      %s36 = sphi 0, %s34
      %s37 = sphi 0, %s35
      %s38 = sphi 0, %s36
      %s50 = sphi 0, %s52
      %s53 = sphi 0, %s50
      %s54 = sphi 0, %s53
      %s70 = sphi 0, %s54
      %s74 = sphi 0, %s74
      %s76 = sphi 0, %s74
      %s77 = sphi 0, %s76
      %s91 = sphi 0, %s77
      %s95 = sphi 0, %s95
      %s97 = sphi 0, %s95
      %s98 = sphi 0, %s97
      %s112 = sphi 0, %s98
      %s116 = sphi 0, %s116
      %s118 = sphi 0, %s116
      %s119 = sphi 0, %s118
      %s133 = sphi 0, %s119
      %s137 = sphi 0, %s137
      %s139 = sphi 0, %s137
      %s140 = sphi 0, %s139
      %s154 = sphi 0, %s140
      %s158 = sphi 0, %s158
      %s160 = sphi 0, %s158
      %s161 = sphi 0, %s160
      %s175 = sphi 0, %s161
      %s179 = sphi 0, %s179
      %s181 = sphi 0, %s179
      %s182 = sphi 0, %s181
      %s196 = sphi 0, %s182
      %s200 = sphi 0, %s200
      %s202 = sphi 0, %s200
      %s203 = sphi 0, %s202
      %s217 = sphi 0, %s203
      %s221 = sphi 0, %s221
      %s223 = sphi 0, %s221
      %s224 = sphi 0, %s223
      %s238 = sphi 0, %s224
      %s244 = sphi 0, %s246
      %s247 = sphi 0, %s244
      %s248 = sphi 0, %s247
      %s264 = sphi 0, %s248
    $region4: #{encoder_decoder_forward.2} parent=1 // loop_header_branch
      %29 = sbr.rel (%p27) target = $region8
    $region5: #{encoder_decoder_forward.2} parent=1 // loop_body
      %s31 = ssub.s32 %s26, 1
      %s32 = ssub.s32 %s26, 2
      %s39 = sadd.s32 1, %s34
      %p40 = scmp.ge.s32.totalorder %s39, 1
      %s41 = scalar_select %p40, 0, %s39
      %s42 = sadd.s32 1, %s33
      %s43 = scalar_select %p40, %s42, %s33
      %p44 = scmp.ge.s32.totalorder %s43, 2
      %s45 = scalar_select %p44, 0, %s43
      %s46 = ssub.s32 %s33, %s45
      %s47 = ssub.s32 %s34, %s41
      %s48 = sor.u32 %s46, %s47
      %p49 = scmp.eq.s32.totalorder %s48, 0
      %s51 = sadd.s32 %s50, 1
      %s52 = scalar_select %p49, %s50, %s51
      %p55 = pneg %p49
      %p56 = scmp.eq.s32.totalorder %s26, 1
      %p57 = por %p55, %p56
      %p58 = scmp.ne.s32.totalorder %s50, %s53
      %p59 = scmp.eq.s32.totalorder %s26, 0
      %p60 = por %p58, %p59
      %p61 = scmp.ne.s32.totalorder %s50, %s53
      %p62 = scmp.eq.s32.totalorder %s31, 1
      %p63 = por %p61, %p62
      %p64 = scmp.ne.s32.totalorder %s53, %s54
      %p65 = scmp.eq.s32.totalorder %s31, 0
      %p66 = por %p64, %p65
      %p67 = scmp.ne.s32.totalorder %s53, %s54
      %p68 = scmp.eq.s32.totalorder %s32, 1
      %p69 = por %p67, %p68
      %p71 = scmp.ne.s32.totalorder %s54, %s70
      %p72 = scmp.eq.s32.totalorder %s32, 0
      %p73 = por %p71, %p72
      %s75 = sadd.s32 %s74, 1
      %p78 = scmp.eq.s32.totalorder %s26, 1
      %p79 = scmp.ne.s32.totalorder %s74, %s76
      %p80 = scmp.eq.s32.totalorder %s26, 0
      %p81 = por %p79, %p80
      %p82 = scmp.ne.s32.totalorder %s74, %s76
      %p83 = scmp.eq.s32.totalorder %s31, 1
      %p84 = por %p82, %p83
      %p85 = scmp.ne.s32.totalorder %s76, %s77
      %p86 = scmp.eq.s32.totalorder %s31, 0
      %p87 = por %p85, %p86
      %p88 = scmp.ne.s32.totalorder %s76, %s77
      %p89 = scmp.eq.s32.totalorder %s32, 1
      %p90 = por %p88, %p89
      %p92 = scmp.ne.s32.totalorder %s77, %s91
      %p93 = scmp.eq.s32.totalorder %s32, 0
      %p94 = por %p92, %p93
      %s96 = sadd.s32 %s95, 1
      %p99 = scmp.eq.s32.totalorder %s26, 1
      %p100 = scmp.ne.s32.totalorder %s95, %s97
      %p101 = scmp.eq.s32.totalorder %s26, 0
      %p102 = por %p100, %p101
      %p103 = scmp.ne.s32.totalorder %s95, %s97
      %p104 = scmp.eq.s32.totalorder %s31, 1
      %p105 = por %p103, %p104
      %p106 = scmp.ne.s32.totalorder %s97, %s98
      %p107 = scmp.eq.s32.totalorder %s31, 0
      %p108 = por %p106, %p107
      %p109 = scmp.ne.s32.totalorder %s97, %s98
      %p110 = scmp.eq.s32.totalorder %s32, 1
      %p111 = por %p109, %p110
      %p113 = scmp.ne.s32.totalorder %s98, %s112
      %p114 = scmp.eq.s32.totalorder %s32, 0
      %p115 = por %p113, %p114
      %s117 = sadd.s32 %s116, 1
      %p120 = scmp.eq.s32.totalorder %s26, 1
      %p121 = scmp.ne.s32.totalorder %s116, %s118
      %p122 = scmp.eq.s32.totalorder %s26, 0
      %p123 = por %p121, %p122
      %p124 = scmp.ne.s32.totalorder %s116, %s118
      %p125 = scmp.eq.s32.totalorder %s31, 1
      %p126 = por %p124, %p125
      %p127 = scmp.ne.s32.totalorder %s118, %s119
      %p128 = scmp.eq.s32.totalorder %s31, 0
      %p129 = por %p127, %p128
      %p130 = scmp.ne.s32.totalorder %s118, %s119
      %p131 = scmp.eq.s32.totalorder %s32, 1
      %p132 = por %p130, %p131
      %p134 = scmp.ne.s32.totalorder %s119, %s133
      %p135 = scmp.eq.s32.totalorder %s32, 0
      %p136 = por %p134, %p135
      %s138 = sadd.s32 %s137, 1
      %p141 = scmp.eq.s32.totalorder %s26, 1
      %p142 = scmp.ne.s32.totalorder %s137, %s139
      %p143 = scmp.eq.s32.totalorder %s26, 0
      %p144 = por %p142, %p143
      %p145 = scmp.ne.s32.totalorder %s137, %s139
      %p146 = scmp.eq.s32.totalorder %s31, 1
      %p147 = por %p145, %p146
      %p148 = scmp.ne.s32.totalorder %s139, %s140
      %p149 = scmp.eq.s32.totalorder %s31, 0
      %p150 = por %p148, %p149
      %p151 = scmp.ne.s32.totalorder %s139, %s140
      %p152 = scmp.eq.s32.totalorder %s32, 1
      %p153 = por %p151, %p152
      %p155 = scmp.ne.s32.totalorder %s140, %s154
      %p156 = scmp.eq.s32.totalorder %s32, 0
      %p157 = por %p155, %p156
      %s159 = sadd.s32 %s158, 1
      %p162 = scmp.eq.s32.totalorder %s26, 1
      %p163 = scmp.ne.s32.totalorder %s158, %s160
      %p164 = scmp.eq.s32.totalorder %s26, 0
      %p165 = por %p163, %p164
      %p166 = scmp.ne.s32.totalorder %s158, %s160
      %p167 = scmp.eq.s32.totalorder %s31, 1
      %p168 = por %p166, %p167
      %p169 = scmp.ne.s32.totalorder %s160, %s161
      %p170 = scmp.eq.s32.totalorder %s31, 0
      %p171 = por %p169, %p170
      %p172 = scmp.ne.s32.totalorder %s160, %s161
      %p173 = scmp.eq.s32.totalorder %s32, 1
      %p174 = por %p172, %p173
      %p176 = scmp.ne.s32.totalorder %s161, %s175
      %p177 = scmp.eq.s32.totalorder %s32, 0
      %p178 = por %p176, %p177
      %s180 = sadd.s32 %s179, 1
      %p183 = scmp.eq.s32.totalorder %s26, 1
      %p184 = scmp.ne.s32.totalorder %s179, %s181
      %p185 = scmp.eq.s32.totalorder %s26, 0
      %p186 = por %p184, %p185
      %p187 = scmp.ne.s32.totalorder %s179, %s181
      %p188 = scmp.eq.s32.totalorder %s31, 1
      %p189 = por %p187, %p188
      %p190 = scmp.ne.s32.totalorder %s181, %s182
      %p191 = scmp.eq.s32.totalorder %s31, 0
      %p192 = por %p190, %p191
      %p193 = scmp.ne.s32.totalorder %s181, %s182
      %p194 = scmp.eq.s32.totalorder %s32, 1
      %p195 = por %p193, %p194
      %p197 = scmp.ne.s32.totalorder %s182, %s196
      %p198 = scmp.eq.s32.totalorder %s32, 0
      %p199 = por %p197, %p198
      %s201 = sadd.s32 %s200, 1
      %p204 = scmp.eq.s32.totalorder %s26, 1
      %p205 = scmp.ne.s32.totalorder %s200, %s202
      %p206 = scmp.eq.s32.totalorder %s26, 0
      %p207 = por %p205, %p206
      %p208 = scmp.ne.s32.totalorder %s200, %s202
      %p209 = scmp.eq.s32.totalorder %s31, 1
      %p210 = por %p208, %p209
      %p211 = scmp.ne.s32.totalorder %s202, %s203
      %p212 = scmp.eq.s32.totalorder %s31, 0
      %p213 = por %p211, %p212
      %p214 = scmp.ne.s32.totalorder %s202, %s203
      %p215 = scmp.eq.s32.totalorder %s32, 1
      %p216 = por %p214, %p215
      %p218 = scmp.ne.s32.totalorder %s203, %s217
      %p219 = scmp.eq.s32.totalorder %s32, 0
      %p220 = por %p218, %p219
      %s222 = sadd.s32 %s221, 1
      %p225 = scmp.eq.s32.totalorder %s26, 1
      %p226 = scmp.ne.s32.totalorder %s221, %s223
      %p227 = scmp.eq.s32.totalorder %s26, 0
      %p228 = por %p226, %p227
      %p229 = scmp.ne.s32.totalorder %s221, %s223
      %p230 = scmp.eq.s32.totalorder %s31, 1
      %p231 = por %p229, %p230
      %p232 = scmp.ne.s32.totalorder %s223, %s224
      %p233 = scmp.eq.s32.totalorder %s31, 0
      %p234 = por %p232, %p233
      %p235 = scmp.ne.s32.totalorder %s223, %s224
      %p236 = scmp.eq.s32.totalorder %s32, 1
      %p237 = por %p235, %p236
      %p239 = scmp.ne.s32.totalorder %s224, %s238
      %p240 = scmp.eq.s32.totalorder %s32, 0
      %p241 = por %p239, %p240
      %s242 = ssub.s32 %s33, %s45
      %p243 = scmp.eq.s32.totalorder %s242, 0
      %s245 = sadd.s32 %s244, 1
      %s246 = scalar_select %p243, %s244, %s245
      %p249 = pneg %p243
      %p250 = scmp.eq.s32.totalorder %s26, 1
      %p251 = por %p249, %p250
      %p252 = scmp.ne.s32.totalorder %s244, %s247
      %p253 = scmp.eq.s32.totalorder %s26, 0
      %p254 = por %p252, %p253
      %p255 = scmp.ne.s32.totalorder %s244, %s247
      %p256 = scmp.eq.s32.totalorder %s31, 1
      %p257 = por %p255, %p256
      %p258 = scmp.ne.s32.totalorder %s247, %s248
      %p259 = scmp.eq.s32.totalorder %s31, 0
      %p260 = por %p258, %p259
      %p261 = scmp.ne.s32.totalorder %s247, %s248
      %p262 = scmp.eq.s32.totalorder %s32, 1
      %p263 = por %p261, %p262
      %p265 = scmp.ne.s32.totalorder %s248, %s264
      %p266 = scmp.eq.s32.totalorder %s32, 0
      %p267 = por %p265, %p266
      %p268 = scmp.le.s32.totalorder 1, %s26
      %p269 = scmp.lt.s32.totalorder %s26, 3
      %p270 = pnand %p268, %p269
      %p271 = pneg %p270
      // Predicated region
      $region9: #{encoder_decoder_forward.2} parent=5 // pred_check
        _
      $region10: #{encoder_decoder_forward.2} parent=5 // pred_check_branch
        %273 = sbr.rel (%p270) target = $region12
      $region11: #{encoder_decoder_forward.2} parent=5 // pred_region
        %s274 = ssub.s32 %s26, 1
        // Predicated region
        $region13: #{encoder_decoder_forward.2} parent=11 // pred_check
          %p275 = pneg %p87
        $region14: #{encoder_decoder_forward.2} parent=11 // pred_check_branch
          %277 = sbr.rel (%p275) target = $region16
        $region15: #{encoder_decoder_forward.2} parent=11 // pred_region
          _
        $region16: #{encoder_decoder_forward.2} parent=11 // pred_fallthru
          _
        // Predicated region
        $region17: #{encoder_decoder_forward.2} parent=11 // pred_check
          %p278 = pneg %p108
        $region18: #{encoder_decoder_forward.2} parent=11 // pred_check_branch
          %280 = sbr.rel (%p278) target = $region20
        $region19: #{encoder_decoder_forward.2} parent=11 // pred_region
          _
        $region20: #{encoder_decoder_forward.2} parent=11 // pred_fallthru
          _
        // Predicated region
        $region21: #{encoder_decoder_forward.2} parent=11 // pred_check
          %p281 = pneg %p129
        $region22: #{encoder_decoder_forward.2} parent=11 // pred_check_branch
          %283 = sbr.rel (%p281) target = $region24
        $region23: #{encoder_decoder_forward.2} parent=11 // pred_region
          _
        $region24: #{encoder_decoder_forward.2} parent=11 // pred_fallthru
          _
        // Predicated region
        $region25: #{encoder_decoder_forward.2} parent=11 // pred_check
          %p284 = pneg %p150
        $region26: #{encoder_decoder_forward.2} parent=11 // pred_check_branch
          %286 = sbr.rel (%p284) target = $region28
        $region27: #{encoder_decoder_forward.2} parent=11 // pred_region
          _
        $region28: #{encoder_decoder_forward.2} parent=11 // pred_fallthru
          _
        // Predicated region
        $region29: #{encoder_decoder_forward.2} parent=11 // pred_check
          %p287 = pneg %p171
        $region30: #{encoder_decoder_forward.2} parent=11 // pred_check_branch
          %289 = sbr.rel (%p287) target = $region32
        $region31: #{encoder_decoder_forward.2} parent=11 // pred_region
          _
        $region32: #{encoder_decoder_forward.2} parent=11 // pred_fallthru
          _
        // Predicated region
        $region33: #{encoder_decoder_forward.2} parent=11 // pred_check
          %p290 = pneg %p192
        $region34: #{encoder_decoder_forward.2} parent=11 // pred_check_branch
          %292 = sbr.rel (%p290) target = $region36
        $region35: #{encoder_decoder_forward.2} parent=11 // pred_region
          _
        $region36: #{encoder_decoder_forward.2} parent=11 // pred_fallthru
          _
        // Predicated region
        $region37: #{encoder_decoder_forward.2} parent=11 // pred_check
          %p293 = pneg %p213
        $region38: #{encoder_decoder_forward.2} parent=11 // pred_check_branch
          %295 = sbr.rel (%p293) target = $region40
        $region39: #{encoder_decoder_forward.2} parent=11 // pred_region
          _
        $region40: #{encoder_decoder_forward.2} parent=11 // pred_fallthru
          _
        // Predicated region
        $region41: #{encoder_decoder_forward.2} parent=11 // pred_check
          %p296 = pneg %p234
        $region42: #{encoder_decoder_forward.2} parent=11 // pred_check_branch
          %298 = sbr.rel (%p296) target = $region44
        $region43: #{encoder_decoder_forward.2} parent=11 // pred_region
          _
        $region44: #{encoder_decoder_forward.2} parent=11 // pred_fallthru
          _
      $region12: #{encoder_decoder_forward.2} parent=5 // pred_fallthru
        _
      %p299 = scmp.lt.s32.totalorder %s26, 2
      // Predicated region
      $region45: #{encoder_decoder_forward.2} parent=5 // pred_check
        %p300 = pneg %p299
      $region46: #{encoder_decoder_forward.2} parent=5 // pred_check_branch
        %302 = sbr.rel (%p300) target = $region48
      $region47: #{encoder_decoder_forward.2} parent=5 // pred_region
        // Predicated region
        $region49: #{encoder_decoder_forward.2} parent=47 // pred_check
          %p303 = pneg %p60
        $region50: #{encoder_decoder_forward.2} parent=47 // pred_check_branch
          %305 = sbr.rel (%p303) target = $region52
        $region51: #{encoder_decoder_forward.2} parent=47 // pred_region
          %s306 = smul.u32 32, %s34
          %p307 = scmp.lt.s32.totalorder %s33, 1
          %s308 = scalar_select %p307, %s33, 1
          %p309 = scmp.lt.s32.totalorder %s306, 31
          %s310 = scalar_select %p309, %s306, 31
          %s311 = smul.addr %s308, 32
          %s312 = sadd.s32 %s310, %s311
          %s313 = smul.addr %s312, 4
          %s314 = scalar_lea.vmem %s0, %s313
          %s315 = smul.u32 32, %s34
        $region52: #{encoder_decoder_forward.2} parent=47 // pred_fallthru
          _
      $region48: #{encoder_decoder_forward.2} parent=5 // pred_fallthru
        _
      %p316 = scmp.le.s32.totalorder 1, %s26
      %p317 = scmp.lt.s32.totalorder %s26, 3
      %p318 = pnand %p316, %p317
      %p319 = pneg %p318
      // Predicated region
      $region53: #{encoder_decoder_forward.2} parent=5 // pred_check
        _
      $region54: #{encoder_decoder_forward.2} parent=5 // pred_check_branch
        %321 = sbr.rel (%p318) target = $region56
      $region55: #{encoder_decoder_forward.2} parent=5 // pred_region
        #allocation15 [shape = 'u8[12288]{0}', space=vmem, size = 0x3000, dematerialized = true, scoped, tag = 'FusionAdapter Buffer %fusion.3 = bf16[48,128]{1,0:T(8,128)(2,1)} fusion(%param_8.4), kind=kLoop, calls=%fused_computation.3.clone, metadata={op_name="jit(encoder_decoder_forward)/convert_element_type" stack_frame_id=14}']
        #allocation16 [shape = 'u8[131072]{0}', space=vmem, size = 0x20000, dematerialized = true, scoped, tag = 'FusionAdapter Buffer %fusion.2 = bf16[128,512]{1,0:T(8,128)(2,1)} fusion(%param_7.4), kind=kLoop, calls=%fused_computation.2.clone, metadata={op_name="jit(encoder_decoder_forward)/convert_element_type" stack_frame_id=15}']
        #allocation17 [shape = 'u8[131072]{0}', space=vmem, size = 0x20000, dematerialized = true, scoped, tag = 'FusionAdapter Buffer %fusion.1 = bf16[512,128]{1,0:T(8,128)(2,1)} fusion(%param_5.3, %param_6.3), kind=kLoop, calls=%fused_computation.1.clone, metadata={op_name="jit(encoder_decoder_forward)/jit(_pad)/pad" stack_frame_id=11}']
        #allocation18 [shape = 'u8[512]{0}', space=vmem, size = 0x400, dematerialized = true, scoped, tag = 'FusionAdapter Buffer %fusion.4 = f32[1,128]{1,0:T(1,128)} fusion(%param_9.3, %param_10), kind=kLoop, calls=%fused_computation.4.clone, metadata={op_name="jit(encoder_decoder_forward)/jit(_pad)/pad" stack_frame_id=13}']
        %s322 = ssub.s32 %s26, 1
        %s323 = smul.u32 32, %s36
        %p324 = scmp.lt.s32.totalorder %s35, 1
        %s325 = scalar_select %p324, %s35, 1
        %p326 = scmp.lt.s32.totalorder %s323, 31
        %s327 = scalar_select %p326, %s323, 31
        %s328 = smul.addr %s325, 32
        %s329 = sadd.s32 %s327, %s328
        %s330 = smul.addr %s329, 4
        %s331 = scalar_lea.vmem %s0, %s330
        %p332 = pneg %p66
        %p333 = pneg %p63
        %p334 = pneg %p87
        %p335 = pneg %p84
        %p336 = pneg %p108
        %p337 = pneg %p105
        %p338 = pneg %p129
        %p339 = pneg %p126
        %p340 = pneg %p150
        %p341 = pneg %p147
        %p342 = pneg %p171
        %p343 = pneg %p168
        %p344 = pneg %p192
        %p345 = pneg %p189
        %p346 = pneg %p213
        %p347 = pneg %p210
        %p348 = pneg %p234
        %p349 = pneg %p231
        %p350 = pneg %p260
        %p351 = pneg %p257
        %s352 = sand.u32 %s247, 1
        %s353 = scalar_lea.sflag [#allocation14], %s352
        %s354 = sand.u32 %s247, 1
        %s355 = scalar_lea.vmem [#allocation13], %s354
        %s356 = smul.u32 32, %s36
        %p357 = scmp.lt.s32.totalorder %s35, 1
        %s358 = scalar_select %p357, %s35, 1
        %p359 = scmp.lt.s32.totalorder %s356, 31
        %s360 = scalar_select %p359, %s356, 31
        %s361 = smul.addr %s358, 32
        %s362 = sadd.s32 %s360, %s361
        %s363 = smul.addr %s362, 4
        %s364 = scalar_lea.vmem %s0, %s363
        %s365 = smul.u32 32, %s36
        %v366 = vld [vmem:[%s8] sm:$0xff]
        %367 = xla_tuple %v366
        %368 = xla_tuple %367
        %369 = xla_tuple %v366
        %v370 = vpack.c.bf16 0.0, %v366
        %s372 = ssub.s32 16, 1
        %373 = vst [vmem:[#allocation15] sm:%s372] %v370
        %s374 = scalar_lea.vmem %s8, 8
        %v375 = vld [vmem:[%s374] sm:$0xff]
        %376 = xla_tuple %v375
        %377 = xla_tuple %376
        %378 = xla_tuple %v375
        %s379 = scalar_lea.vmem [#allocation15], 4
        %v380 = vpack.c.bf16 0.0, %v375
        %s382 = ssub.s32 16, 1
        %383 = vst [vmem:[%s379] sm:%s382] %v380
        %s384 = scalar_lea.vmem %s8, 16
        %v385 = vld [vmem:[%s384] sm:$0xff]
        %386 = xla_tuple %v385
        %387 = xla_tuple %386
        %388 = xla_tuple %v385
        %s389 = scalar_lea.vmem [#allocation15], 8
        %v390 = vpack.c.bf16 0.0, %v385
        %s392 = ssub.s32 16, 1
        %393 = vst [vmem:[%s389] sm:%s392] %v390
        %s394 = scalar_lea.vmem %s8, 24
        %v395 = vld [vmem:[%s394] sm:$0xff]
        %396 = xla_tuple %v395
        %397 = xla_tuple %396
        %398 = xla_tuple %v395
        %s399 = scalar_lea.vmem [#allocation15], 12
        %v400 = vpack.c.bf16 0.0, %v395
        %s402 = ssub.s32 16, 1
        %403 = vst [vmem:[%s399] sm:%s402] %v400
        %s404 = scalar_lea.vmem %s8, 32
        %v405 = vld [vmem:[%s404] sm:$0xff]
        %406 = xla_tuple %v405
        %407 = xla_tuple %406
        %408 = xla_tuple %v405
        %s409 = scalar_lea.vmem [#allocation15], 16
        %v410 = vpack.c.bf16 0.0, %v405
        %s412 = ssub.s32 16, 1
        %413 = vst [vmem:[%s409] sm:%s412] %v410
        %s414 = scalar_lea.vmem %s8, 40
        %v415 = vld [vmem:[%s414] sm:$0xff]
        %416 = xla_tuple %v415
        %417 = xla_tuple %416
        %418 = xla_tuple %v415
        %s419 = scalar_lea.vmem [#allocation15], 20
        %v420 = vpack.c.bf16 0.0, %v415
        %s422 = ssub.s32 16, 1
        %423 = vst [vmem:[%s419] sm:%s422] %v420
        %v424 = vld [vmem:[%s7] sm:$0xff]
        %425 = xla_tuple %v424
        %426 = xla_tuple %425
        %427 = xla_tuple %v424
        %v428 = vpack.c.bf16 0.0, %v424
        %s430 = ssub.s32 16, 1
        %431 = vst [vmem:[#allocation16] sm:%s430] %v428
        %s432 = scalar_lea.vmem %s7, 8
        %v433 = vld [vmem:[%s432] sm:$0xff]
        %434 = xla_tuple %v433
        %435 = xla_tuple %434
        %436 = xla_tuple %v433
        %s437 = scalar_lea.vmem [#allocation16], 4
        %v438 = vpack.c.bf16 0.0, %v433
        %s440 = ssub.s32 16, 1
        %441 = vst [vmem:[%s437] sm:%s440] %v438
        %s442 = scalar_lea.vmem %s7, 16
        %v443 = vld [vmem:[%s442] sm:$0xff]
        %444 = xla_tuple %v443
        %445 = xla_tuple %444
        %446 = xla_tuple %v443
        %s447 = scalar_lea.vmem [#allocation16], 8
        %v448 = vpack.c.bf16 0.0, %v443
        %s450 = ssub.s32 16, 1
        %451 = vst [vmem:[%s447] sm:%s450] %v448
        %s452 = scalar_lea.vmem %s7, 24
        %v453 = vld [vmem:[%s452] sm:$0xff]
        %454 = xla_tuple %v453
        %455 = xla_tuple %454
        %456 = xla_tuple %v453
        %s457 = scalar_lea.vmem [#allocation16], 12
        %v458 = vpack.c.bf16 0.0, %v453
        %s460 = ssub.s32 16, 1
        %461 = vst [vmem:[%s457] sm:%s460] %v458
        %s462 = scalar_lea.vmem %s7, 32
        %v463 = vld [vmem:[%s462] sm:$0xff]
        %464 = xla_tuple %v463
        %465 = xla_tuple %464
        %466 = xla_tuple %v463
        %s467 = scalar_lea.vmem [#allocation16], 16
        %v468 = vpack.c.bf16 0.0, %v463
        %s470 = ssub.s32 16, 1
        %471 = vst [vmem:[%s467] sm:%s470] %v468
        %s472 = scalar_lea.vmem %s7, 40
        %v473 = vld [vmem:[%s472] sm:$0xff]
        %474 = xla_tuple %v473
        %475 = xla_tuple %474
        %476 = xla_tuple %v473
        %s477 = scalar_lea.vmem [#allocation16], 20
        %v478 = vpack.c.bf16 0.0, %v473
        %s480 = ssub.s32 16, 1
        %481 = vst [vmem:[%s477] sm:%s480] %v478
        %s482 = scalar_lea.vmem %s7, 48
        %v483 = vld [vmem:[%s482] sm:$0xff]
        %484 = xla_tuple %v483
        %485 = xla_tuple %484
        %486 = xla_tuple %v483
        %s487 = scalar_lea.vmem [#allocation16], 24
        %v488 = vpack.c.bf16 0.0, %v483
        %s490 = ssub.s32 16, 1
        %491 = vst [vmem:[%s487] sm:%s490] %v488
        %s492 = scalar_lea.vmem %s7, 56
        %v493 = vld [vmem:[%s492] sm:$0xff]
        %494 = xla_tuple %v493
        %495 = xla_tuple %494
        %496 = xla_tuple %v493
        %s497 = scalar_lea.vmem [#allocation16], 28
        %v498 = vpack.c.bf16 0.0, %v493
        %s500 = ssub.s32 16, 1
        %501 = vst [vmem:[%s497] sm:%s500] %v498
        %s502 = scalar_lea.vmem %s7, 64
        %v503 = vld [vmem:[%s502] sm:$0xff]
        %504 = xla_tuple %v503
        %505 = xla_tuple %504
        %506 = xla_tuple %v503
        %s507 = scalar_lea.vmem [#allocation16], 32
        %v508 = vpack.c.bf16 0.0, %v503
        %s510 = ssub.s32 16, 1
        %511 = vst [vmem:[%s507] sm:%s510] %v508
        %s512 = scalar_lea.vmem %s7, 72
        %v513 = vld [vmem:[%s512] sm:$0xff]
        %514 = xla_tuple %v513
        %515 = xla_tuple %514
        %516 = xla_tuple %v513
        %s517 = scalar_lea.vmem [#allocation16], 36
        %v518 = vpack.c.bf16 0.0, %v513
        %s520 = ssub.s32 16, 1
        %521 = vst [vmem:[%s517] sm:%s520] %v518
        %s522 = scalar_lea.vmem %s7, 80
        %v523 = vld [vmem:[%s522] sm:$0xff]
        %524 = xla_tuple %v523
        %525 = xla_tuple %524
        %526 = xla_tuple %v523
        %s527 = scalar_lea.vmem [#allocation16], 40
        %v528 = vpack.c.bf16 0.0, %v523
        %s530 = ssub.s32 16, 1
        %531 = vst [vmem:[%s527] sm:%s530] %v528
        %s532 = scalar_lea.vmem %s7, 88
        %v533 = vld [vmem:[%s532] sm:$0xff]
        %534 = xla_tuple %v533
        %535 = xla_tuple %534
        %536 = xla_tuple %v533
        %s537 = scalar_lea.vmem [#allocation16], 44
        %v538 = vpack.c.bf16 0.0, %v533
        %s540 = ssub.s32 16, 1
        %541 = vst [vmem:[%s537] sm:%s540] %v538
        %s542 = scalar_lea.vmem %s7, 96
        %v543 = vld [vmem:[%s542] sm:$0xff]
        %544 = xla_tuple %v543
        %545 = xla_tuple %544
        %546 = xla_tuple %v543
        %s547 = scalar_lea.vmem [#allocation16], 48
        %v548 = vpack.c.bf16 0.0, %v543
        %s550 = ssub.s32 16, 1
        %551 = vst [vmem:[%s547] sm:%s550] %v548
        %s552 = scalar_lea.vmem %s7, 104
        %v553 = vld [vmem:[%s552] sm:$0xff]
        %554 = xla_tuple %v553
        %555 = xla_tuple %554
        %556 = xla_tuple %v553
        %s557 = scalar_lea.vmem [#allocation16], 52
        %v558 = vpack.c.bf16 0.0, %v553
        %s560 = ssub.s32 16, 1
        %561 = vst [vmem:[%s557] sm:%s560] %v558
        %s562 = scalar_lea.vmem %s7, 112
        %v563 = vld [vmem:[%s562] sm:$0xff]
        %564 = xla_tuple %v563
        %565 = xla_tuple %564
        %566 = xla_tuple %v563
        %s567 = scalar_lea.vmem [#allocation16], 56
        %v568 = vpack.c.bf16 0.0, %v563
        %s570 = ssub.s32 16, 1
        %571 = vst [vmem:[%s567] sm:%s570] %v568
        %s572 = scalar_lea.vmem %s7, 120
        %v573 = vld [vmem:[%s572] sm:$0xff]
        %574 = xla_tuple %v573
        %575 = xla_tuple %574
        %576 = xla_tuple %v573
        %s577 = scalar_lea.vmem [#allocation16], 60
        %v578 = vpack.c.bf16 0.0, %v573
        %s580 = ssub.s32 16, 1
        %581 = vst [vmem:[%s577] sm:%s580] %v578
        %s582 = scalar_lea.vmem %s7, 128
        %v583 = vld [vmem:[%s582] sm:$0xff]
        %584 = xla_tuple %v583
        %585 = xla_tuple %584
        %586 = xla_tuple %v583
        %s587 = scalar_lea.vmem [#allocation16], 64
        %v588 = vpack.c.bf16 0.0, %v583
        %s590 = ssub.s32 16, 1
        %591 = vst [vmem:[%s587] sm:%s590] %v588
        %s592 = scalar_lea.vmem %s7, 136
        %v593 = vld [vmem:[%s592] sm:$0xff]
        %594 = xla_tuple %v593
        %595 = xla_tuple %594
        %596 = xla_tuple %v593
        %s597 = scalar_lea.vmem [#allocation16], 68
        %v598 = vpack.c.bf16 0.0, %v593
        %s600 = ssub.s32 16, 1
        %601 = vst [vmem:[%s597] sm:%s600] %v598
        %s602 = scalar_lea.vmem %s7, 144
        %v603 = vld [vmem:[%s602] sm:$0xff]
        %604 = xla_tuple %v603
        %605 = xla_tuple %604
        %606 = xla_tuple %v603
        %s607 = scalar_lea.vmem [#allocation16], 72
        %v608 = vpack.c.bf16 0.0, %v603
        %s610 = ssub.s32 16, 1
        %611 = vst [vmem:[%s607] sm:%s610] %v608
        %s612 = scalar_lea.vmem %s7, 152
        %v613 = vld [vmem:[%s612] sm:$0xff]
        %614 = xla_tuple %v613
        %615 = xla_tuple %614
        %616 = xla_tuple %v613
        %s617 = scalar_lea.vmem [#allocation16], 76
        %v618 = vpack.c.bf16 0.0, %v613
        %s620 = ssub.s32 16, 1
        %621 = vst [vmem:[%s617] sm:%s620] %v618
        %s622 = scalar_lea.vmem %s7, 160
        %v623 = vld [vmem:[%s622] sm:$0xff]
        %624 = xla_tuple %v623
        %625 = xla_tuple %624
        %626 = xla_tuple %v623
        %s627 = scalar_lea.vmem [#allocation16], 80
        %v628 = vpack.c.bf16 0.0, %v623
        %s630 = ssub.s32 16, 1
        %631 = vst [vmem:[%s627] sm:%s630] %v628
        %s632 = scalar_lea.vmem %s7, 168
        %v633 = vld [vmem:[%s632] sm:$0xff]
        %634 = xla_tuple %v633
        %635 = xla_tuple %634
        %636 = xla_tuple %v633
        %s637 = scalar_lea.vmem [#allocation16], 84
        %v638 = vpack.c.bf16 0.0, %v633
        %s640 = ssub.s32 16, 1
        %641 = vst [vmem:[%s637] sm:%s640] %v638
        %s642 = scalar_lea.vmem %s7, 176
        %v643 = vld [vmem:[%s642] sm:$0xff]
        %644 = xla_tuple %v643
        %645 = xla_tuple %644
        %646 = xla_tuple %v643
        %s647 = scalar_lea.vmem [#allocation16], 88
        %v648 = vpack.c.bf16 0.0, %v643
        %s650 = ssub.s32 16, 1
        %651 = vst [vmem:[%s647] sm:%s650] %v648
        %s652 = scalar_lea.vmem %s7, 184
        %v653 = vld [vmem:[%s652] sm:$0xff]
        %654 = xla_tuple %v653
        %655 = xla_tuple %654
        %656 = xla_tuple %v653
        %s657 = scalar_lea.vmem [#allocation16], 92
        %v658 = vpack.c.bf16 0.0, %v653
        %s660 = ssub.s32 16, 1
        %661 = vst [vmem:[%s657] sm:%s660] %v658
        %s662 = scalar_lea.vmem %s7, 192
        %v663 = vld [vmem:[%s662] sm:$0xff]
        %664 = xla_tuple %v663
        %665 = xla_tuple %664
        %666 = xla_tuple %v663
        %s667 = scalar_lea.vmem [#allocation16], 96
        %v668 = vpack.c.bf16 0.0, %v663
        %s670 = ssub.s32 16, 1
        %671 = vst [vmem:[%s667] sm:%s670] %v668
        %s672 = scalar_lea.vmem %s7, 200
        %v673 = vld [vmem:[%s672] sm:$0xff]
        %674 = xla_tuple %v673
        %675 = xla_tuple %674
        %676 = xla_tuple %v673
        %s677 = scalar_lea.vmem [#allocation16], 100
        %v678 = vpack.c.bf16 0.0, %v673
        %s680 = ssub.s32 16, 1
        %681 = vst [vmem:[%s677] sm:%s680] %v678
        %s682 = scalar_lea.vmem %s7, 208
        %v683 = vld [vmem:[%s682] sm:$0xff]
        %684 = xla_tuple %v683
        %685 = xla_tuple %684
        %686 = xla_tuple %v683
        %s687 = scalar_lea.vmem [#allocation16], 104
        %v688 = vpack.c.bf16 0.0, %v683
        %s690 = ssub.s32 16, 1
        %691 = vst [vmem:[%s687] sm:%s690] %v688
        %s692 = scalar_lea.vmem %s7, 216
        %v693 = vld [vmem:[%s692] sm:$0xff]
        %694 = xla_tuple %v693
        %695 = xla_tuple %694
        %696 = xla_tuple %v693
        %s697 = scalar_lea.vmem [#allocation16], 108
        %v698 = vpack.c.bf16 0.0, %v693
        %s700 = ssub.s32 16, 1
        %701 = vst [vmem:[%s697] sm:%s700] %v698
        %s702 = scalar_lea.vmem %s7, 224
        %v703 = vld [vmem:[%s702] sm:$0xff]
        %704 = xla_tuple %v703
        %705 = xla_tuple %704
        %706 = xla_tuple %v703
        %s707 = scalar_lea.vmem [#allocation16], 112
        %v708 = vpack.c.bf16 0.0, %v703
        %s710 = ssub.s32 16, 1
        %711 = vst [vmem:[%s707] sm:%s710] %v708
        %s712 = scalar_lea.vmem %s7, 232
        %v713 = vld [vmem:[%s712] sm:$0xff]
        %714 = xla_tuple %v713
        %715 = xla_tuple %714
        %716 = xla_tuple %v713
        %s717 = scalar_lea.vmem [#allocation16], 116
        %v718 = vpack.c.bf16 0.0, %v713
        %s720 = ssub.s32 16, 1
        %721 = vst [vmem:[%s717] sm:%s720] %v718
        %s722 = scalar_lea.vmem %s7, 240
        %v723 = vld [vmem:[%s722] sm:$0xff]
        %724 = xla_tuple %v723
        %725 = xla_tuple %724
        %726 = xla_tuple %v723
        %s727 = scalar_lea.vmem [#allocation16], 120
        %v728 = vpack.c.bf16 0.0, %v723
        %s730 = ssub.s32 16, 1
        %731 = vst [vmem:[%s727] sm:%s730] %v728
        %s732 = scalar_lea.vmem %s7, 248
        %v733 = vld [vmem:[%s732] sm:$0xff]
        %734 = xla_tuple %v733
        %735 = xla_tuple %734
        %736 = xla_tuple %v733
        %s737 = scalar_lea.vmem [#allocation16], 124
        %v738 = vpack.c.bf16 0.0, %v733
        %s740 = ssub.s32 16, 1
        %741 = vst [vmem:[%s737] sm:%s740] %v738
        %s742 = scalar_lea.vmem %s7, 256
        %v743 = vld [vmem:[%s742] sm:$0xff]
        %744 = xla_tuple %v743
        %745 = xla_tuple %744
        %746 = xla_tuple %v743
        %s747 = scalar_lea.vmem [#allocation16], 128
        %v748 = vpack.c.bf16 0.0, %v743
        %s750 = ssub.s32 16, 1
        %751 = vst [vmem:[%s747] sm:%s750] %v748
        %s752 = scalar_lea.vmem %s7, 264
        %v753 = vld [vmem:[%s752] sm:$0xff]
        %754 = xla_tuple %v753
        %755 = xla_tuple %754
        %756 = xla_tuple %v753
        %s757 = scalar_lea.vmem [#allocation16], 132
        %v758 = vpack.c.bf16 0.0, %v753
        %s760 = ssub.s32 16, 1
        %761 = vst [vmem:[%s757] sm:%s760] %v758
        %s762 = scalar_lea.vmem %s7, 272
        %v763 = vld [vmem:[%s762] sm:$0xff]
        %764 = xla_tuple %v763
        %765 = xla_tuple %764
        %766 = xla_tuple %v763
        %s767 = scalar_lea.vmem [#allocation16], 136
        %v768 = vpack.c.bf16 0.0, %v763
        %s770 = ssub.s32 16, 1
        %771 = vst [vmem:[%s767] sm:%s770] %v768
        %s772 = scalar_lea.vmem %s7, 280
        %v773 = vld [vmem:[%s772] sm:$0xff]
        %774 = xla_tuple %v773
        %775 = xla_tuple %774
        %776 = xla_tuple %v773
        %s777 = scalar_lea.vmem [#allocation16], 140
        %v778 = vpack.c.bf16 0.0, %v773
        %s780 = ssub.s32 16, 1
        %781 = vst [vmem:[%s777] sm:%s780] %v778
        %s782 = scalar_lea.vmem %s7, 288
        %v783 = vld [vmem:[%s782] sm:$0xff]
        %784 = xla_tuple %v783
        %785 = xla_tuple %784
        %786 = xla_tuple %v783
        %s787 = scalar_lea.vmem [#allocation16], 144
        %v788 = vpack.c.bf16 0.0, %v783
        %s790 = ssub.s32 16, 1
        %791 = vst [vmem:[%s787] sm:%s790] %v788
        %s792 = scalar_lea.vmem %s7, 296
        %v793 = vld [vmem:[%s792] sm:$0xff]
        %794 = xla_tuple %v793
        %795 = xla_tuple %794
        %796 = xla_tuple %v793
        %s797 = scalar_lea.vmem [#allocation16], 148
        %v798 = vpack.c.bf16 0.0, %v793
        %s800 = ssub.s32 16, 1
        %801 = vst [vmem:[%s797] sm:%s800] %v798
        %s802 = scalar_lea.vmem %s7, 304
        %v803 = vld [vmem:[%s802] sm:$0xff]
        %804 = xla_tuple %v803
        %805 = xla_tuple %804
        %806 = xla_tuple %v803
        %s807 = scalar_lea.vmem [#allocation16], 152
        %v808 = vpack.c.bf16 0.0, %v803
        %s810 = ssub.s32 16, 1
        %811 = vst [vmem:[%s807] sm:%s810] %v808
        %s812 = scalar_lea.vmem %s7, 312
        %v813 = vld [vmem:[%s812] sm:$0xff]
        %814 = xla_tuple %v813
        %815 = xla_tuple %814
        %816 = xla_tuple %v813
        %s817 = scalar_lea.vmem [#allocation16], 156
        %v818 = vpack.c.bf16 0.0, %v813
        %s820 = ssub.s32 16, 1
        %821 = vst [vmem:[%s817] sm:%s820] %v818
        %s822 = scalar_lea.vmem %s7, 320
        %v823 = vld [vmem:[%s822] sm:$0xff]
        %824 = xla_tuple %v823
        %825 = xla_tuple %824
        %826 = xla_tuple %v823
        %s827 = scalar_lea.vmem [#allocation16], 160
        %v828 = vpack.c.bf16 0.0, %v823
        %s830 = ssub.s32 16, 1
        %831 = vst [vmem:[%s827] sm:%s830] %v828
        %s832 = scalar_lea.vmem %s7, 328
        %v833 = vld [vmem:[%s832] sm:$0xff]
        %834 = xla_tuple %v833
        %835 = xla_tuple %834
        %836 = xla_tuple %v833
        %s837 = scalar_lea.vmem [#allocation16], 164
        %v838 = vpack.c.bf16 0.0, %v833
        %s840 = ssub.s32 16, 1
        %841 = vst [vmem:[%s837] sm:%s840] %v838
        %s842 = scalar_lea.vmem %s7, 336
        %v843 = vld [vmem:[%s842] sm:$0xff]
        %844 = xla_tuple %v843
        %845 = xla_tuple %844
        %846 = xla_tuple %v843
        %s847 = scalar_lea.vmem [#allocation16], 168
        %v848 = vpack.c.bf16 0.0, %v843
        %s850 = ssub.s32 16, 1
        %851 = vst [vmem:[%s847] sm:%s850] %v848
        %s852 = scalar_lea.vmem %s7, 344
        %v853 = vld [vmem:[%s852] sm:$0xff]
        %854 = xla_tuple %v853
        %855 = xla_tuple %854
        %856 = xla_tuple %v853
        %s857 = scalar_lea.vmem [#allocation16], 172
        %v858 = vpack.c.bf16 0.0, %v853
        %s860 = ssub.s32 16, 1
        %861 = vst [vmem:[%s857] sm:%s860] %v858
        %s862 = scalar_lea.vmem %s7, 352
        %v863 = vld [vmem:[%s862] sm:$0xff]
        %864 = xla_tuple %v863
        %865 = xla_tuple %864
        %866 = xla_tuple %v863
        %s867 = scalar_lea.vmem [#allocation16], 176
        %v868 = vpack.c.bf16 0.0, %v863
        %s870 = ssub.s32 16, 1
        %871 = vst [vmem:[%s867] sm:%s870] %v868
        %s872 = scalar_lea.vmem %s7, 360
        %v873 = vld [vmem:[%s872] sm:$0xff]
        %874 = xla_tuple %v873
        %875 = xla_tuple %874
        %876 = xla_tuple %v873
        %s877 = scalar_lea.vmem [#allocation16], 180
        %v878 = vpack.c.bf16 0.0, %v873
        %s880 = ssub.s32 16, 1
        %881 = vst [vmem:[%s877] sm:%s880] %v878
        %s882 = scalar_lea.vmem %s7, 368
        %v883 = vld [vmem:[%s882] sm:$0xff]
        %884 = xla_tuple %v883
        %885 = xla_tuple %884
        %886 = xla_tuple %v883
        %s887 = scalar_lea.vmem [#allocation16], 184
        %v888 = vpack.c.bf16 0.0, %v883
        %s890 = ssub.s32 16, 1
        %891 = vst [vmem:[%s887] sm:%s890] %v888
        %s892 = scalar_lea.vmem %s7, 376
        %v893 = vld [vmem:[%s892] sm:$0xff]
        %894 = xla_tuple %v893
        %895 = xla_tuple %894
        %896 = xla_tuple %v893
        %s897 = scalar_lea.vmem [#allocation16], 188
        %v898 = vpack.c.bf16 0.0, %v893
        %s900 = ssub.s32 16, 1
        %901 = vst [vmem:[%s897] sm:%s900] %v898
        %s902 = scalar_lea.vmem %s7, 384
        %v903 = vld [vmem:[%s902] sm:$0xff]
        %904 = xla_tuple %v903
        %905 = xla_tuple %904
        %906 = xla_tuple %v903
        %s907 = scalar_lea.vmem [#allocation16], 192
        %v908 = vpack.c.bf16 0.0, %v903
        %s910 = ssub.s32 16, 1
        %911 = vst [vmem:[%s907] sm:%s910] %v908
        %s912 = scalar_lea.vmem %s7, 392
        %v913 = vld [vmem:[%s912] sm:$0xff]
        %914 = xla_tuple %v913
        %915 = xla_tuple %914
        %916 = xla_tuple %v913
        %s917 = scalar_lea.vmem [#allocation16], 196
        %v918 = vpack.c.bf16 0.0, %v913
        %s920 = ssub.s32 16, 1
        %921 = vst [vmem:[%s917] sm:%s920] %v918
        %s922 = scalar_lea.vmem %s7, 400
        %v923 = vld [vmem:[%s922] sm:$0xff]
        %924 = xla_tuple %v923
        %925 = xla_tuple %924
        %926 = xla_tuple %v923
        %s927 = scalar_lea.vmem [#allocation16], 200
        %v928 = vpack.c.bf16 0.0, %v923
        %s930 = ssub.s32 16, 1
        %931 = vst [vmem:[%s927] sm:%s930] %v928
        %s932 = scalar_lea.vmem %s7, 408
        %v933 = vld [vmem:[%s932] sm:$0xff]
        %934 = xla_tuple %v933
        %935 = xla_tuple %934
        %936 = xla_tuple %v933
        %s937 = scalar_lea.vmem [#allocation16], 204
        %v938 = vpack.c.bf16 0.0, %v933
        %s940 = ssub.s32 16, 1
        %941 = vst [vmem:[%s937] sm:%s940] %v938
        %s942 = scalar_lea.vmem %s7, 416
        %v943 = vld [vmem:[%s942] sm:$0xff]
        %944 = xla_tuple %v943
        %945 = xla_tuple %944
        %946 = xla_tuple %v943
        %s947 = scalar_lea.vmem [#allocation16], 208
        %v948 = vpack.c.bf16 0.0, %v943
        %s950 = ssub.s32 16, 1
        %951 = vst [vmem:[%s947] sm:%s950] %v948
        %s952 = scalar_lea.vmem %s7, 424
        %v953 = vld [vmem:[%s952] sm:$0xff]
        %954 = xla_tuple %v953
        %955 = xla_tuple %954
        %956 = xla_tuple %v953
        %s957 = scalar_lea.vmem [#allocation16], 212
        %v958 = vpack.c.bf16 0.0, %v953
        %s960 = ssub.s32 16, 1
        %961 = vst [vmem:[%s957] sm:%s960] %v958
        %s962 = scalar_lea.vmem %s7, 432
        %v963 = vld [vmem:[%s962] sm:$0xff]
        %964 = xla_tuple %v963
        %965 = xla_tuple %964
        %966 = xla_tuple %v963
        %s967 = scalar_lea.vmem [#allocation16], 216
        %v968 = vpack.c.bf16 0.0, %v963
        %s970 = ssub.s32 16, 1
        %971 = vst [vmem:[%s967] sm:%s970] %v968
        %s972 = scalar_lea.vmem %s7, 440
        %v973 = vld [vmem:[%s972] sm:$0xff]
        %974 = xla_tuple %v973
        %975 = xla_tuple %974
        %976 = xla_tuple %v973
        %s977 = scalar_lea.vmem [#allocation16], 220
        %v978 = vpack.c.bf16 0.0, %v973
        %s980 = ssub.s32 16, 1
        %981 = vst [vmem:[%s977] sm:%s980] %v978
        %s982 = scalar_lea.vmem %s7, 448
        %v983 = vld [vmem:[%s982] sm:$0xff]
        %984 = xla_tuple %v983
        %985 = xla_tuple %984
        %986 = xla_tuple %v983
        %s987 = scalar_lea.vmem [#allocation16], 224
        %v988 = vpack.c.bf16 0.0, %v983
        %s990 = ssub.s32 16, 1
        %991 = vst [vmem:[%s987] sm:%s990] %v988
        %s992 = scalar_lea.vmem %s7, 456
        %v993 = vld [vmem:[%s992] sm:$0xff]
        %994 = xla_tuple %v993
        %995 = xla_tuple %994
        %996 = xla_tuple %v993
        %s997 = scalar_lea.vmem [#allocation16], 228
        %v998 = vpack.c.bf16 0.0, %v993
        %s1000 = ssub.s32 16, 1
        %1001 = vst [vmem:[%s997] sm:%s1000] %v998
        %s1002 = scalar_lea.vmem %s7, 464
        %v1003 = vld [vmem:[%s1002] sm:$0xff]
        %1004 = xla_tuple %v1003
        %1005 = xla_tuple %1004
        %1006 = xla_tuple %v1003
        %s1007 = scalar_lea.vmem [#allocation16], 232
        %v1008 = vpack.c.bf16 0.0, %v1003
        %s1010 = ssub.s32 16, 1
        %1011 = vst [vmem:[%s1007] sm:%s1010] %v1008
        %s1012 = scalar_lea.vmem %s7, 472
        %v1013 = vld [vmem:[%s1012] sm:$0xff]
        %1014 = xla_tuple %v1013
        %1015 = xla_tuple %1014
        %1016 = xla_tuple %v1013
        %s1017 = scalar_lea.vmem [#allocation16], 236
        %v1018 = vpack.c.bf16 0.0, %v1013
        %s1020 = ssub.s32 16, 1
        %1021 = vst [vmem:[%s1017] sm:%s1020] %v1018
        %s1022 = scalar_lea.vmem %s7, 480
        %v1023 = vld [vmem:[%s1022] sm:$0xff]
        %1024 = xla_tuple %v1023
        %1025 = xla_tuple %1024
        %1026 = xla_tuple %v1023
        %s1027 = scalar_lea.vmem [#allocation16], 240
        %v1028 = vpack.c.bf16 0.0, %v1023
        %s1030 = ssub.s32 16, 1
        %1031 = vst [vmem:[%s1027] sm:%s1030] %v1028
        %s1032 = scalar_lea.vmem %s7, 488
        %v1033 = vld [vmem:[%s1032] sm:$0xff]
        %1034 = xla_tuple %v1033
        %1035 = xla_tuple %1034
        %1036 = xla_tuple %v1033
        %s1037 = scalar_lea.vmem [#allocation16], 244
        %v1038 = vpack.c.bf16 0.0, %v1033
        %s1040 = ssub.s32 16, 1
        %1041 = vst [vmem:[%s1037] sm:%s1040] %v1038
        %s1042 = scalar_lea.vmem %s7, 496
        %v1043 = vld [vmem:[%s1042] sm:$0xff]
        %1044 = xla_tuple %v1043
        %1045 = xla_tuple %1044
        %1046 = xla_tuple %v1043
        %s1047 = scalar_lea.vmem [#allocation16], 248
        %v1048 = vpack.c.bf16 0.0, %v1043
        %s1050 = ssub.s32 16, 1
        %1051 = vst [vmem:[%s1047] sm:%s1050] %v1048
        %s1052 = scalar_lea.vmem %s7, 504
        %v1053 = vld [vmem:[%s1052] sm:$0xff]
        %1054 = xla_tuple %v1053
        %1055 = xla_tuple %1054
        %1056 = xla_tuple %v1053
        %s1057 = scalar_lea.vmem [#allocation16], 252
        %v1058 = vpack.c.bf16 0.0, %v1053
        %s1060 = ssub.s32 16, 1
        %1061 = vst [vmem:[%s1057] sm:%s1060] %v1058
        %s1063 = sor.u32 255, 127
        %s1064 = sand.u32 %s1063, 85
        %s1065 = sshrl.u32 %s1064, 1
        %s1066 = sor.u32 %s1064, %s1065
        %s1067 = sand.u32 51, %s1066
        %s1068 = sshrl.u32 %s1067, 2
        %s1069 = sor.u32 %s1067, %s1068
        %s1070 = sand.u32 15, %s1069
        %v1071 = vld [vmem:[%s5] sm:%s1070]
        %v1072 = vunpack.c.l.bf16 %v1071
        %v1073 = vunpack.c.h.bf16 %v1071
        %v1074 = vlaneseq
        %v1075 = vand.u32 %v1074, 127
        %vm1077 = vcmp.lt.s32.totalorder %v1075, 10
        %v1078 = vsel %vm1077, %v1072, %v17
        %v1079 = vpack.c.bf16 0.0, %v1078
        %s1081 = ssub.s32 16, 1
        %1082 = vst [vmem:[#allocation17] sm:%s1081] %v1079
        %s1083 = scalar_lea.vmem %s5, 4
        %s1085 = sor.u32 255, 127
        %s1086 = sand.u32 %s1085, 85
        %s1087 = sshrl.u32 %s1086, 1
        %s1088 = sor.u32 %s1086, %s1087
        %s1089 = sand.u32 51, %s1088
        %s1090 = sshrl.u32 %s1089, 2
        %s1091 = sor.u32 %s1089, %s1090
        %s1092 = sand.u32 15, %s1091
        %v1093 = vld [vmem:[%s1083] sm:%s1092]
        %v1094 = vunpack.c.l.bf16 %v1093
        %v1095 = vunpack.c.h.bf16 %v1093
        %v1096 = vlaneseq
        %v1097 = vand.u32 %v1096, 127
        %vm1099 = vcmp.lt.s32.totalorder %v1097, 10
        %v1100 = vsel %vm1099, %v1094, %v17
        %s1101 = scalar_lea.vmem [#allocation17], 4
        %v1102 = vpack.c.bf16 0.0, %v1100
        %s1104 = ssub.s32 16, 1
        %1105 = vst [vmem:[%s1101] sm:%s1104] %v1102
        %s1106 = scalar_lea.vmem %s5, 8
        %s1108 = sor.u32 255, 127
        %s1109 = sand.u32 %s1108, 85
        %s1110 = sshrl.u32 %s1109, 1
        %s1111 = sor.u32 %s1109, %s1110
        %s1112 = sand.u32 51, %s1111
        %s1113 = sshrl.u32 %s1112, 2
        %s1114 = sor.u32 %s1112, %s1113
        %s1115 = sand.u32 15, %s1114
        %v1116 = vld [vmem:[%s1106] sm:%s1115]
        %v1117 = vunpack.c.l.bf16 %v1116
        %v1118 = vunpack.c.h.bf16 %v1116
        %v1119 = vlaneseq
        %v1120 = vand.u32 %v1119, 127
        %vm1122 = vcmp.lt.s32.totalorder %v1120, 10
        %v1123 = vsel %vm1122, %v1117, %v17
        %s1124 = scalar_lea.vmem [#allocation17], 8
        %v1125 = vpack.c.bf16 0.0, %v1123
        %s1127 = ssub.s32 16, 1
        %1128 = vst [vmem:[%s1124] sm:%s1127] %v1125
        %s1129 = scalar_lea.vmem %s5, 12
        %s1131 = sor.u32 255, 127
        %s1132 = sand.u32 %s1131, 85
        %s1133 = sshrl.u32 %s1132, 1
        %s1134 = sor.u32 %s1132, %s1133
        %s1135 = sand.u32 51, %s1134
        %s1136 = sshrl.u32 %s1135, 2
        %s1137 = sor.u32 %s1135, %s1136
        %s1138 = sand.u32 15, %s1137
        %v1139 = vld [vmem:[%s1129] sm:%s1138]
        %v1140 = vunpack.c.l.bf16 %v1139
        %v1141 = vunpack.c.h.bf16 %v1139
        %v1142 = vlaneseq
        %v1143 = vand.u32 %v1142, 127
        %vm1145 = vcmp.lt.s32.totalorder %v1143, 10
        %v1146 = vsel %vm1145, %v1140, %v17
        %s1147 = scalar_lea.vmem [#allocation17], 12
        %v1148 = vpack.c.bf16 0.0, %v1146
        %s1150 = ssub.s32 16, 1
        %1151 = vst [vmem:[%s1147] sm:%s1150] %v1148
        %s1152 = scalar_lea.vmem %s5, 16
        %s1154 = sor.u32 255, 127
        %s1155 = sand.u32 %s1154, 85
        %s1156 = sshrl.u32 %s1155, 1
        %s1157 = sor.u32 %s1155, %s1156
        %s1158 = sand.u32 51, %s1157
        %s1159 = sshrl.u32 %s1158, 2
        %s1160 = sor.u32 %s1158, %s1159
        %s1161 = sand.u32 15, %s1160
        %v1162 = vld [vmem:[%s1152] sm:%s1161]
        %v1163 = vunpack.c.l.bf16 %v1162
        %v1164 = vunpack.c.h.bf16 %v1162
        %v1165 = vlaneseq
        %v1166 = vand.u32 %v1165, 127
        %vm1168 = vcmp.lt.s32.totalorder %v1166, 10
        %v1169 = vsel %vm1168, %v1163, %v17
        %s1170 = scalar_lea.vmem [#allocation17], 16
        %v1171 = vpack.c.bf16 0.0, %v1169
        %s1173 = ssub.s32 16, 1
        %1174 = vst [vmem:[%s1170] sm:%s1173] %v1171
        %s1175 = scalar_lea.vmem %s5, 20
        %s1177 = sor.u32 255, 127
        %s1178 = sand.u32 %s1177, 85
        %s1179 = sshrl.u32 %s1178, 1
        %s1180 = sor.u32 %s1178, %s1179
        %s1181 = sand.u32 51, %s1180
        %s1182 = sshrl.u32 %s1181, 2
        %s1183 = sor.u32 %s1181, %s1182
        %s1184 = sand.u32 15, %s1183
        %v1185 = vld [vmem:[%s1175] sm:%s1184]
        %v1186 = vunpack.c.l.bf16 %v1185
        %v1187 = vunpack.c.h.bf16 %v1185
        %v1188 = vlaneseq
        %v1189 = vand.u32 %v1188, 127
        %vm1191 = vcmp.lt.s32.totalorder %v1189, 10
        %v1192 = vsel %vm1191, %v1186, %v17
        %s1193 = scalar_lea.vmem [#allocation17], 20
        %v1194 = vpack.c.bf16 0.0, %v1192
        %s1196 = ssub.s32 16, 1
        %1197 = vst [vmem:[%s1193] sm:%s1196] %v1194
        %s1198 = scalar_lea.vmem %s5, 24
        %s1200 = sor.u32 255, 127
        %s1201 = sand.u32 %s1200, 85
        %s1202 = sshrl.u32 %s1201, 1
        %s1203 = sor.u32 %s1201, %s1202
        %s1204 = sand.u32 51, %s1203
        %s1205 = sshrl.u32 %s1204, 2
        %s1206 = sor.u32 %s1204, %s1205
        %s1207 = sand.u32 15, %s1206
        %v1208 = vld [vmem:[%s1198] sm:%s1207]
        %v1209 = vunpack.c.l.bf16 %v1208
        %v1210 = vunpack.c.h.bf16 %v1208
        %v1211 = vlaneseq
        %v1212 = vand.u32 %v1211, 127
        %vm1214 = vcmp.lt.s32.totalorder %v1212, 10
        %v1215 = vsel %vm1214, %v1209, %v17
        %s1216 = scalar_lea.vmem [#allocation17], 24
        %v1217 = vpack.c.bf16 0.0, %v1215
        %s1219 = ssub.s32 16, 1
        %1220 = vst [vmem:[%s1216] sm:%s1219] %v1217
        %s1221 = scalar_lea.vmem %s5, 28
        %s1223 = sor.u32 255, 127
        %s1224 = sand.u32 %s1223, 85
        %s1225 = sshrl.u32 %s1224, 1
        %s1226 = sor.u32 %s1224, %s1225
        %s1227 = sand.u32 51, %s1226
        %s1228 = sshrl.u32 %s1227, 2
        %s1229 = sor.u32 %s1227, %s1228
        %s1230 = sand.u32 15, %s1229
        %v1231 = vld [vmem:[%s1221] sm:%s1230]
        %v1232 = vunpack.c.l.bf16 %v1231
        %v1233 = vunpack.c.h.bf16 %v1231
        %v1234 = vlaneseq
        %v1235 = vand.u32 %v1234, 127
        %vm1237 = vcmp.lt.s32.totalorder %v1235, 10
        %v1238 = vsel %vm1237, %v1232, %v17
        %s1239 = scalar_lea.vmem [#allocation17], 28
        %v1240 = vpack.c.bf16 0.0, %v1238
        %s1242 = ssub.s32 16, 1
        %1243 = vst [vmem:[%s1239] sm:%s1242] %v1240
        %s1244 = scalar_lea.vmem %s5, 32
        %s1246 = sor.u32 255, 127
        %s1247 = sand.u32 %s1246, 85
        %s1248 = sshrl.u32 %s1247, 1
        %s1249 = sor.u32 %s1247, %s1248
        %s1250 = sand.u32 51, %s1249
        %s1251 = sshrl.u32 %s1250, 2
        %s1252 = sor.u32 %s1250, %s1251
        %s1253 = sand.u32 15, %s1252
        %v1254 = vld [vmem:[%s1244] sm:%s1253]
        %v1255 = vunpack.c.l.bf16 %v1254
        %v1256 = vunpack.c.h.bf16 %v1254
        %v1257 = vlaneseq
        %v1258 = vand.u32 %v1257, 127
        %vm1260 = vcmp.lt.s32.totalorder %v1258, 10
        %v1261 = vsel %vm1260, %v1255, %v17
        %s1262 = scalar_lea.vmem [#allocation17], 32
        %v1263 = vpack.c.bf16 0.0, %v1261
        %s1265 = ssub.s32 16, 1
        %1266 = vst [vmem:[%s1262] sm:%s1265] %v1263
        %s1267 = scalar_lea.vmem %s5, 36
        %s1269 = sor.u32 255, 127
        %s1270 = sand.u32 %s1269, 85
        %s1271 = sshrl.u32 %s1270, 1
        %s1272 = sor.u32 %s1270, %s1271
        %s1273 = sand.u32 51, %s1272
        %s1274 = sshrl.u32 %s1273, 2
        %s1275 = sor.u32 %s1273, %s1274
        %s1276 = sand.u32 15, %s1275
        %v1277 = vld [vmem:[%s1267] sm:%s1276]
        %v1278 = vunpack.c.l.bf16 %v1277
        %v1279 = vunpack.c.h.bf16 %v1277
        %v1280 = vlaneseq
        %v1281 = vand.u32 %v1280, 127
        %vm1283 = vcmp.lt.s32.totalorder %v1281, 10
        %v1284 = vsel %vm1283, %v1278, %v17
        %s1285 = scalar_lea.vmem [#allocation17], 36
        %v1286 = vpack.c.bf16 0.0, %v1284
        %s1288 = ssub.s32 16, 1
        %1289 = vst [vmem:[%s1285] sm:%s1288] %v1286
        %s1290 = scalar_lea.vmem %s5, 40
        %s1292 = sor.u32 255, 127
        %s1293 = sand.u32 %s1292, 85
        %s1294 = sshrl.u32 %s1293, 1
        %s1295 = sor.u32 %s1293, %s1294
        %s1296 = sand.u32 51, %s1295
        %s1297 = sshrl.u32 %s1296, 2
        %s1298 = sor.u32 %s1296, %s1297
        %s1299 = sand.u32 15, %s1298
        %v1300 = vld [vmem:[%s1290] sm:%s1299]
        %v1301 = vunpack.c.l.bf16 %v1300
        %v1302 = vunpack.c.h.bf16 %v1300
        %v1303 = vlaneseq
        %v1304 = vand.u32 %v1303, 127
        %vm1306 = vcmp.lt.s32.totalorder %v1304, 10
        %v1307 = vsel %vm1306, %v1301, %v17
        %s1308 = scalar_lea.vmem [#allocation17], 40
        %v1309 = vpack.c.bf16 0.0, %v1307
        %s1311 = ssub.s32 16, 1
        %1312 = vst [vmem:[%s1308] sm:%s1311] %v1309
        %s1313 = scalar_lea.vmem %s5, 44
        %s1315 = sor.u32 255, 127
        %s1316 = sand.u32 %s1315, 85
        %s1317 = sshrl.u32 %s1316, 1
        %s1318 = sor.u32 %s1316, %s1317
        %s1319 = sand.u32 51, %s1318
        %s1320 = sshrl.u32 %s1319, 2
        %s1321 = sor.u32 %s1319, %s1320
        %s1322 = sand.u32 15, %s1321
        %v1323 = vld [vmem:[%s1313] sm:%s1322]
        %v1324 = vunpack.c.l.bf16 %v1323
        %v1325 = vunpack.c.h.bf16 %v1323
        %v1326 = vlaneseq
        %v1327 = vand.u32 %v1326, 127
        %vm1329 = vcmp.lt.s32.totalorder %v1327, 10
        %v1330 = vsel %vm1329, %v1324, %v17
        %s1331 = scalar_lea.vmem [#allocation17], 44
        %v1332 = vpack.c.bf16 0.0, %v1330
        %s1334 = ssub.s32 16, 1
        %1335 = vst [vmem:[%s1331] sm:%s1334] %v1332
        %s1336 = scalar_lea.vmem %s5, 48
        %s1338 = sor.u32 255, 127
        %s1339 = sand.u32 %s1338, 85
        %s1340 = sshrl.u32 %s1339, 1
        %s1341 = sor.u32 %s1339, %s1340
        %s1342 = sand.u32 51, %s1341
        %s1343 = sshrl.u32 %s1342, 2
        %s1344 = sor.u32 %s1342, %s1343
        %s1345 = sand.u32 15, %s1344
        %v1346 = vld [vmem:[%s1336] sm:%s1345]
        %v1347 = vunpack.c.l.bf16 %v1346
        %v1348 = vunpack.c.h.bf16 %v1346
        %v1349 = vlaneseq
        %v1350 = vand.u32 %v1349, 127
        %vm1352 = vcmp.lt.s32.totalorder %v1350, 10
        %v1353 = vsel %vm1352, %v1347, %v17
        %s1354 = scalar_lea.vmem [#allocation17], 48
        %v1355 = vpack.c.bf16 0.0, %v1353
        %s1357 = ssub.s32 16, 1
        %1358 = vst [vmem:[%s1354] sm:%s1357] %v1355
        %s1359 = scalar_lea.vmem %s5, 52
        %s1361 = sor.u32 255, 127
        %s1362 = sand.u32 %s1361, 85
        %s1363 = sshrl.u32 %s1362, 1
        %s1364 = sor.u32 %s1362, %s1363
        %s1365 = sand.u32 51, %s1364
        %s1366 = sshrl.u32 %s1365, 2
        %s1367 = sor.u32 %s1365, %s1366
        %s1368 = sand.u32 15, %s1367
        %v1369 = vld [vmem:[%s1359] sm:%s1368]
        %v1370 = vunpack.c.l.bf16 %v1369
        %v1371 = vunpack.c.h.bf16 %v1369
        %v1372 = vlaneseq
        %v1373 = vand.u32 %v1372, 127
        %vm1375 = vcmp.lt.s32.totalorder %v1373, 10
        %v1376 = vsel %vm1375, %v1370, %v17
        %s1377 = scalar_lea.vmem [#allocation17], 52
        %v1378 = vpack.c.bf16 0.0, %v1376
        %s1380 = ssub.s32 16, 1
        %1381 = vst [vmem:[%s1377] sm:%s1380] %v1378
        %s1382 = scalar_lea.vmem %s5, 56
        %s1384 = sor.u32 255, 127
        %s1385 = sand.u32 %s1384, 85
        %s1386 = sshrl.u32 %s1385, 1
        %s1387 = sor.u32 %s1385, %s1386
        %s1388 = sand.u32 51, %s1387
        %s1389 = sshrl.u32 %s1388, 2
        %s1390 = sor.u32 %s1388, %s1389
        %s1391 = sand.u32 15, %s1390
        %v1392 = vld [vmem:[%s1382] sm:%s1391]
        %v1393 = vunpack.c.l.bf16 %v1392
        %v1394 = vunpack.c.h.bf16 %v1392
        %v1395 = vlaneseq
        %v1396 = vand.u32 %v1395, 127
        %vm1398 = vcmp.lt.s32.totalorder %v1396, 10
        %v1399 = vsel %vm1398, %v1393, %v17
        %s1400 = scalar_lea.vmem [#allocation17], 56
        %v1401 = vpack.c.bf16 0.0, %v1399
        %s1403 = ssub.s32 16, 1
        %1404 = vst [vmem:[%s1400] sm:%s1403] %v1401
        %s1405 = scalar_lea.vmem %s5, 60
        %s1407 = sor.u32 255, 127
        %s1408 = sand.u32 %s1407, 85
        %s1409 = sshrl.u32 %s1408, 1
        %s1410 = sor.u32 %s1408, %s1409
        %s1411 = sand.u32 51, %s1410
        %s1412 = sshrl.u32 %s1411, 2
        %s1413 = sor.u32 %s1411, %s1412
        %s1414 = sand.u32 15, %s1413
        %v1415 = vld [vmem:[%s1405] sm:%s1414]
        %v1416 = vunpack.c.l.bf16 %v1415
        %v1417 = vunpack.c.h.bf16 %v1415
        %v1418 = vlaneseq
        %v1419 = vand.u32 %v1418, 127
        %vm1421 = vcmp.lt.s32.totalorder %v1419, 10
        %v1422 = vsel %vm1421, %v1416, %v17
        %s1423 = scalar_lea.vmem [#allocation17], 60
        %v1424 = vpack.c.bf16 0.0, %v1422
        %s1426 = ssub.s32 16, 1
        %1427 = vst [vmem:[%s1423] sm:%s1426] %v1424
        %s1428 = scalar_lea.vmem %s5, 64
        %s1430 = sor.u32 255, 127
        %s1431 = sand.u32 %s1430, 85
        %s1432 = sshrl.u32 %s1431, 1
        %s1433 = sor.u32 %s1431, %s1432
        %s1434 = sand.u32 51, %s1433
        %s1435 = sshrl.u32 %s1434, 2
        %s1436 = sor.u32 %s1434, %s1435
        %s1437 = sand.u32 15, %s1436
        %v1438 = vld [vmem:[%s1428] sm:%s1437]
        %v1439 = vunpack.c.l.bf16 %v1438
        %v1440 = vunpack.c.h.bf16 %v1438
        %v1441 = vlaneseq
        %v1442 = vand.u32 %v1441, 127
        %vm1444 = vcmp.lt.s32.totalorder %v1442, 10
        %v1445 = vsel %vm1444, %v1439, %v17
        %s1446 = scalar_lea.vmem [#allocation17], 64
        %v1447 = vpack.c.bf16 0.0, %v1445
        %s1449 = ssub.s32 16, 1
        %1450 = vst [vmem:[%s1446] sm:%s1449] %v1447
        %s1451 = scalar_lea.vmem %s5, 68
        %s1453 = sor.u32 255, 127
        %s1454 = sand.u32 %s1453, 85
        %s1455 = sshrl.u32 %s1454, 1
        %s1456 = sor.u32 %s1454, %s1455
        %s1457 = sand.u32 51, %s1456
        %s1458 = sshrl.u32 %s1457, 2
        %s1459 = sor.u32 %s1457, %s1458
        %s1460 = sand.u32 15, %s1459
        %v1461 = vld [vmem:[%s1451] sm:%s1460]
        %v1462 = vunpack.c.l.bf16 %v1461
        %v1463 = vunpack.c.h.bf16 %v1461
        %v1464 = vlaneseq
        %v1465 = vand.u32 %v1464, 127
        %vm1467 = vcmp.lt.s32.totalorder %v1465, 10
        %v1468 = vsel %vm1467, %v1462, %v17
        %s1469 = scalar_lea.vmem [#allocation17], 68
        %v1470 = vpack.c.bf16 0.0, %v1468
        %s1472 = ssub.s32 16, 1
        %1473 = vst [vmem:[%s1469] sm:%s1472] %v1470
        %s1474 = scalar_lea.vmem %s5, 72
        %s1476 = sor.u32 255, 127
        %s1477 = sand.u32 %s1476, 85
        %s1478 = sshrl.u32 %s1477, 1
        %s1479 = sor.u32 %s1477, %s1478
        %s1480 = sand.u32 51, %s1479
        %s1481 = sshrl.u32 %s1480, 2
        %s1482 = sor.u32 %s1480, %s1481
        %s1483 = sand.u32 15, %s1482
        %v1484 = vld [vmem:[%s1474] sm:%s1483]
        %v1485 = vunpack.c.l.bf16 %v1484
        %v1486 = vunpack.c.h.bf16 %v1484
        %v1487 = vlaneseq
        %v1488 = vand.u32 %v1487, 127
        %vm1490 = vcmp.lt.s32.totalorder %v1488, 10
        %v1491 = vsel %vm1490, %v1485, %v17
        %s1492 = scalar_lea.vmem [#allocation17], 72
        %v1493 = vpack.c.bf16 0.0, %v1491
        %s1495 = ssub.s32 16, 1
        %1496 = vst [vmem:[%s1492] sm:%s1495] %v1493
        %s1497 = scalar_lea.vmem %s5, 76
        %s1499 = sor.u32 255, 127
        %s1500 = sand.u32 %s1499, 85
        %s1501 = sshrl.u32 %s1500, 1
        %s1502 = sor.u32 %s1500, %s1501
        %s1503 = sand.u32 51, %s1502
        %s1504 = sshrl.u32 %s1503, 2
        %s1505 = sor.u32 %s1503, %s1504
        %s1506 = sand.u32 15, %s1505
        %v1507 = vld [vmem:[%s1497] sm:%s1506]
        %v1508 = vunpack.c.l.bf16 %v1507
        %v1509 = vunpack.c.h.bf16 %v1507
        %v1510 = vlaneseq
        %v1511 = vand.u32 %v1510, 127
        %vm1513 = vcmp.lt.s32.totalorder %v1511, 10
        %v1514 = vsel %vm1513, %v1508, %v17
        %s1515 = scalar_lea.vmem [#allocation17], 76
        %v1516 = vpack.c.bf16 0.0, %v1514
        %s1518 = ssub.s32 16, 1
        %1519 = vst [vmem:[%s1515] sm:%s1518] %v1516
        %s1520 = scalar_lea.vmem %s5, 80
        %s1522 = sor.u32 255, 127
        %s1523 = sand.u32 %s1522, 85
        %s1524 = sshrl.u32 %s1523, 1
        %s1525 = sor.u32 %s1523, %s1524
        %s1526 = sand.u32 51, %s1525
        %s1527 = sshrl.u32 %s1526, 2
        %s1528 = sor.u32 %s1526, %s1527
        %s1529 = sand.u32 15, %s1528
        %v1530 = vld [vmem:[%s1520] sm:%s1529]
        %v1531 = vunpack.c.l.bf16 %v1530
        %v1532 = vunpack.c.h.bf16 %v1530
        %v1533 = vlaneseq
        %v1534 = vand.u32 %v1533, 127
        %vm1536 = vcmp.lt.s32.totalorder %v1534, 10
        %v1537 = vsel %vm1536, %v1531, %v17
        %s1538 = scalar_lea.vmem [#allocation17], 80
        %v1539 = vpack.c.bf16 0.0, %v1537
        %s1541 = ssub.s32 16, 1
        %1542 = vst [vmem:[%s1538] sm:%s1541] %v1539
        %s1543 = scalar_lea.vmem %s5, 84
        %s1545 = sor.u32 255, 127
        %s1546 = sand.u32 %s1545, 85
        %s1547 = sshrl.u32 %s1546, 1
        %s1548 = sor.u32 %s1546, %s1547
        %s1549 = sand.u32 51, %s1548
        %s1550 = sshrl.u32 %s1549, 2
        %s1551 = sor.u32 %s1549, %s1550
        %s1552 = sand.u32 15, %s1551
        %v1553 = vld [vmem:[%s1543] sm:%s1552]
        %v1554 = vunpack.c.l.bf16 %v1553
        %v1555 = vunpack.c.h.bf16 %v1553
        %v1556 = vlaneseq
        %v1557 = vand.u32 %v1556, 127
        %vm1559 = vcmp.lt.s32.totalorder %v1557, 10
        %v1560 = vsel %vm1559, %v1554, %v17
        %s1561 = scalar_lea.vmem [#allocation17], 84
        %v1562 = vpack.c.bf16 0.0, %v1560
        %s1564 = ssub.s32 16, 1
        %1565 = vst [vmem:[%s1561] sm:%s1564] %v1562
        %s1566 = scalar_lea.vmem %s5, 88
        %s1568 = sor.u32 255, 127
        %s1569 = sand.u32 %s1568, 85
        %s1570 = sshrl.u32 %s1569, 1
        %s1571 = sor.u32 %s1569, %s1570
        %s1572 = sand.u32 51, %s1571
        %s1573 = sshrl.u32 %s1572, 2
        %s1574 = sor.u32 %s1572, %s1573
        %s1575 = sand.u32 15, %s1574
        %v1576 = vld [vmem:[%s1566] sm:%s1575]
        %v1577 = vunpack.c.l.bf16 %v1576
        %v1578 = vunpack.c.h.bf16 %v1576
        %v1579 = vlaneseq
        %v1580 = vand.u32 %v1579, 127
        %vm1582 = vcmp.lt.s32.totalorder %v1580, 10
        %v1583 = vsel %vm1582, %v1577, %v17
        %s1584 = scalar_lea.vmem [#allocation17], 88
        %v1585 = vpack.c.bf16 0.0, %v1583
        %s1587 = ssub.s32 16, 1
        %1588 = vst [vmem:[%s1584] sm:%s1587] %v1585
        %s1589 = scalar_lea.vmem %s5, 92
        %s1591 = sor.u32 255, 127
        %s1592 = sand.u32 %s1591, 85
        %s1593 = sshrl.u32 %s1592, 1
        %s1594 = sor.u32 %s1592, %s1593
        %s1595 = sand.u32 51, %s1594
        %s1596 = sshrl.u32 %s1595, 2
        %s1597 = sor.u32 %s1595, %s1596
        %s1598 = sand.u32 15, %s1597
        %v1599 = vld [vmem:[%s1589] sm:%s1598]
        %v1600 = vunpack.c.l.bf16 %v1599
        %v1601 = vunpack.c.h.bf16 %v1599
        %v1602 = vlaneseq
        %v1603 = vand.u32 %v1602, 127
        %vm1605 = vcmp.lt.s32.totalorder %v1603, 10
        %v1606 = vsel %vm1605, %v1600, %v17
        %s1607 = scalar_lea.vmem [#allocation17], 92
        %v1608 = vpack.c.bf16 0.0, %v1606
        %s1610 = ssub.s32 16, 1
        %1611 = vst [vmem:[%s1607] sm:%s1610] %v1608
        %s1612 = scalar_lea.vmem %s5, 96
        %s1614 = sor.u32 255, 127
        %s1615 = sand.u32 %s1614, 85
        %s1616 = sshrl.u32 %s1615, 1
        %s1617 = sor.u32 %s1615, %s1616
        %s1618 = sand.u32 51, %s1617
        %s1619 = sshrl.u32 %s1618, 2
        %s1620 = sor.u32 %s1618, %s1619
        %s1621 = sand.u32 15, %s1620
        %v1622 = vld [vmem:[%s1612] sm:%s1621]
        %v1623 = vunpack.c.l.bf16 %v1622
        %v1624 = vunpack.c.h.bf16 %v1622
        %v1625 = vlaneseq
        %v1626 = vand.u32 %v1625, 127
        %vm1628 = vcmp.lt.s32.totalorder %v1626, 10
        %v1629 = vsel %vm1628, %v1623, %v17
        %s1630 = scalar_lea.vmem [#allocation17], 96
        %v1631 = vpack.c.bf16 0.0, %v1629
        %s1633 = ssub.s32 16, 1
        %1634 = vst [vmem:[%s1630] sm:%s1633] %v1631
        %s1635 = scalar_lea.vmem %s5, 100
        %s1637 = sor.u32 255, 127
        %s1638 = sand.u32 %s1637, 85
        %s1639 = sshrl.u32 %s1638, 1
        %s1640 = sor.u32 %s1638, %s1639
        %s1641 = sand.u32 51, %s1640
        %s1642 = sshrl.u32 %s1641, 2
        %s1643 = sor.u32 %s1641, %s1642
        %s1644 = sand.u32 15, %s1643
        %v1645 = vld [vmem:[%s1635] sm:%s1644]
        %v1646 = vunpack.c.l.bf16 %v1645
        %v1647 = vunpack.c.h.bf16 %v1645
        %v1648 = vlaneseq
        %v1649 = vand.u32 %v1648, 127
        %vm1651 = vcmp.lt.s32.totalorder %v1649, 10
        %v1652 = vsel %vm1651, %v1646, %v17
        %s1653 = scalar_lea.vmem [#allocation17], 100
        %v1654 = vpack.c.bf16 0.0, %v1652
        %s1656 = ssub.s32 16, 1
        %1657 = vst [vmem:[%s1653] sm:%s1656] %v1654
        %s1658 = scalar_lea.vmem %s5, 104
        %s1660 = sor.u32 255, 127
        %s1661 = sand.u32 %s1660, 85
        %s1662 = sshrl.u32 %s1661, 1
        %s1663 = sor.u32 %s1661, %s1662
        %s1664 = sand.u32 51, %s1663
        %s1665 = sshrl.u32 %s1664, 2
        %s1666 = sor.u32 %s1664, %s1665
        %s1667 = sand.u32 15, %s1666
        %v1668 = vld [vmem:[%s1658] sm:%s1667]
        %v1669 = vunpack.c.l.bf16 %v1668
        %v1670 = vunpack.c.h.bf16 %v1668
        %v1671 = vlaneseq
        %v1672 = vand.u32 %v1671, 127
        %vm1674 = vcmp.lt.s32.totalorder %v1672, 10
        %v1675 = vsel %vm1674, %v1669, %v17
        %s1676 = scalar_lea.vmem [#allocation17], 104
        %v1677 = vpack.c.bf16 0.0, %v1675
        %s1679 = ssub.s32 16, 1
        %1680 = vst [vmem:[%s1676] sm:%s1679] %v1677
        %s1681 = scalar_lea.vmem %s5, 108
        %s1683 = sor.u32 255, 127
        %s1684 = sand.u32 %s1683, 85
        %s1685 = sshrl.u32 %s1684, 1
        %s1686 = sor.u32 %s1684, %s1685
        %s1687 = sand.u32 51, %s1686
        %s1688 = sshrl.u32 %s1687, 2
        %s1689 = sor.u32 %s1687, %s1688
        %s1690 = sand.u32 15, %s1689
        %v1691 = vld [vmem:[%s1681] sm:%s1690]
        %v1692 = vunpack.c.l.bf16 %v1691
        %v1693 = vunpack.c.h.bf16 %v1691
        %v1694 = vlaneseq
        %v1695 = vand.u32 %v1694, 127
        %vm1697 = vcmp.lt.s32.totalorder %v1695, 10
        %v1698 = vsel %vm1697, %v1692, %v17
        %s1699 = scalar_lea.vmem [#allocation17], 108
        %v1700 = vpack.c.bf16 0.0, %v1698
        %s1702 = ssub.s32 16, 1
        %1703 = vst [vmem:[%s1699] sm:%s1702] %v1700
        %s1704 = scalar_lea.vmem %s5, 112
        %s1706 = sor.u32 255, 127
        %s1707 = sand.u32 %s1706, 85
        %s1708 = sshrl.u32 %s1707, 1
        %s1709 = sor.u32 %s1707, %s1708
        %s1710 = sand.u32 51, %s1709
        %s1711 = sshrl.u32 %s1710, 2
        %s1712 = sor.u32 %s1710, %s1711
        %s1713 = sand.u32 15, %s1712
        %v1714 = vld [vmem:[%s1704] sm:%s1713]
        %v1715 = vunpack.c.l.bf16 %v1714
        %v1716 = vunpack.c.h.bf16 %v1714
        %v1717 = vlaneseq
        %v1718 = vand.u32 %v1717, 127
        %vm1720 = vcmp.lt.s32.totalorder %v1718, 10
        %v1721 = vsel %vm1720, %v1715, %v17
        %s1722 = scalar_lea.vmem [#allocation17], 112
        %v1723 = vpack.c.bf16 0.0, %v1721
        %s1725 = ssub.s32 16, 1
        %1726 = vst [vmem:[%s1722] sm:%s1725] %v1723
        %s1727 = scalar_lea.vmem %s5, 116
        %s1729 = sor.u32 255, 127
        %s1730 = sand.u32 %s1729, 85
        %s1731 = sshrl.u32 %s1730, 1
        %s1732 = sor.u32 %s1730, %s1731
        %s1733 = sand.u32 51, %s1732
        %s1734 = sshrl.u32 %s1733, 2
        %s1735 = sor.u32 %s1733, %s1734
        %s1736 = sand.u32 15, %s1735
        %v1737 = vld [vmem:[%s1727] sm:%s1736]
        %v1738 = vunpack.c.l.bf16 %v1737
        %v1739 = vunpack.c.h.bf16 %v1737
        %v1740 = vlaneseq
        %v1741 = vand.u32 %v1740, 127
        %vm1743 = vcmp.lt.s32.totalorder %v1741, 10
        %v1744 = vsel %vm1743, %v1738, %v17
        %s1745 = scalar_lea.vmem [#allocation17], 116
        %v1746 = vpack.c.bf16 0.0, %v1744
        %s1748 = ssub.s32 16, 1
        %1749 = vst [vmem:[%s1745] sm:%s1748] %v1746
        %s1750 = scalar_lea.vmem %s5, 120
        %s1752 = sor.u32 255, 127
        %s1753 = sand.u32 %s1752, 85
        %s1754 = sshrl.u32 %s1753, 1
        %s1755 = sor.u32 %s1753, %s1754
        %s1756 = sand.u32 51, %s1755
        %s1757 = sshrl.u32 %s1756, 2
        %s1758 = sor.u32 %s1756, %s1757
        %s1759 = sand.u32 15, %s1758
        %v1760 = vld [vmem:[%s1750] sm:%s1759]
        %v1761 = vunpack.c.l.bf16 %v1760
        %v1762 = vunpack.c.h.bf16 %v1760
        %v1763 = vlaneseq
        %v1764 = vand.u32 %v1763, 127
        %vm1766 = vcmp.lt.s32.totalorder %v1764, 10
        %v1767 = vsel %vm1766, %v1761, %v17
        %s1768 = scalar_lea.vmem [#allocation17], 120
        %v1769 = vpack.c.bf16 0.0, %v1767
        %s1771 = ssub.s32 16, 1
        %1772 = vst [vmem:[%s1768] sm:%s1771] %v1769
        %s1773 = scalar_lea.vmem %s5, 124
        %s1775 = sor.u32 255, 127
        %s1776 = sand.u32 %s1775, 85
        %s1777 = sshrl.u32 %s1776, 1
        %s1778 = sor.u32 %s1776, %s1777
        %s1779 = sand.u32 51, %s1778
        %s1780 = sshrl.u32 %s1779, 2
        %s1781 = sor.u32 %s1779, %s1780
        %s1782 = sand.u32 15, %s1781
        %v1783 = vld [vmem:[%s1773] sm:%s1782]
        %v1784 = vunpack.c.l.bf16 %v1783
        %v1785 = vunpack.c.h.bf16 %v1783
        %v1786 = vlaneseq
        %v1787 = vand.u32 %v1786, 127
        %vm1789 = vcmp.lt.s32.totalorder %v1787, 10
        %v1790 = vsel %vm1789, %v1784, %v17
        %s1791 = scalar_lea.vmem [#allocation17], 124
        %v1792 = vpack.c.bf16 0.0, %v1790
        %s1794 = ssub.s32 16, 1
        %1795 = vst [vmem:[%s1791] sm:%s1794] %v1792
        %s1796 = scalar_lea.vmem %s5, 128
        %s1798 = sor.u32 255, 127
        %s1799 = sand.u32 %s1798, 85
        %s1800 = sshrl.u32 %s1799, 1
        %s1801 = sor.u32 %s1799, %s1800
        %s1802 = sand.u32 51, %s1801
        %s1803 = sshrl.u32 %s1802, 2
        %s1804 = sor.u32 %s1802, %s1803
        %s1805 = sand.u32 15, %s1804
        %v1806 = vld [vmem:[%s1796] sm:%s1805]
        %v1807 = vunpack.c.l.bf16 %v1806
        %v1808 = vunpack.c.h.bf16 %v1806
        %v1809 = vlaneseq
        %v1810 = vand.u32 %v1809, 127
        %vm1812 = vcmp.lt.s32.totalorder %v1810, 10
        %v1813 = vsel %vm1812, %v1807, %v17
        %s1814 = scalar_lea.vmem [#allocation17], 128
        %v1815 = vpack.c.bf16 0.0, %v1813
        %s1817 = ssub.s32 16, 1
        %1818 = vst [vmem:[%s1814] sm:%s1817] %v1815
        %s1819 = scalar_lea.vmem %s5, 132
        %s1821 = sor.u32 255, 127
        %s1822 = sand.u32 %s1821, 85
        %s1823 = sshrl.u32 %s1822, 1
        %s1824 = sor.u32 %s1822, %s1823
        %s1825 = sand.u32 51, %s1824
        %s1826 = sshrl.u32 %s1825, 2
        %s1827 = sor.u32 %s1825, %s1826
        %s1828 = sand.u32 15, %s1827
        %v1829 = vld [vmem:[%s1819] sm:%s1828]
        %v1830 = vunpack.c.l.bf16 %v1829
        %v1831 = vunpack.c.h.bf16 %v1829
        %v1832 = vlaneseq
        %v1833 = vand.u32 %v1832, 127
        %vm1835 = vcmp.lt.s32.totalorder %v1833, 10
        %v1836 = vsel %vm1835, %v1830, %v17
        %s1837 = scalar_lea.vmem [#allocation17], 132
        %v1838 = vpack.c.bf16 0.0, %v1836
        %s1840 = ssub.s32 16, 1
        %1841 = vst [vmem:[%s1837] sm:%s1840] %v1838
        %s1842 = scalar_lea.vmem %s5, 136
        %s1844 = sor.u32 255, 127
        %s1845 = sand.u32 %s1844, 85
        %s1846 = sshrl.u32 %s1845, 1
        %s1847 = sor.u32 %s1845, %s1846
        %s1848 = sand.u32 51, %s1847
        %s1849 = sshrl.u32 %s1848, 2
        %s1850 = sor.u32 %s1848, %s1849
        %s1851 = sand.u32 15, %s1850
        %v1852 = vld [vmem:[%s1842] sm:%s1851]
        %v1853 = vunpack.c.l.bf16 %v1852
        %v1854 = vunpack.c.h.bf16 %v1852
        %v1855 = vlaneseq
        %v1856 = vand.u32 %v1855, 127
        %vm1858 = vcmp.lt.s32.totalorder %v1856, 10
        %v1859 = vsel %vm1858, %v1853, %v17
        %s1860 = scalar_lea.vmem [#allocation17], 136
        %v1861 = vpack.c.bf16 0.0, %v1859
        %s1863 = ssub.s32 16, 1
        %1864 = vst [vmem:[%s1860] sm:%s1863] %v1861
        %s1865 = scalar_lea.vmem %s5, 140
        %s1867 = sor.u32 255, 127
        %s1868 = sand.u32 %s1867, 85
        %s1869 = sshrl.u32 %s1868, 1
        %s1870 = sor.u32 %s1868, %s1869
        %s1871 = sand.u32 51, %s1870
        %s1872 = sshrl.u32 %s1871, 2
        %s1873 = sor.u32 %s1871, %s1872
        %s1874 = sand.u32 15, %s1873
        %v1875 = vld [vmem:[%s1865] sm:%s1874]
        %v1876 = vunpack.c.l.bf16 %v1875
        %v1877 = vunpack.c.h.bf16 %v1875
        %v1878 = vlaneseq
        %v1879 = vand.u32 %v1878, 127
        %vm1881 = vcmp.lt.s32.totalorder %v1879, 10
        %v1882 = vsel %vm1881, %v1876, %v17
        %s1883 = scalar_lea.vmem [#allocation17], 140
        %v1884 = vpack.c.bf16 0.0, %v1882
        %s1886 = ssub.s32 16, 1
        %1887 = vst [vmem:[%s1883] sm:%s1886] %v1884
        %s1888 = scalar_lea.vmem %s5, 144
        %s1890 = sor.u32 255, 127
        %s1891 = sand.u32 %s1890, 85
        %s1892 = sshrl.u32 %s1891, 1
        %s1893 = sor.u32 %s1891, %s1892
        %s1894 = sand.u32 51, %s1893
        %s1895 = sshrl.u32 %s1894, 2
        %s1896 = sor.u32 %s1894, %s1895
        %s1897 = sand.u32 15, %s1896
        %v1898 = vld [vmem:[%s1888] sm:%s1897]
        %v1899 = vunpack.c.l.bf16 %v1898
        %v1900 = vunpack.c.h.bf16 %v1898
        %v1901 = vlaneseq
        %v1902 = vand.u32 %v1901, 127
        %vm1904 = vcmp.lt.s32.totalorder %v1902, 10
        %v1905 = vsel %vm1904, %v1899, %v17
        %s1906 = scalar_lea.vmem [#allocation17], 144
        %v1907 = vpack.c.bf16 0.0, %v1905
        %s1909 = ssub.s32 16, 1
        %1910 = vst [vmem:[%s1906] sm:%s1909] %v1907
        %s1911 = scalar_lea.vmem %s5, 148
        %s1913 = sor.u32 255, 127
        %s1914 = sand.u32 %s1913, 85
        %s1915 = sshrl.u32 %s1914, 1
        %s1916 = sor.u32 %s1914, %s1915
        %s1917 = sand.u32 51, %s1916
        %s1918 = sshrl.u32 %s1917, 2
        %s1919 = sor.u32 %s1917, %s1918
        %s1920 = sand.u32 15, %s1919
        %v1921 = vld [vmem:[%s1911] sm:%s1920]
        %v1922 = vunpack.c.l.bf16 %v1921
        %v1923 = vunpack.c.h.bf16 %v1921
        %v1924 = vlaneseq
        %v1925 = vand.u32 %v1924, 127
        %vm1927 = vcmp.lt.s32.totalorder %v1925, 10
        %v1928 = vsel %vm1927, %v1922, %v17
        %s1929 = scalar_lea.vmem [#allocation17], 148
        %v1930 = vpack.c.bf16 0.0, %v1928
        %s1932 = ssub.s32 16, 1
        %1933 = vst [vmem:[%s1929] sm:%s1932] %v1930
        %s1934 = scalar_lea.vmem %s5, 152
        %s1936 = sor.u32 255, 127
        %s1937 = sand.u32 %s1936, 85
        %s1938 = sshrl.u32 %s1937, 1
        %s1939 = sor.u32 %s1937, %s1938
        %s1940 = sand.u32 51, %s1939
        %s1941 = sshrl.u32 %s1940, 2
        %s1942 = sor.u32 %s1940, %s1941
        %s1943 = sand.u32 15, %s1942
        %v1944 = vld [vmem:[%s1934] sm:%s1943]
        %v1945 = vunpack.c.l.bf16 %v1944
        %v1946 = vunpack.c.h.bf16 %v1944
        %v1947 = vlaneseq
        %v1948 = vand.u32 %v1947, 127
        %vm1950 = vcmp.lt.s32.totalorder %v1948, 10
        %v1951 = vsel %vm1950, %v1945, %v17
        %s1952 = scalar_lea.vmem [#allocation17], 152
        %v1953 = vpack.c.bf16 0.0, %v1951
        %s1955 = ssub.s32 16, 1
        %1956 = vst [vmem:[%s1952] sm:%s1955] %v1953
        %s1957 = scalar_lea.vmem %s5, 156
        %s1959 = sor.u32 255, 127
        %s1960 = sand.u32 %s1959, 85
        %s1961 = sshrl.u32 %s1960, 1
        %s1962 = sor.u32 %s1960, %s1961
        %s1963 = sand.u32 51, %s1962
        %s1964 = sshrl.u32 %s1963, 2
        %s1965 = sor.u32 %s1963, %s1964
        %s1966 = sand.u32 15, %s1965
        %v1967 = vld [vmem:[%s1957] sm:%s1966]
        %v1968 = vunpack.c.l.bf16 %v1967
        %v1969 = vunpack.c.h.bf16 %v1967
        %v1970 = vlaneseq
        %v1971 = vand.u32 %v1970, 127
        %vm1973 = vcmp.lt.s32.totalorder %v1971, 10
        %v1974 = vsel %vm1973, %v1968, %v17
        %s1975 = scalar_lea.vmem [#allocation17], 156
        %v1976 = vpack.c.bf16 0.0, %v1974
        %s1978 = ssub.s32 16, 1
        %1979 = vst [vmem:[%s1975] sm:%s1978] %v1976
        %s1980 = scalar_lea.vmem %s5, 160
        %s1982 = sor.u32 255, 127
        %s1983 = sand.u32 %s1982, 85
        %s1984 = sshrl.u32 %s1983, 1
        %s1985 = sor.u32 %s1983, %s1984
        %s1986 = sand.u32 51, %s1985
        %s1987 = sshrl.u32 %s1986, 2
        %s1988 = sor.u32 %s1986, %s1987
        %s1989 = sand.u32 15, %s1988
        %v1990 = vld [vmem:[%s1980] sm:%s1989]
        %v1991 = vunpack.c.l.bf16 %v1990
        %v1992 = vunpack.c.h.bf16 %v1990
        %v1993 = vlaneseq
        %v1994 = vand.u32 %v1993, 127
        %vm1996 = vcmp.lt.s32.totalorder %v1994, 10
        %v1997 = vsel %vm1996, %v1991, %v17
        %s1998 = scalar_lea.vmem [#allocation17], 160
        %v1999 = vpack.c.bf16 0.0, %v1997
        %s2001 = ssub.s32 16, 1
        %2002 = vst [vmem:[%s1998] sm:%s2001] %v1999
        %s2003 = scalar_lea.vmem %s5, 164
        %s2005 = sor.u32 255, 127
        %s2006 = sand.u32 %s2005, 85
        %s2007 = sshrl.u32 %s2006, 1
        %s2008 = sor.u32 %s2006, %s2007
        %s2009 = sand.u32 51, %s2008
        %s2010 = sshrl.u32 %s2009, 2
        %s2011 = sor.u32 %s2009, %s2010
        %s2012 = sand.u32 15, %s2011
        %v2013 = vld [vmem:[%s2003] sm:%s2012]
        %v2014 = vunpack.c.l.bf16 %v2013
        %v2015 = vunpack.c.h.bf16 %v2013
        %v2016 = vlaneseq
        %v2017 = vand.u32 %v2016, 127
        %vm2019 = vcmp.lt.s32.totalorder %v2017, 10
        %v2020 = vsel %vm2019, %v2014, %v17
        %s2021 = scalar_lea.vmem [#allocation17], 164
        %v2022 = vpack.c.bf16 0.0, %v2020
        %s2024 = ssub.s32 16, 1
        %2025 = vst [vmem:[%s2021] sm:%s2024] %v2022
        %s2026 = scalar_lea.vmem %s5, 168
        %s2028 = sor.u32 255, 127
        %s2029 = sand.u32 %s2028, 85
        %s2030 = sshrl.u32 %s2029, 1
        %s2031 = sor.u32 %s2029, %s2030
        %s2032 = sand.u32 51, %s2031
        %s2033 = sshrl.u32 %s2032, 2
        %s2034 = sor.u32 %s2032, %s2033
        %s2035 = sand.u32 15, %s2034
        %v2036 = vld [vmem:[%s2026] sm:%s2035]
        %v2037 = vunpack.c.l.bf16 %v2036
        %v2038 = vunpack.c.h.bf16 %v2036
        %v2039 = vlaneseq
        %v2040 = vand.u32 %v2039, 127
        %vm2042 = vcmp.lt.s32.totalorder %v2040, 10
        %v2043 = vsel %vm2042, %v2037, %v17
        %s2044 = scalar_lea.vmem [#allocation17], 168
        %v2045 = vpack.c.bf16 0.0, %v2043
        %s2047 = ssub.s32 16, 1
        %2048 = vst [vmem:[%s2044] sm:%s2047] %v2045
        %s2049 = scalar_lea.vmem %s5, 172
        %s2051 = sor.u32 255, 127
        %s2052 = sand.u32 %s2051, 85
        %s2053 = sshrl.u32 %s2052, 1
        %s2054 = sor.u32 %s2052, %s2053
        %s2055 = sand.u32 51, %s2054
        %s2056 = sshrl.u32 %s2055, 2
        %s2057 = sor.u32 %s2055, %s2056
        %s2058 = sand.u32 15, %s2057
        %v2059 = vld [vmem:[%s2049] sm:%s2058]
        %v2060 = vunpack.c.l.bf16 %v2059
        %v2061 = vunpack.c.h.bf16 %v2059
        %v2062 = vlaneseq
        %v2063 = vand.u32 %v2062, 127
        %vm2065 = vcmp.lt.s32.totalorder %v2063, 10
        %v2066 = vsel %vm2065, %v2060, %v17
        %s2067 = scalar_lea.vmem [#allocation17], 172
        %v2068 = vpack.c.bf16 0.0, %v2066
        %s2070 = ssub.s32 16, 1
        %2071 = vst [vmem:[%s2067] sm:%s2070] %v2068
        %s2072 = scalar_lea.vmem %s5, 176
        %s2074 = sor.u32 255, 127
        %s2075 = sand.u32 %s2074, 85
        %s2076 = sshrl.u32 %s2075, 1
        %s2077 = sor.u32 %s2075, %s2076
        %s2078 = sand.u32 51, %s2077
        %s2079 = sshrl.u32 %s2078, 2
        %s2080 = sor.u32 %s2078, %s2079
        %s2081 = sand.u32 15, %s2080
        %v2082 = vld [vmem:[%s2072] sm:%s2081]
        %v2083 = vunpack.c.l.bf16 %v2082
        %v2084 = vunpack.c.h.bf16 %v2082
        %v2085 = vlaneseq
        %v2086 = vand.u32 %v2085, 127
        %vm2088 = vcmp.lt.s32.totalorder %v2086, 10
        %v2089 = vsel %vm2088, %v2083, %v17
        %s2090 = scalar_lea.vmem [#allocation17], 176
        %v2091 = vpack.c.bf16 0.0, %v2089
        %s2093 = ssub.s32 16, 1
        %2094 = vst [vmem:[%s2090] sm:%s2093] %v2091
        %s2095 = scalar_lea.vmem %s5, 180
        %s2097 = sor.u32 255, 127
        %s2098 = sand.u32 %s2097, 85
        %s2099 = sshrl.u32 %s2098, 1
        %s2100 = sor.u32 %s2098, %s2099
        %s2101 = sand.u32 51, %s2100
        %s2102 = sshrl.u32 %s2101, 2
        %s2103 = sor.u32 %s2101, %s2102
        %s2104 = sand.u32 15, %s2103
        %v2105 = vld [vmem:[%s2095] sm:%s2104]
        %v2106 = vunpack.c.l.bf16 %v2105
        %v2107 = vunpack.c.h.bf16 %v2105
        %v2108 = vlaneseq
        %v2109 = vand.u32 %v2108, 127
        %vm2111 = vcmp.lt.s32.totalorder %v2109, 10
        %v2112 = vsel %vm2111, %v2106, %v17
        %s2113 = scalar_lea.vmem [#allocation17], 180
        %v2114 = vpack.c.bf16 0.0, %v2112
        %s2116 = ssub.s32 16, 1
        %2117 = vst [vmem:[%s2113] sm:%s2116] %v2114
        %s2118 = scalar_lea.vmem %s5, 184
        %s2120 = sor.u32 255, 127
        %s2121 = sand.u32 %s2120, 85
        %s2122 = sshrl.u32 %s2121, 1
        %s2123 = sor.u32 %s2121, %s2122
        %s2124 = sand.u32 51, %s2123
        %s2125 = sshrl.u32 %s2124, 2
        %s2126 = sor.u32 %s2124, %s2125
        %s2127 = sand.u32 15, %s2126
        %v2128 = vld [vmem:[%s2118] sm:%s2127]
        %v2129 = vunpack.c.l.bf16 %v2128
        %v2130 = vunpack.c.h.bf16 %v2128
        %v2131 = vlaneseq
        %v2132 = vand.u32 %v2131, 127
        %vm2134 = vcmp.lt.s32.totalorder %v2132, 10
        %v2135 = vsel %vm2134, %v2129, %v17
        %s2136 = scalar_lea.vmem [#allocation17], 184
        %v2137 = vpack.c.bf16 0.0, %v2135
        %s2139 = ssub.s32 16, 1
        %2140 = vst [vmem:[%s2136] sm:%s2139] %v2137
        %s2141 = scalar_lea.vmem %s5, 188
        %s2143 = sor.u32 255, 127
        %s2144 = sand.u32 %s2143, 85
        %s2145 = sshrl.u32 %s2144, 1
        %s2146 = sor.u32 %s2144, %s2145
        %s2147 = sand.u32 51, %s2146
        %s2148 = sshrl.u32 %s2147, 2
        %s2149 = sor.u32 %s2147, %s2148
        %s2150 = sand.u32 15, %s2149
        %v2151 = vld [vmem:[%s2141] sm:%s2150]
        %v2152 = vunpack.c.l.bf16 %v2151
        %v2153 = vunpack.c.h.bf16 %v2151
        %v2154 = vlaneseq
        %v2155 = vand.u32 %v2154, 127
        %vm2157 = vcmp.lt.s32.totalorder %v2155, 10
        %v2158 = vsel %vm2157, %v2152, %v17
        %s2159 = scalar_lea.vmem [#allocation17], 188
        %v2160 = vpack.c.bf16 0.0, %v2158
        %s2162 = ssub.s32 16, 1
        %2163 = vst [vmem:[%s2159] sm:%s2162] %v2160
        %s2164 = scalar_lea.vmem %s5, 192
        %s2166 = sor.u32 255, 127
        %s2167 = sand.u32 %s2166, 85
        %s2168 = sshrl.u32 %s2167, 1
        %s2169 = sor.u32 %s2167, %s2168
        %s2170 = sand.u32 51, %s2169
        %s2171 = sshrl.u32 %s2170, 2
        %s2172 = sor.u32 %s2170, %s2171
        %s2173 = sand.u32 15, %s2172
        %v2174 = vld [vmem:[%s2164] sm:%s2173]
        %v2175 = vunpack.c.l.bf16 %v2174
        %v2176 = vunpack.c.h.bf16 %v2174
        %v2177 = vlaneseq
        %v2178 = vand.u32 %v2177, 127
        %vm2180 = vcmp.lt.s32.totalorder %v2178, 10
        %v2181 = vsel %vm2180, %v2175, %v17
        %s2182 = scalar_lea.vmem [#allocation17], 192
        %v2183 = vpack.c.bf16 0.0, %v2181
        %s2185 = ssub.s32 16, 1
        %2186 = vst [vmem:[%s2182] sm:%s2185] %v2183
        %s2187 = scalar_lea.vmem %s5, 196
        %s2189 = sor.u32 255, 127
        %s2190 = sand.u32 %s2189, 85
        %s2191 = sshrl.u32 %s2190, 1
        %s2192 = sor.u32 %s2190, %s2191
        %s2193 = sand.u32 51, %s2192
        %s2194 = sshrl.u32 %s2193, 2
        %s2195 = sor.u32 %s2193, %s2194
        %s2196 = sand.u32 15, %s2195
        %v2197 = vld [vmem:[%s2187] sm:%s2196]
        %v2198 = vunpack.c.l.bf16 %v2197
        %v2199 = vunpack.c.h.bf16 %v2197
        %v2200 = vlaneseq
        %v2201 = vand.u32 %v2200, 127
        %vm2203 = vcmp.lt.s32.totalorder %v2201, 10
        %v2204 = vsel %vm2203, %v2198, %v17
        %s2205 = scalar_lea.vmem [#allocation17], 196
        %v2206 = vpack.c.bf16 0.0, %v2204
        %s2208 = ssub.s32 16, 1
        %2209 = vst [vmem:[%s2205] sm:%s2208] %v2206
        %s2210 = scalar_lea.vmem %s5, 200
        %s2212 = sor.u32 255, 127
        %s2213 = sand.u32 %s2212, 85
        %s2214 = sshrl.u32 %s2213, 1
        %s2215 = sor.u32 %s2213, %s2214
        %s2216 = sand.u32 51, %s2215
        %s2217 = sshrl.u32 %s2216, 2
        %s2218 = sor.u32 %s2216, %s2217
        %s2219 = sand.u32 15, %s2218
        %v2220 = vld [vmem:[%s2210] sm:%s2219]
        %v2221 = vunpack.c.l.bf16 %v2220
        %v2222 = vunpack.c.h.bf16 %v2220
        %v2223 = vlaneseq
        %v2224 = vand.u32 %v2223, 127
        %vm2226 = vcmp.lt.s32.totalorder %v2224, 10
        %v2227 = vsel %vm2226, %v2221, %v17
        %s2228 = scalar_lea.vmem [#allocation17], 200
        %v2229 = vpack.c.bf16 0.0, %v2227
        %s2231 = ssub.s32 16, 1
        %2232 = vst [vmem:[%s2228] sm:%s2231] %v2229
        %s2233 = scalar_lea.vmem %s5, 204
        %s2235 = sor.u32 255, 127
        %s2236 = sand.u32 %s2235, 85
        %s2237 = sshrl.u32 %s2236, 1
        %s2238 = sor.u32 %s2236, %s2237
        %s2239 = sand.u32 51, %s2238
        %s2240 = sshrl.u32 %s2239, 2
        %s2241 = sor.u32 %s2239, %s2240
        %s2242 = sand.u32 15, %s2241
        %v2243 = vld [vmem:[%s2233] sm:%s2242]
        %v2244 = vunpack.c.l.bf16 %v2243
        %v2245 = vunpack.c.h.bf16 %v2243
        %v2246 = vlaneseq
        %v2247 = vand.u32 %v2246, 127
        %vm2249 = vcmp.lt.s32.totalorder %v2247, 10
        %v2250 = vsel %vm2249, %v2244, %v17
        %s2251 = scalar_lea.vmem [#allocation17], 204
        %v2252 = vpack.c.bf16 0.0, %v2250
        %s2254 = ssub.s32 16, 1
        %2255 = vst [vmem:[%s2251] sm:%s2254] %v2252
        %s2256 = scalar_lea.vmem %s5, 208
        %s2258 = sor.u32 255, 127
        %s2259 = sand.u32 %s2258, 85
        %s2260 = sshrl.u32 %s2259, 1
        %s2261 = sor.u32 %s2259, %s2260
        %s2262 = sand.u32 51, %s2261
        %s2263 = sshrl.u32 %s2262, 2
        %s2264 = sor.u32 %s2262, %s2263
        %s2265 = sand.u32 15, %s2264
        %v2266 = vld [vmem:[%s2256] sm:%s2265]
        %v2267 = vunpack.c.l.bf16 %v2266
        %v2268 = vunpack.c.h.bf16 %v2266
        %v2269 = vlaneseq
        %v2270 = vand.u32 %v2269, 127
        %vm2272 = vcmp.lt.s32.totalorder %v2270, 10
        %v2273 = vsel %vm2272, %v2267, %v17
        %s2274 = scalar_lea.vmem [#allocation17], 208
        %v2275 = vpack.c.bf16 0.0, %v2273
        %s2277 = ssub.s32 16, 1
        %2278 = vst [vmem:[%s2274] sm:%s2277] %v2275
        %s2279 = scalar_lea.vmem %s5, 212
        %s2281 = sor.u32 255, 127
        %s2282 = sand.u32 %s2281, 85
        %s2283 = sshrl.u32 %s2282, 1
        %s2284 = sor.u32 %s2282, %s2283
        %s2285 = sand.u32 51, %s2284
        %s2286 = sshrl.u32 %s2285, 2
        %s2287 = sor.u32 %s2285, %s2286
        %s2288 = sand.u32 15, %s2287
        %v2289 = vld [vmem:[%s2279] sm:%s2288]
        %v2290 = vunpack.c.l.bf16 %v2289
        %v2291 = vunpack.c.h.bf16 %v2289
        %v2292 = vlaneseq
        %v2293 = vand.u32 %v2292, 127
        %vm2295 = vcmp.lt.s32.totalorder %v2293, 10
        %v2296 = vsel %vm2295, %v2290, %v17
        %s2297 = scalar_lea.vmem [#allocation17], 212
        %v2298 = vpack.c.bf16 0.0, %v2296
        %s2300 = ssub.s32 16, 1
        %2301 = vst [vmem:[%s2297] sm:%s2300] %v2298
        %s2302 = scalar_lea.vmem %s5, 216
        %s2304 = sor.u32 255, 127
        %s2305 = sand.u32 %s2304, 85
        %s2306 = sshrl.u32 %s2305, 1
        %s2307 = sor.u32 %s2305, %s2306
        %s2308 = sand.u32 51, %s2307
        %s2309 = sshrl.u32 %s2308, 2
        %s2310 = sor.u32 %s2308, %s2309
        %s2311 = sand.u32 15, %s2310
        %v2312 = vld [vmem:[%s2302] sm:%s2311]
        %v2313 = vunpack.c.l.bf16 %v2312
        %v2314 = vunpack.c.h.bf16 %v2312
        %v2315 = vlaneseq
        %v2316 = vand.u32 %v2315, 127
        %vm2318 = vcmp.lt.s32.totalorder %v2316, 10
        %v2319 = vsel %vm2318, %v2313, %v17
        %s2320 = scalar_lea.vmem [#allocation17], 216
        %v2321 = vpack.c.bf16 0.0, %v2319
        %s2323 = ssub.s32 16, 1
        %2324 = vst [vmem:[%s2320] sm:%s2323] %v2321
        %s2325 = scalar_lea.vmem %s5, 220
        %s2327 = sor.u32 255, 127
        %s2328 = sand.u32 %s2327, 85
        %s2329 = sshrl.u32 %s2328, 1
        %s2330 = sor.u32 %s2328, %s2329
        %s2331 = sand.u32 51, %s2330
        %s2332 = sshrl.u32 %s2331, 2
        %s2333 = sor.u32 %s2331, %s2332
        %s2334 = sand.u32 15, %s2333
        %v2335 = vld [vmem:[%s2325] sm:%s2334]
        %v2336 = vunpack.c.l.bf16 %v2335
        %v2337 = vunpack.c.h.bf16 %v2335
        %v2338 = vlaneseq
        %v2339 = vand.u32 %v2338, 127
        %vm2341 = vcmp.lt.s32.totalorder %v2339, 10
        %v2342 = vsel %vm2341, %v2336, %v17
        %s2343 = scalar_lea.vmem [#allocation17], 220
        %v2344 = vpack.c.bf16 0.0, %v2342
        %s2346 = ssub.s32 16, 1
        %2347 = vst [vmem:[%s2343] sm:%s2346] %v2344
        %s2348 = scalar_lea.vmem %s5, 224
        %s2350 = sor.u32 255, 127
        %s2351 = sand.u32 %s2350, 85
        %s2352 = sshrl.u32 %s2351, 1
        %s2353 = sor.u32 %s2351, %s2352
        %s2354 = sand.u32 51, %s2353
        %s2355 = sshrl.u32 %s2354, 2
        %s2356 = sor.u32 %s2354, %s2355
        %s2357 = sand.u32 15, %s2356
        %v2358 = vld [vmem:[%s2348] sm:%s2357]
        %v2359 = vunpack.c.l.bf16 %v2358
        %v2360 = vunpack.c.h.bf16 %v2358
        %v2361 = vlaneseq
        %v2362 = vand.u32 %v2361, 127
        %vm2364 = vcmp.lt.s32.totalorder %v2362, 10
        %v2365 = vsel %vm2364, %v2359, %v17
        %s2366 = scalar_lea.vmem [#allocation17], 224
        %v2367 = vpack.c.bf16 0.0, %v2365
        %s2369 = ssub.s32 16, 1
        %2370 = vst [vmem:[%s2366] sm:%s2369] %v2367
        %s2371 = scalar_lea.vmem %s5, 228
        %s2373 = sor.u32 255, 127
        %s2374 = sand.u32 %s2373, 85
        %s2375 = sshrl.u32 %s2374, 1
        %s2376 = sor.u32 %s2374, %s2375
        %s2377 = sand.u32 51, %s2376
        %s2378 = sshrl.u32 %s2377, 2
        %s2379 = sor.u32 %s2377, %s2378
        %s2380 = sand.u32 15, %s2379
        %v2381 = vld [vmem:[%s2371] sm:%s2380]
        %v2382 = vunpack.c.l.bf16 %v2381
        %v2383 = vunpack.c.h.bf16 %v2381
        %v2384 = vlaneseq
        %v2385 = vand.u32 %v2384, 127
        %vm2387 = vcmp.lt.s32.totalorder %v2385, 10
        %v2388 = vsel %vm2387, %v2382, %v17
        %s2389 = scalar_lea.vmem [#allocation17], 228
        %v2390 = vpack.c.bf16 0.0, %v2388
        %s2392 = ssub.s32 16, 1
        %2393 = vst [vmem:[%s2389] sm:%s2392] %v2390
        %s2394 = scalar_lea.vmem %s5, 232
        %s2396 = sor.u32 255, 127
        %s2397 = sand.u32 %s2396, 85
        %s2398 = sshrl.u32 %s2397, 1
        %s2399 = sor.u32 %s2397, %s2398
        %s2400 = sand.u32 51, %s2399
        %s2401 = sshrl.u32 %s2400, 2
        %s2402 = sor.u32 %s2400, %s2401
        %s2403 = sand.u32 15, %s2402
        %v2404 = vld [vmem:[%s2394] sm:%s2403]
        %v2405 = vunpack.c.l.bf16 %v2404
        %v2406 = vunpack.c.h.bf16 %v2404
        %v2407 = vlaneseq
        %v2408 = vand.u32 %v2407, 127
        %vm2410 = vcmp.lt.s32.totalorder %v2408, 10
        %v2411 = vsel %vm2410, %v2405, %v17
        %s2412 = scalar_lea.vmem [#allocation17], 232
        %v2413 = vpack.c.bf16 0.0, %v2411
        %s2415 = ssub.s32 16, 1
        %2416 = vst [vmem:[%s2412] sm:%s2415] %v2413
        %s2417 = scalar_lea.vmem %s5, 236
        %s2419 = sor.u32 255, 127
        %s2420 = sand.u32 %s2419, 85
        %s2421 = sshrl.u32 %s2420, 1
        %s2422 = sor.u32 %s2420, %s2421
        %s2423 = sand.u32 51, %s2422
        %s2424 = sshrl.u32 %s2423, 2
        %s2425 = sor.u32 %s2423, %s2424
        %s2426 = sand.u32 15, %s2425
        %v2427 = vld [vmem:[%s2417] sm:%s2426]
        %v2428 = vunpack.c.l.bf16 %v2427
        %v2429 = vunpack.c.h.bf16 %v2427
        %v2430 = vlaneseq
        %v2431 = vand.u32 %v2430, 127
        %vm2433 = vcmp.lt.s32.totalorder %v2431, 10
        %v2434 = vsel %vm2433, %v2428, %v17
        %s2435 = scalar_lea.vmem [#allocation17], 236
        %v2436 = vpack.c.bf16 0.0, %v2434
        %s2438 = ssub.s32 16, 1
        %2439 = vst [vmem:[%s2435] sm:%s2438] %v2436
        %s2440 = scalar_lea.vmem %s5, 240
        %s2442 = sor.u32 255, 127
        %s2443 = sand.u32 %s2442, 85
        %s2444 = sshrl.u32 %s2443, 1
        %s2445 = sor.u32 %s2443, %s2444
        %s2446 = sand.u32 51, %s2445
        %s2447 = sshrl.u32 %s2446, 2
        %s2448 = sor.u32 %s2446, %s2447
        %s2449 = sand.u32 15, %s2448
        %v2450 = vld [vmem:[%s2440] sm:%s2449]
        %v2451 = vunpack.c.l.bf16 %v2450
        %v2452 = vunpack.c.h.bf16 %v2450
        %v2453 = vlaneseq
        %v2454 = vand.u32 %v2453, 127
        %vm2456 = vcmp.lt.s32.totalorder %v2454, 10
        %v2457 = vsel %vm2456, %v2451, %v17
        %s2458 = scalar_lea.vmem [#allocation17], 240
        %v2459 = vpack.c.bf16 0.0, %v2457
        %s2461 = ssub.s32 16, 1
        %2462 = vst [vmem:[%s2458] sm:%s2461] %v2459
        %s2463 = scalar_lea.vmem %s5, 244
        %s2465 = sor.u32 255, 127
        %s2466 = sand.u32 %s2465, 85
        %s2467 = sshrl.u32 %s2466, 1
        %s2468 = sor.u32 %s2466, %s2467
        %s2469 = sand.u32 51, %s2468
        %s2470 = sshrl.u32 %s2469, 2
        %s2471 = sor.u32 %s2469, %s2470
        %s2472 = sand.u32 15, %s2471
        %v2473 = vld [vmem:[%s2463] sm:%s2472]
        %v2474 = vunpack.c.l.bf16 %v2473
        %v2475 = vunpack.c.h.bf16 %v2473
        %v2476 = vlaneseq
        %v2477 = vand.u32 %v2476, 127
        %vm2479 = vcmp.lt.s32.totalorder %v2477, 10
        %v2480 = vsel %vm2479, %v2474, %v17
        %s2481 = scalar_lea.vmem [#allocation17], 244
        %v2482 = vpack.c.bf16 0.0, %v2480
        %s2484 = ssub.s32 16, 1
        %2485 = vst [vmem:[%s2481] sm:%s2484] %v2482
        %s2486 = scalar_lea.vmem %s5, 248
        %s2488 = sor.u32 255, 127
        %s2489 = sand.u32 %s2488, 85
        %s2490 = sshrl.u32 %s2489, 1
        %s2491 = sor.u32 %s2489, %s2490
        %s2492 = sand.u32 51, %s2491
        %s2493 = sshrl.u32 %s2492, 2
        %s2494 = sor.u32 %s2492, %s2493
        %s2495 = sand.u32 15, %s2494
        %v2496 = vld [vmem:[%s2486] sm:%s2495]
        %v2497 = vunpack.c.l.bf16 %v2496
        %v2498 = vunpack.c.h.bf16 %v2496
        %v2499 = vlaneseq
        %v2500 = vand.u32 %v2499, 127
        %vm2502 = vcmp.lt.s32.totalorder %v2500, 10
        %v2503 = vsel %vm2502, %v2497, %v17
        %s2504 = scalar_lea.vmem [#allocation17], 248
        %v2505 = vpack.c.bf16 0.0, %v2503
        %s2507 = ssub.s32 16, 1
        %2508 = vst [vmem:[%s2504] sm:%s2507] %v2505
        %s2509 = scalar_lea.vmem %s5, 252
        %s2511 = sor.u32 255, 127
        %s2512 = sand.u32 %s2511, 85
        %s2513 = sshrl.u32 %s2512, 1
        %s2514 = sor.u32 %s2512, %s2513
        %s2515 = sand.u32 51, %s2514
        %s2516 = sshrl.u32 %s2515, 2
        %s2517 = sor.u32 %s2515, %s2516
        %s2518 = sand.u32 15, %s2517
        %v2519 = vld [vmem:[%s2509] sm:%s2518]
        %v2520 = vunpack.c.l.bf16 %v2519
        %v2521 = vunpack.c.h.bf16 %v2519
        %v2522 = vlaneseq
        %v2523 = vand.u32 %v2522, 127
        %vm2525 = vcmp.lt.s32.totalorder %v2523, 10
        %v2526 = vsel %vm2525, %v2520, %v17
        %s2527 = scalar_lea.vmem [#allocation17], 252
        %v2528 = vpack.c.bf16 0.0, %v2526
        %s2530 = ssub.s32 16, 1
        %2531 = vst [vmem:[%s2527] sm:%s2530] %v2528
        %v2532 = vld [vmem:[%s9] sm:$0x1]
        %v2533 = vlaneseq
        %v2534 = vshrl.u32 %v2533, 7
        %vm2536 = vcmp.lt.s32.totalorder %v2534, 1
        %v2537 = vsel %vm2536, %v2532, %v21
        %v2538 = vlaneseq
        %v2539 = vand.u32 %v2538, 127
        %vm2541 = vcmp.lt.s32.totalorder %v2539, 10
        %v2542 = vsel %vm2541, %v2537, %v21
        %s2544 = ssub.s32 2, 1
        %2545 = vst [vmem:[#allocation18] sm:%s2544] %v2542
        %p2547 = scmp.eq.s32.totalorder %s36, 0
        // Predicated region
        $region57: #{encoder_decoder_forward.2} parent=55 // pred_check
          %p2548 = pneg %p2547
        $region58: #{encoder_decoder_forward.2} parent=55 // pred_check_branch
          %2550 = sbr.rel (%p2548) target = $region60
        $region59: #{encoder_decoder_forward.2} parent=55 // pred_region
          %2551 = vst [vmem:[#allocation2] sm:$0x1] 0.0
        $region60: #{encoder_decoder_forward.2} parent=55 // pred_fallthru
          _
        %v2552 = vld [vmem:[%s364] sm:$0xf]
        %v2553 = vld [vmem:[%s364 + $0x4] sm:$0xf]
        %v2554 = vld [vmem:[%s364 + $0x8] sm:$0xf]
        %v2555 = vld [vmem:[%s364 + $0xc] sm:$0xf]
        %v2556 = vld [vmem:[%s364 + $0x10] sm:$0xf]
        %v2557 = vld [vmem:[%s364 + $0x14] sm:$0xf]
        %v2558 = vld [vmem:[%s364 + $0x18] sm:$0xf]
        %v2559 = vld [vmem:[%s364 + $0x1c] sm:$0xf]
        %v2560 = vld [vmem:[%s364 + $0x20] sm:$0xf]
        %v2561 = vld [vmem:[%s364 + $0x24] sm:$0xf]
        %v2562 = vld [vmem:[%s364 + $0x28] sm:$0xf]
        %v2563 = vld [vmem:[%s364 + $0x2c] sm:$0xf]
        %v2564 = vld [vmem:[%s364 + $0x30] sm:$0xf]
        %v2565 = vld [vmem:[%s364 + $0x34] sm:$0xf]
        %v2566 = vld [vmem:[%s364 + $0x38] sm:$0xf]
        %v2567 = vld [vmem:[%s364 + $0x3c] sm:$0xf]
        %v2568 = vld [vmem:[%s364 + $0x40] sm:$0xf]
        %v2569 = vld [vmem:[%s364 + $0x44] sm:$0xf]
        %v2570 = vld [vmem:[%s364 + $0x48] sm:$0xf]
        %v2571 = vld [vmem:[%s364 + $0x4c] sm:$0xf]
        %v2572 = vld [vmem:[%s364 + $0x50] sm:$0xf]
        %v2573 = vld [vmem:[%s364 + $0x54] sm:$0xf]
        %v2574 = vld [vmem:[%s364 + $0x58] sm:$0xf]
        %v2575 = vld [vmem:[%s364 + $0x5c] sm:$0xf]
        %v2576 = vld [vmem:[%s364 + $0x60] sm:$0xf]
        %v2577 = vld [vmem:[%s364 + $0x64] sm:$0xf]
        %v2578 = vld [vmem:[%s364 + $0x68] sm:$0xf]
        %v2579 = vld [vmem:[%s364 + $0x6c] sm:$0xf]
        %v2580 = vld [vmem:[%s364 + $0x70] sm:$0xf]
        %v2581 = vld [vmem:[%s364 + $0x74] sm:$0xf]
        %v2582 = vld [vmem:[%s364 + $0x78] sm:$0xf]
        %v2583 = vld [vmem:[%s364 + $0x7c] sm:$0xf]
        %v2584 = vld [vmem:[#allocation15] sm:$0xf]
        %v2585 = vld [vmem:[#allocation15 + $0x4] sm:$0xf]
        %v2586 = vld [vmem:[#allocation15 + $0x8] sm:$0xf]
        %v2587 = vld [vmem:[#allocation15 + $0xc] sm:$0xf]
        %v2588 = vld [vmem:[#allocation15 + $0x10] sm:$0xf]
        %v2589 = vld [vmem:[#allocation15 + $0x14] sm:$0xf]
        %v2622 = vunpack.c.l.b16 %v2552
        %v2623 = vunpack.c.l.b16 %v2553
        %v2624 = vunpack.c.l.b16 %v2554
        %v2625 = vunpack.c.l.b16 %v2555
        %v2626 = vunpack.c.l.b16 %v2556
        %v2627 = vunpack.c.l.b16 %v2557
        %v2628 = vunpack.c.l.b16 %v2558
        %v2629 = vunpack.c.l.b16 %v2559
        %v2630 = vunpack.c.l.b16 %v2560
        %v2631 = vunpack.c.l.b16 %v2561
        %v2632 = vunpack.c.l.b16 %v2562
        %v2633 = vunpack.c.l.b16 %v2563
        %v2634 = vunpack.c.l.b16 %v2564
        %v2635 = vunpack.c.l.b16 %v2565
        %v2636 = vunpack.c.l.b16 %v2566
        %v2637 = vunpack.c.l.b16 %v2567
        %v2638 = vunpack.c.l.b16 %v2568
        %v2639 = vunpack.c.l.b16 %v2569
        %v2640 = vunpack.c.l.b16 %v2570
        %v2641 = vunpack.c.l.b16 %v2571
        %v2642 = vunpack.c.l.b16 %v2572
        %v2643 = vunpack.c.l.b16 %v2573
        %v2644 = vunpack.c.l.b16 %v2574
        %v2645 = vunpack.c.l.b16 %v2575
        %v2646 = vunpack.c.l.b16 %v2576
        %v2647 = vunpack.c.l.b16 %v2577
        %v2648 = vunpack.c.l.b16 %v2578
        %v2649 = vunpack.c.l.b16 %v2579
        %v2650 = vunpack.c.l.b16 %v2580
        %v2651 = vunpack.c.l.b16 %v2581
        %v2652 = vunpack.c.l.b16 %v2582
        %v2653 = vunpack.c.l.b16 %v2583
        %v2654 = vpack.c.b16 %v2623, %v2622
        %v2655 = vpack.c.b16 %v2625, %v2624
        %v2656 = vpack.c.b16 %v2627, %v2626
        %v2657 = vpack.c.b16 %v2629, %v2628
        %v2658 = vpack.c.b16 %v2631, %v2630
        %v2659 = vpack.c.b16 %v2633, %v2632
        %v2660 = vpack.c.b16 %v2635, %v2634
        %v2661 = vpack.c.b16 %v2637, %v2636
        %v2662 = vpack.c.b16 %v2639, %v2638
        %v2663 = vpack.c.b16 %v2641, %v2640
        %v2664 = vpack.c.b16 %v2643, %v2642
        %v2665 = vpack.c.b16 %v2645, %v2644
        %v2666 = vpack.c.b16 %v2647, %v2646
        %v2667 = vpack.c.b16 %v2649, %v2648
        %v2668 = vpack.c.b16 %v2651, %v2650
        %v2669 = vpack.c.b16 %v2653, %v2652
        %v2676 = vunpack.c.l.b16 %v2584
        %v2677 = vunpack.c.l.b16 %v2585
        %v2678 = vunpack.c.l.b16 %v2586
        %v2679 = vunpack.c.l.b16 %v2587
        %v2680 = vunpack.c.l.b16 %v2588
        %v2681 = vunpack.c.l.b16 %v2589
        %v2682 = vpack.c.b16 %v2677, %v2676
        %v2683 = vpack.c.b16 %v2679, %v2678
        %v2684 = vpack.c.b16 %v2681, %v2680
        %vm2688 = vcmask 392192
        %v2690 = vsel %vm2688, %v2654, 0
        %v2693 = vsel %vm2688, %v2655, 0
        %v2696 = vsel %vm2688, %v2656, 0
        %v2699 = vsel %vm2688, %v2657, 0
        %v2702 = vsel %vm2688, %v2658, 0
        %v2705 = vsel %vm2688, %v2659, 0
        %v2708 = vsel %vm2688, %v2660, 0
        %v2711 = vsel %vm2688, %v2661, 0
        %v2714 = vsel %vm2688, %v2662, 0
        %v2717 = vsel %vm2688, %v2663, 0
        %v2720 = vsel %vm2688, %v2664, 0
        %v2723 = vsel %vm2688, %v2665, 0
        %v2726 = vsel %vm2688, %v2666, 0
        %v2729 = vsel %vm2688, %v2667, 0
        %v2732 = vsel %vm2688, %v2668, 0
        %v2735 = vsel %vm2688, %v2669, 0
        %2737 = vmatpush.bf16.msra.mxu0 0
        %2738 = vmatpush.bf16.msra.mxu0 0
        %2739 = vmatpush.bf16.msra.mxu0 0
        %2740 = vmatpush.bf16.msra.mxu0 0
        %2741 = vmatpush.bf16.msra.mxu0 0
        %2742 = vmatpush.bf16.msra.mxu0 %v2684
        %2743 = vmatpush.bf16.msra.mxu0 %v2683
        %2744 = vmatpush.bf16.msra.mxu0 %v2682
        %2745 = vmatmul.bf16.gmra.mxu0 %v2690
        %v2746 = vpop.f32.mrf.mxu0
        %v2747 = vadd.f32 0.0, %v2746
        %v2748 = vpop.f32.mrf.mxu0
        %v2749 = vadd.f32 0.0, %v2748
        %2750 = vmatmul.bf16.gmra.mxu0 %v2693
        %v2751 = vpop.f32.mrf.mxu0
        %v2752 = vadd.f32 0.0, %v2751
        %v2753 = vpop.f32.mrf.mxu0
        %v2754 = vadd.f32 0.0, %v2753
        %2755 = vmatmul.bf16.gmra.mxu0 %v2696
        %v2756 = vpop.f32.mrf.mxu0
        %v2757 = vadd.f32 0.0, %v2756
        %v2758 = vpop.f32.mrf.mxu0
        %v2759 = vadd.f32 0.0, %v2758
        %2760 = vmatmul.bf16.gmra.mxu0 %v2699
        %v2761 = vpop.f32.mrf.mxu0
        %v2762 = vadd.f32 0.0, %v2761
        %v2763 = vpop.f32.mrf.mxu0
        %v2764 = vadd.f32 0.0, %v2763
        %2765 = vmatmul.bf16.gmra.mxu0 %v2702
        %v2766 = vpop.f32.mrf.mxu0
        %v2767 = vadd.f32 0.0, %v2766
        %v2768 = vpop.f32.mrf.mxu0
        %v2769 = vadd.f32 0.0, %v2768
        %2770 = vmatmul.bf16.gmra.mxu0 %v2705
        %v2771 = vpop.f32.mrf.mxu0
        %v2772 = vadd.f32 0.0, %v2771
        %v2773 = vpop.f32.mrf.mxu0
        %v2774 = vadd.f32 0.0, %v2773
        %2775 = vmatmul.bf16.gmra.mxu0 %v2708
        %v2776 = vpop.f32.mrf.mxu0
        %v2777 = vadd.f32 0.0, %v2776
        %v2778 = vpop.f32.mrf.mxu0
        %v2779 = vadd.f32 0.0, %v2778
        %2780 = vmatmul.bf16.gmra.mxu0 %v2711
        %v2781 = vpop.f32.mrf.mxu0
        %v2782 = vadd.f32 0.0, %v2781
        %v2783 = vpop.f32.mrf.mxu0
        %v2784 = vadd.f32 0.0, %v2783
        %2785 = vmatmul.bf16.gmra.mxu0 %v2714
        %v2786 = vpop.f32.mrf.mxu0
        %v2787 = vadd.f32 0.0, %v2786
        %v2788 = vpop.f32.mrf.mxu0
        %v2789 = vadd.f32 0.0, %v2788
        %2790 = vmatmul.bf16.gmra.mxu0 %v2717
        %v2791 = vpop.f32.mrf.mxu0
        %v2792 = vadd.f32 0.0, %v2791
        %v2793 = vpop.f32.mrf.mxu0
        %v2794 = vadd.f32 0.0, %v2793
        %2795 = vmatmul.bf16.gmra.mxu0 %v2720
        %v2796 = vpop.f32.mrf.mxu0
        %v2797 = vadd.f32 0.0, %v2796
        %v2798 = vpop.f32.mrf.mxu0
        %v2799 = vadd.f32 0.0, %v2798
        %2800 = vmatmul.bf16.gmra.mxu0 %v2723
        %v2801 = vpop.f32.mrf.mxu0
        %v2802 = vadd.f32 0.0, %v2801
        %v2803 = vpop.f32.mrf.mxu0
        %v2804 = vadd.f32 0.0, %v2803
        %2805 = vmatmul.bf16.gmra.mxu0 %v2726
        %v2806 = vpop.f32.mrf.mxu0
        %v2807 = vadd.f32 0.0, %v2806
        %v2808 = vpop.f32.mrf.mxu0
        %v2809 = vadd.f32 0.0, %v2808
        %2810 = vmatmul.bf16.gmra.mxu0 %v2729
        %v2811 = vpop.f32.mrf.mxu0
        %v2812 = vadd.f32 0.0, %v2811
        %v2813 = vpop.f32.mrf.mxu0
        %v2814 = vadd.f32 0.0, %v2813
        %2815 = vmatmul.bf16.gmra.mxu0 %v2732
        %v2816 = vpop.f32.mrf.mxu0
        %v2817 = vadd.f32 0.0, %v2816
        %v2818 = vpop.f32.mrf.mxu0
        %v2819 = vadd.f32 0.0, %v2818
        %2820 = vmatmul.bf16.gmra.mxu0 %v2735
        %v2821 = vpop.f32.mrf.mxu0
        %v2822 = vadd.f32 0.0, %v2821
        %v2823 = vpop.f32.mrf.mxu0
        %v2824 = vadd.f32 0.0, %v2823
        %2825 = vdwg.mxu0
        %v2826 = vld [vmem:[#allocation2] sm:$0x1]
        %v2827 = vadd.f32 %v2747, %v2749
        %v2828 = vadd.f32 %v2827, %v2752
        %v2829 = vadd.f32 %v2828, %v2754
        %v2830 = vadd.f32 %v2829, %v2757
        %v2831 = vadd.f32 %v2830, %v2759
        %v2832 = vadd.f32 %v2831, %v2762
        %v2833 = vadd.f32 %v2832, %v2764
        %v2834 = vadd.f32 %v2833, %v2767
        %v2835 = vadd.f32 %v2834, %v2769
        %v2836 = vadd.f32 %v2835, %v2772
        %v2837 = vadd.f32 %v2836, %v2774
        %v2838 = vadd.f32 %v2837, %v2777
        %v2839 = vadd.f32 %v2838, %v2779
        %v2840 = vadd.f32 %v2839, %v2782
        %v2841 = vadd.f32 %v2840, %v2784
        %v2842 = vadd.f32 %v2841, %v2787
        %v2843 = vadd.f32 %v2842, %v2789
        %v2844 = vadd.f32 %v2843, %v2792
        %v2845 = vadd.f32 %v2844, %v2794
        %v2846 = vadd.f32 %v2845, %v2797
        %v2847 = vadd.f32 %v2846, %v2799
        %v2848 = vadd.f32 %v2847, %v2802
        %v2849 = vadd.f32 %v2848, %v2804
        %v2850 = vadd.f32 %v2849, %v2807
        %v2851 = vadd.f32 %v2850, %v2809
        %v2852 = vadd.f32 %v2851, %v2812
        %v2853 = vadd.f32 %v2852, %v2814
        %v2854 = vadd.f32 %v2853, %v2817
        %v2855 = vadd.f32 %v2854, %v2819
        %v2856 = vadd.f32 %v2855, %v2822
        %v2857 = vadd.f32 %v2856, %v2824
        %v2858 = vrot.slane %v2857, 4
        %v2859 = vadd.f32 %v2857, %v2858
        %v2860 = vrot.slane %v2859, 2
        %v2861 = vadd.f32 %v2859, %v2860
        %v2862 = vrot.slane %v2861, 1
        %v2863 = vadd.f32 %v2861, %v2862
        %v2864 = vadd.f32 %v2826, %v2863
        %2865 = vst [vmem:[#allocation2] sm:$0x1] %v2864
        // Predicated region
        $region61: #{encoder_decoder_forward.2} parent=55 // pred_check
          %p2866 = pneg %p2547
        $region62: #{encoder_decoder_forward.2} parent=55 // pred_check_branch
          %2868 = sbr.rel (%p2866) target = $region64
        $region63: #{encoder_decoder_forward.2} parent=55 // pred_region
          %v2869 = vld [vmem:[#allocation2] sm:$0x1]
          %v2870 = vmul.f32 %v2869, 0.00390625
          %v2871 = vld [vmem:[%s1] sm:$0x1]
          %v2872 = vadd.f32 %v2870, %v2871
          %v2873 = vpack.c.bf16 %v2872, %v2872
          %v2874 = vld [vmem:[#allocation16] sm:$0xff]
          %v2875 = vld [vmem:[#allocation16 + $0x8] sm:$0xff]
          %v2876 = vld [vmem:[#allocation16 + $0x10] sm:$0xff]
          %v2877 = vld [vmem:[#allocation16 + $0x18] sm:$0xff]
          %v2878 = vld [vmem:[#allocation16 + $0x20] sm:$0xff]
          %v2879 = vld [vmem:[#allocation16 + $0x28] sm:$0xff]
          %v2880 = vld [vmem:[#allocation16 + $0x30] sm:$0xff]
          %v2881 = vld [vmem:[#allocation16 + $0x38] sm:$0xff]
          %v2882 = vld [vmem:[#allocation16 + $0x40] sm:$0xff]
          %v2883 = vld [vmem:[#allocation16 + $0x48] sm:$0xff]
          %v2884 = vld [vmem:[#allocation16 + $0x50] sm:$0xff]
          %v2885 = vld [vmem:[#allocation16 + $0x58] sm:$0xff]
          %v2886 = vld [vmem:[#allocation16 + $0x60] sm:$0xff]
          %v2887 = vld [vmem:[#allocation16 + $0x68] sm:$0xff]
          %v2888 = vld [vmem:[#allocation16 + $0x70] sm:$0xff]
          %v2889 = vld [vmem:[#allocation16 + $0x78] sm:$0xff]
          %v2890 = vld [vmem:[#allocation16 + $0x80] sm:$0xff]
          %v2891 = vld [vmem:[#allocation16 + $0x88] sm:$0xff]
          %v2892 = vld [vmem:[#allocation16 + $0x90] sm:$0xff]
          %v2893 = vld [vmem:[#allocation16 + $0x98] sm:$0xff]
          %v2894 = vld [vmem:[#allocation16 + $0xa0] sm:$0xff]
          %v2895 = vld [vmem:[#allocation16 + $0xa8] sm:$0xff]
          %v2896 = vld [vmem:[#allocation16 + $0xb0] sm:$0xff]
          %v2897 = vld [vmem:[#allocation16 + $0xb8] sm:$0xff]
          %v2898 = vld [vmem:[#allocation16 + $0xc0] sm:$0xff]
          %v2899 = vld [vmem:[#allocation16 + $0xc8] sm:$0xff]
          %v2900 = vld [vmem:[#allocation16 + $0xd0] sm:$0xff]
          %v2901 = vld [vmem:[#allocation16 + $0xd8] sm:$0xff]
          %v2902 = vld [vmem:[#allocation16 + $0xe0] sm:$0xff]
          %v2903 = vld [vmem:[#allocation16 + $0xe8] sm:$0xff]
          %v2904 = vld [vmem:[#allocation16 + $0xf0] sm:$0xff]
          %v2905 = vld [vmem:[#allocation16 + $0xf8] sm:$0xff]
          %v2906 = vld [vmem:[%s2] sm:$0xf]
          %v2939 = vunpack.c.l.b16 %v2874
          %v2940 = vunpack.c.h.b16 %v2874
          %v2941 = vunpack.c.l.b16 %v2875
          %v2942 = vunpack.c.h.b16 %v2875
          %v2943 = vunpack.c.l.b16 %v2876
          %v2944 = vunpack.c.h.b16 %v2876
          %v2945 = vunpack.c.l.b16 %v2877
          %v2946 = vunpack.c.h.b16 %v2877
          %v2947 = vunpack.c.l.b16 %v2878
          %v2948 = vunpack.c.h.b16 %v2878
          %v2949 = vunpack.c.l.b16 %v2879
          %v2950 = vunpack.c.h.b16 %v2879
          %v2951 = vunpack.c.l.b16 %v2880
          %v2952 = vunpack.c.h.b16 %v2880
          %v2953 = vunpack.c.l.b16 %v2881
          %v2954 = vunpack.c.h.b16 %v2881
          %v2955 = vunpack.c.l.b16 %v2882
          %v2956 = vunpack.c.h.b16 %v2882
          %v2957 = vunpack.c.l.b16 %v2883
          %v2958 = vunpack.c.h.b16 %v2883
          %v2959 = vunpack.c.l.b16 %v2884
          %v2960 = vunpack.c.h.b16 %v2884
          %v2961 = vunpack.c.l.b16 %v2885
          %v2962 = vunpack.c.h.b16 %v2885
          %v2963 = vunpack.c.l.b16 %v2886
          %v2964 = vunpack.c.h.b16 %v2886
          %v2965 = vunpack.c.l.b16 %v2887
          %v2966 = vunpack.c.h.b16 %v2887
          %v2967 = vunpack.c.l.b16 %v2888
          %v2968 = vunpack.c.h.b16 %v2888
          %v2969 = vunpack.c.l.b16 %v2889
          %v2970 = vunpack.c.h.b16 %v2889
          %v2971 = vunpack.c.l.b16 %v2890
          %v2972 = vunpack.c.h.b16 %v2890
          %v2973 = vunpack.c.l.b16 %v2891
          %v2974 = vunpack.c.h.b16 %v2891
          %v2975 = vunpack.c.l.b16 %v2892
          %v2976 = vunpack.c.h.b16 %v2892
          %v2977 = vunpack.c.l.b16 %v2893
          %v2978 = vunpack.c.h.b16 %v2893
          %v2979 = vunpack.c.l.b16 %v2894
          %v2980 = vunpack.c.h.b16 %v2894
          %v2981 = vunpack.c.l.b16 %v2895
          %v2982 = vunpack.c.h.b16 %v2895
          %v2983 = vunpack.c.l.b16 %v2896
          %v2984 = vunpack.c.h.b16 %v2896
          %v2985 = vunpack.c.l.b16 %v2897
          %v2986 = vunpack.c.h.b16 %v2897
          %v2987 = vunpack.c.l.b16 %v2898
          %v2988 = vunpack.c.h.b16 %v2898
          %v2989 = vunpack.c.l.b16 %v2899
          %v2990 = vunpack.c.h.b16 %v2899
          %v2991 = vunpack.c.l.b16 %v2900
          %v2992 = vunpack.c.h.b16 %v2900
          %v2993 = vunpack.c.l.b16 %v2901
          %v2994 = vunpack.c.h.b16 %v2901
          %v2995 = vunpack.c.l.b16 %v2902
          %v2996 = vunpack.c.h.b16 %v2902
          %v2997 = vunpack.c.l.b16 %v2903
          %v2998 = vunpack.c.h.b16 %v2903
          %v2999 = vunpack.c.l.b16 %v2904
          %v3000 = vunpack.c.h.b16 %v2904
          %v3001 = vunpack.c.l.b16 %v2905
          %v3002 = vunpack.c.h.b16 %v2905
          %v3003 = vpack.c.b16 %v2943, %v2939
          %v3004 = vpack.c.b16 %v2944, %v2940
          %v3005 = vpack.c.b16 %v2945, %v2941
          %v3006 = vpack.c.b16 %v2946, %v2942
          %v3007 = vpack.c.b16 %v2951, %v2947
          %v3008 = vpack.c.b16 %v2952, %v2948
          %v3009 = vpack.c.b16 %v2953, %v2949
          %v3010 = vpack.c.b16 %v2954, %v2950
          %v3011 = vpack.c.b16 %v2959, %v2955
          %v3012 = vpack.c.b16 %v2960, %v2956
          %v3013 = vpack.c.b16 %v2961, %v2957
          %v3014 = vpack.c.b16 %v2962, %v2958
          %v3015 = vpack.c.b16 %v2967, %v2963
          %v3016 = vpack.c.b16 %v2968, %v2964
          %v3017 = vpack.c.b16 %v2969, %v2965
          %v3018 = vpack.c.b16 %v2970, %v2966
          %v3019 = vpack.c.b16 %v2975, %v2971
          %v3020 = vpack.c.b16 %v2976, %v2972
          %v3021 = vpack.c.b16 %v2977, %v2973
          %v3022 = vpack.c.b16 %v2978, %v2974
          %v3023 = vpack.c.b16 %v2983, %v2979
          %v3024 = vpack.c.b16 %v2984, %v2980
          %v3025 = vpack.c.b16 %v2985, %v2981
          %v3026 = vpack.c.b16 %v2986, %v2982
          %v3027 = vpack.c.b16 %v2991, %v2987
          %v3028 = vpack.c.b16 %v2992, %v2988
          %v3029 = vpack.c.b16 %v2993, %v2989
          %v3030 = vpack.c.b16 %v2994, %v2990
          %v3031 = vpack.c.b16 %v2999, %v2995
          %v3032 = vpack.c.b16 %v3000, %v2996
          %v3033 = vpack.c.b16 %v3001, %v2997
          %v3034 = vpack.c.b16 %v3002, %v2998
          %v3068 = vperm.slane %v2906, 0
          %v3069 = vperm.slane %v2906, 1
          %v3070 = vperm.slane %v2906, 2
          %v3071 = vperm.slane %v2906, 3
          %3076 = vmatpush.bf16.msra.mxu0 %v3031
          %3077 = vmatpush.bf16.msra.mxu0 %v3027
          %3078 = vmatpush.bf16.msra.mxu0 %v3023
          %3079 = vmatpush.bf16.msra.mxu0 %v3019
          %3080 = vmatpush.bf16.msra.mxu0 %v3015
          %3081 = vmatpush.bf16.msra.mxu0 %v3011
          %3082 = vmatpush.bf16.msra.mxu0 %v3007
          %3083 = vmatpush.bf16.msra.mxu0 %v3003
          %3084 = vmatmul.bf16.gmra.mxu0 %v2873
          %v3085 = vpop.f32.mrf.mxu0
          %v3086 = vadd.f32 %v3068, %v3085
          %v3087 = vpop.f32.mrf.mxu0
          %3088 = vdwg.mxu0
          %3089 = vmatpush.bf16.msra.mxu0 %v3032
          %3090 = vmatpush.bf16.msra.mxu0 %v3028
          %3091 = vmatpush.bf16.msra.mxu0 %v3024
          %3092 = vmatpush.bf16.msra.mxu0 %v3020
          %3093 = vmatpush.bf16.msra.mxu0 %v3016
          %3094 = vmatpush.bf16.msra.mxu0 %v3012
          %3095 = vmatpush.bf16.msra.mxu0 %v3008
          %3096 = vmatpush.bf16.msra.mxu0 %v3004
          %3097 = vmatmul.bf16.gmra.mxu0 %v2873
          %v3098 = vpop.f32.mrf.mxu0
          %v3099 = vadd.f32 %v3069, %v3098
          %v3100 = vpop.f32.mrf.mxu0
          %3101 = vdwg.mxu0
          %3102 = vmatpush.bf16.msra.mxu0 %v3033
          %3103 = vmatpush.bf16.msra.mxu0 %v3029
          %3104 = vmatpush.bf16.msra.mxu0 %v3025
          %3105 = vmatpush.bf16.msra.mxu0 %v3021
          %3106 = vmatpush.bf16.msra.mxu0 %v3017
          %3107 = vmatpush.bf16.msra.mxu0 %v3013
          %3108 = vmatpush.bf16.msra.mxu0 %v3009
          %3109 = vmatpush.bf16.msra.mxu0 %v3005
          %3110 = vmatmul.bf16.gmra.mxu0 %v2873
          %v3111 = vpop.f32.mrf.mxu0
          %v3112 = vadd.f32 %v3070, %v3111
          %v3113 = vpop.f32.mrf.mxu0
          %3114 = vdwg.mxu0
          %3115 = vmatpush.bf16.msra.mxu0 %v3034
          %3116 = vmatpush.bf16.msra.mxu0 %v3030
          %3117 = vmatpush.bf16.msra.mxu0 %v3026
          %3118 = vmatpush.bf16.msra.mxu0 %v3022
          %3119 = vmatpush.bf16.msra.mxu0 %v3018
          %3120 = vmatpush.bf16.msra.mxu0 %v3014
          %3121 = vmatpush.bf16.msra.mxu0 %v3010
          %3122 = vmatpush.bf16.msra.mxu0 %v3006
          %3123 = vmatmul.bf16.gmra.mxu0 %v2873
          %v3124 = vpop.f32.mrf.mxu0
          %v3125 = vadd.f32 %v3071, %v3124
          %v3126 = vpop.f32.mrf.mxu0
          %3127 = vdwg.mxu0
          %v3128 = vmul.f32 %v3086, 0.5
          %v3129 = vmul.f32 %v3099, 0.5
          %v3130 = vmul.f32 %v3112, 0.5
          %v3131 = vmul.f32 %v3125, 0.5
          %v3132 = vmul.f32 %v3086, 0.70710677
          %v3133 = vmul.f32 %v3099, 0.70710677
          %v3134 = vmul.f32 %v3112, 0.70710677
          %v3135 = vmul.f32 %v3125, 0.70710677
          %v3136 = vmul.f32 %v3132, %v3132
          %v3137 = vmin.f32 16.0, %v3136
          %v3138 = vmul.f32 %v3137, 2.1237322e-06
          %v3139 = vadd.f32 %v3138, 0.00028619796
          %v3140 = vmul.f32 %v3137, %v3139
          %v3141 = vadd.f32 %v3140, 0.0036580483
          %v3142 = vmul.f32 %v3137, %v3141
          %v3143 = vadd.f32 %v3142, 0.05243302
          %v3144 = vmul.f32 %v3137, %v3143
          %v3145 = vadd.f32 %v3144, 0.18741608
          %v3146 = vmul.f32 %v3137, %v3145
          %v3147 = vadd.f32 %v3146, 1.1283791
          %v3148 = vmul.f32 %v3132, %v3147
          %v3149 = vmul.f32 %v3137, 3.8918573e-05
          %v3150 = vadd.f32 %v3149, 0.001143296
          %v3151 = vmul.f32 %v3137, %v3150
          %v3152 = vadd.f32 %v3151, 0.014752088
          %v3153 = vmul.f32 %v3137, %v3152
          %v3154 = vadd.f32 %v3153, 0.112945676
          %v3155 = vmul.f32 %v3137, %v3154
          %v3156 = vadd.f32 %v3155, 0.4994258
          %v3157 = vmul.f32 %v3137, %v3156
          %v3158 = vadd.f32 %v3157, 1.0
          %v3159 = vrcp.pop %v3158
          %v3160 = vmul.f32 %v3158, %v3159
          %v3161 = vsub.f32 1.0, %v3160
          %v3162 = vmul.f32 %v3159, %v3161
          %v3163 = vadd.f32 %v3159, %v3162
          %vm3164 = vweird.f32 %v3158
          %vm3165 = vweird.f32 %v3159
          %vm3166 = vmor %vm3164, %vm3165
          %v3167 = vsel %vm3166, %v3159, %v3163
          %v3168 = vand.u32 2147483647, %v3158
          %vm3169 = vcmp.eq.f32.partialorder %v3168, 8.507059e+37
          %v3170 = vand.u32 %v3158, 2147483648
          %v3171 = vor.u32 1.1754944e-38, %v3170
          %v3172 = vsel %vm3169, %v3171, %v3167
          %v3173 = vmul.f32 %v3148, %v3172
          %v3174 = vmin.f32 %v3173, 1.0
          %v3175 = vmax.f32 %v3174, -1.0
          %v3176 = vmul.f32 %v3133, %v3133
          %v3177 = vmin.f32 16.0, %v3176
          %v3178 = vmul.f32 %v3177, 2.1237322e-06
          %v3179 = vadd.f32 %v3178, 0.00028619796
          %v3180 = vmul.f32 %v3177, %v3179
          %v3181 = vadd.f32 %v3180, 0.0036580483
          %v3182 = vmul.f32 %v3177, %v3181
          %v3183 = vadd.f32 %v3182, 0.05243302
          %v3184 = vmul.f32 %v3177, %v3183
          %v3185 = vadd.f32 %v3184, 0.18741608
          %v3186 = vmul.f32 %v3177, %v3185
          %v3187 = vadd.f32 %v3186, 1.1283791
          %v3188 = vmul.f32 %v3133, %v3187
          %v3189 = vmul.f32 %v3177, 3.8918573e-05
          %v3190 = vadd.f32 %v3189, 0.001143296
          %v3191 = vmul.f32 %v3177, %v3190
          %v3192 = vadd.f32 %v3191, 0.014752088
          %v3193 = vmul.f32 %v3177, %v3192
          %v3194 = vadd.f32 %v3193, 0.112945676
          %v3195 = vmul.f32 %v3177, %v3194
          %v3196 = vadd.f32 %v3195, 0.4994258
          %v3197 = vmul.f32 %v3177, %v3196
          %v3198 = vadd.f32 %v3197, 1.0
          %v3199 = vrcp.pop %v3198
          %v3200 = vmul.f32 %v3198, %v3199
          %v3201 = vsub.f32 1.0, %v3200
          %v3202 = vmul.f32 %v3199, %v3201
          %v3203 = vadd.f32 %v3199, %v3202
          %vm3204 = vweird.f32 %v3198
          %vm3205 = vweird.f32 %v3199
          %vm3206 = vmor %vm3204, %vm3205
          %v3207 = vsel %vm3206, %v3199, %v3203
          %v3208 = vand.u32 2147483647, %v3198
          %vm3209 = vcmp.eq.f32.partialorder %v3208, 8.507059e+37
          %v3210 = vand.u32 %v3198, 2147483648
          %v3211 = vor.u32 1.1754944e-38, %v3210
          %v3212 = vsel %vm3209, %v3211, %v3207
          %v3213 = vmul.f32 %v3188, %v3212
          %v3214 = vmin.f32 %v3213, 1.0
          %v3215 = vmax.f32 %v3214, -1.0
          %v3216 = vmul.f32 %v3134, %v3134
          %v3217 = vmin.f32 16.0, %v3216
          %v3218 = vmul.f32 %v3217, 2.1237322e-06
          %v3219 = vadd.f32 %v3218, 0.00028619796
          %v3220 = vmul.f32 %v3217, %v3219
          %v3221 = vadd.f32 %v3220, 0.0036580483
          %v3222 = vmul.f32 %v3217, %v3221
          %v3223 = vadd.f32 %v3222, 0.05243302
          %v3224 = vmul.f32 %v3217, %v3223
          %v3225 = vadd.f32 %v3224, 0.18741608
          %v3226 = vmul.f32 %v3217, %v3225
          %v3227 = vadd.f32 %v3226, 1.1283791
          %v3228 = vmul.f32 %v3134, %v3227
          %v3229 = vmul.f32 %v3217, 3.8918573e-05
          %v3230 = vadd.f32 %v3229, 0.001143296
          %v3231 = vmul.f32 %v3217, %v3230
          %v3232 = vadd.f32 %v3231, 0.014752088
          %v3233 = vmul.f32 %v3217, %v3232
          %v3234 = vadd.f32 %v3233, 0.112945676
          %v3235 = vmul.f32 %v3217, %v3234
          %v3236 = vadd.f32 %v3235, 0.4994258
          %v3237 = vmul.f32 %v3217, %v3236
          %v3238 = vadd.f32 %v3237, 1.0
          %v3239 = vrcp.pop %v3238
          %v3240 = vmul.f32 %v3238, %v3239
          %v3241 = vsub.f32 1.0, %v3240
          %v3242 = vmul.f32 %v3239, %v3241
          %v3243 = vadd.f32 %v3239, %v3242
          %vm3244 = vweird.f32 %v3238
          %vm3245 = vweird.f32 %v3239
          %vm3246 = vmor %vm3244, %vm3245
          %v3247 = vsel %vm3246, %v3239, %v3243
          %v3248 = vand.u32 2147483647, %v3238
          %vm3249 = vcmp.eq.f32.partialorder %v3248, 8.507059e+37
          %v3250 = vand.u32 %v3238, 2147483648
          %v3251 = vor.u32 1.1754944e-38, %v3250
          %v3252 = vsel %vm3249, %v3251, %v3247
          %v3253 = vmul.f32 %v3228, %v3252
          %v3254 = vmin.f32 %v3253, 1.0
          %v3255 = vmax.f32 %v3254, -1.0
          %v3256 = vmul.f32 %v3135, %v3135
          %v3257 = vmin.f32 16.0, %v3256
          %v3258 = vmul.f32 %v3257, 2.1237322e-06
          %v3259 = vadd.f32 %v3258, 0.00028619796
          %v3260 = vmul.f32 %v3257, %v3259
          %v3261 = vadd.f32 %v3260, 0.0036580483
          %v3262 = vmul.f32 %v3257, %v3261
          %v3263 = vadd.f32 %v3262, 0.05243302
          %v3264 = vmul.f32 %v3257, %v3263
          %v3265 = vadd.f32 %v3264, 0.18741608
          %v3266 = vmul.f32 %v3257, %v3265
          %v3267 = vadd.f32 %v3266, 1.1283791
          %v3268 = vmul.f32 %v3135, %v3267
          %v3269 = vmul.f32 %v3257, 3.8918573e-05
          %v3270 = vadd.f32 %v3269, 0.001143296
          %v3271 = vmul.f32 %v3257, %v3270
          %v3272 = vadd.f32 %v3271, 0.014752088
          %v3273 = vmul.f32 %v3257, %v3272
          %v3274 = vadd.f32 %v3273, 0.112945676
          %v3275 = vmul.f32 %v3257, %v3274
          %v3276 = vadd.f32 %v3275, 0.4994258
          %v3277 = vmul.f32 %v3257, %v3276
          %v3278 = vadd.f32 %v3277, 1.0
          %v3279 = vrcp.pop %v3278
          %v3280 = vmul.f32 %v3278, %v3279
          %v3281 = vsub.f32 1.0, %v3280
          %v3282 = vmul.f32 %v3279, %v3281
          %v3283 = vadd.f32 %v3279, %v3282
          %vm3284 = vweird.f32 %v3278
          %vm3285 = vweird.f32 %v3279
          %vm3286 = vmor %vm3284, %vm3285
          %v3287 = vsel %vm3286, %v3279, %v3283
          %v3288 = vand.u32 2147483647, %v3278
          %vm3289 = vcmp.eq.f32.partialorder %v3288, 8.507059e+37
          %v3290 = vand.u32 %v3278, 2147483648
          %v3291 = vor.u32 1.1754944e-38, %v3290
          %v3292 = vsel %vm3289, %v3291, %v3287
          %v3293 = vmul.f32 %v3268, %v3292
          %v3294 = vmin.f32 %v3293, 1.0
          %v3295 = vmax.f32 %v3294, -1.0
          %v3296 = vadd.f32 %v3175, 1.0
          %v3297 = vadd.f32 %v3215, 1.0
          %v3298 = vadd.f32 %v3255, 1.0
          %v3299 = vadd.f32 %v3295, 1.0
          %v3300 = vmul.f32 %v3128, %v3296
          %v3301 = vmul.f32 %v3129, %v3297
          %v3302 = vmul.f32 %v3130, %v3298
          %v3303 = vmul.f32 %v3131, %v3299
          %vm3304 = vcmask 1040384
          %v3305 = vsel %vm3304, %v3300, 0.0
          %v3306 = vsel %vm3304, %v3301, 0.0
          %v3307 = vadd.f32 %v3305, %v3306
          %v3308 = vsel %vm3304, %v3302, 0.0
          %v3309 = vadd.f32 %v3307, %v3308
          %v3310 = vsel %vm3304, %v3303, 0.0
          %v3311 = vadd.f32 %v3309, %v3310
          %3312 = vadd.xlane.f32.xlu0 %v3311
          %v3313 = vpop.xlane.xlu0 %3312
          %v3314 = vrcp.pop 512.0
          %v3315 = vmul.f32 512.0, %v3314
          %v3316 = vsub.f32 1.0, %v3315
          %v3317 = vmul.f32 %v3314, %v3316
          %v3318 = vadd.f32 %v3314, %v3317
          %vm3319 = vweird.f32 %v3314
          %v3320 = vsel %vm3319, %v3314, %v3318
          %v3321 = vmul.f32 %v3313, %v3320
          %v3322 = vsub.f32 %v3300, %v3321
          %v3323 = vsub.f32 %v3301, %v3321
          %v3324 = vsub.f32 %v3302, %v3321
          %v3325 = vsub.f32 %v3303, %v3321
          %v3326 = vmul.f32 %v3322, %v3322
          %v3327 = vmul.f32 %v3323, %v3323
          %v3328 = vmul.f32 %v3324, %v3324
          %v3329 = vmul.f32 %v3325, %v3325
          %v3330 = vsel %vm3304, %v3326, 0.0
          %v3331 = vsel %vm3304, %v3327, 0.0
          %v3332 = vadd.f32 %v3330, %v3331
          %v3333 = vsel %vm3304, %v3328, 0.0
          %v3334 = vadd.f32 %v3332, %v3333
          %v3335 = vsel %vm3304, %v3329, 0.0
          %v3336 = vadd.f32 %v3334, %v3335
          %3337 = vadd.xlane.f32.xlu0 %v3336
          %v3338 = vpop.xlane.xlu0 %3337
          %v3339 = vmul.f32 %v3338, %v3320
          %v3340 = vadd.f32 %v3339, 1e-05
          %v3341 = vrsqrt.pop %v3340
          %v3342 = vmul.f32 %v3341, %v3340
          %v3343 = vmul.f32 %v3342, %v3341
          %v3344 = vmul.f32 0.5, %v3343
          %v3345 = vsub.f32 1.5, %v3344
          %v3346 = vmul.f32 %v3341, %v3345
          %vm3347 = vweird.f32 %v3340
          %vm3348 = vweird.f32 %v3341
          %vm3349 = vmor %vm3347, %vm3348
          %v3350 = vsel %vm3349, %v3341, %v3346
          %v3351 = vmul.f32 %v3322, %v3350
          %v3352 = vmul.f32 %v3323, %v3350
          %v3353 = vmul.f32 %v3324, %v3350
          %v3354 = vmul.f32 %v3325, %v3350
          %v3355 = vld [vmem:[%s3] sm:$0xf]
          %v3357 = vperm.slane %v3355, 0
          %v3358 = vperm.slane %v3355, 1
          %v3359 = vperm.slane %v3355, 2
          %v3360 = vperm.slane %v3355, 3
          %v3365 = vmul.f32 %v3351, %v3357
          %v3366 = vmul.f32 %v3352, %v3358
          %v3367 = vmul.f32 %v3353, %v3359
          %v3368 = vmul.f32 %v3354, %v3360
          %v3369 = vld [vmem:[%s4] sm:$0xf]
          %v3371 = vperm.slane %v3369, 0
          %v3372 = vperm.slane %v3369, 1
          %v3373 = vperm.slane %v3369, 2
          %v3374 = vperm.slane %v3369, 3
          %v3379 = vadd.f32 %v3365, %v3371
          %v3380 = vadd.f32 %v3366, %v3372
          %v3381 = vadd.f32 %v3367, %v3373
          %v3382 = vadd.f32 %v3368, %v3374
          %v3383 = vpack.c.bf16 %v3379, %v3379
          %v3384 = vpack.c.bf16 %v3380, %v3380
          %v3385 = vpack.c.bf16 %v3381, %v3381
          %v3386 = vpack.c.bf16 %v3382, %v3382
          %v3387 = vld [vmem:[#allocation17] sm:$0xf]
          %v3388 = vld [vmem:[#allocation17 + $0x4] sm:$0xf]
          %v3389 = vld [vmem:[#allocation17 + $0x8] sm:$0xf]
          %v3390 = vld [vmem:[#allocation17 + $0xc] sm:$0xf]
          %v3391 = vld [vmem:[#allocation17 + $0x10] sm:$0xf]
          %v3392 = vld [vmem:[#allocation17 + $0x14] sm:$0xf]
          %v3393 = vld [vmem:[#allocation17 + $0x18] sm:$0xf]
          %v3394 = vld [vmem:[#allocation17 + $0x1c] sm:$0xf]
          %v3395 = vld [vmem:[#allocation17 + $0x20] sm:$0xf]
          %v3396 = vld [vmem:[#allocation17 + $0x24] sm:$0xf]
          %v3397 = vld [vmem:[#allocation17 + $0x28] sm:$0xf]
          %v3398 = vld [vmem:[#allocation17 + $0x2c] sm:$0xf]
          %v3399 = vld [vmem:[#allocation17 + $0x30] sm:$0xf]
          %v3400 = vld [vmem:[#allocation17 + $0x34] sm:$0xf]
          %v3401 = vld [vmem:[#allocation17 + $0x38] sm:$0xf]
          %v3402 = vld [vmem:[#allocation17 + $0x3c] sm:$0xf]
          %v3403 = vld [vmem:[#allocation17 + $0x40] sm:$0xf]
          %v3404 = vld [vmem:[#allocation17 + $0x44] sm:$0xf]
          %v3405 = vld [vmem:[#allocation17 + $0x48] sm:$0xf]
          %v3406 = vld [vmem:[#allocation17 + $0x4c] sm:$0xf]
          %v3407 = vld [vmem:[#allocation17 + $0x50] sm:$0xf]
          %v3408 = vld [vmem:[#allocation17 + $0x54] sm:$0xf]
          %v3409 = vld [vmem:[#allocation17 + $0x58] sm:$0xf]
          %v3410 = vld [vmem:[#allocation17 + $0x5c] sm:$0xf]
          %v3411 = vld [vmem:[#allocation17 + $0x60] sm:$0xf]
          %v3412 = vld [vmem:[#allocation17 + $0x64] sm:$0xf]
          %v3413 = vld [vmem:[#allocation17 + $0x68] sm:$0xf]
          %v3414 = vld [vmem:[#allocation17 + $0x6c] sm:$0xf]
          %v3415 = vld [vmem:[#allocation17 + $0x70] sm:$0xf]
          %v3416 = vld [vmem:[#allocation17 + $0x74] sm:$0xf]
          %v3417 = vld [vmem:[#allocation17 + $0x78] sm:$0xf]
          %v3418 = vld [vmem:[#allocation17 + $0x7c] sm:$0xf]
          %v3419 = vld [vmem:[#allocation17 + $0x80] sm:$0xf]
          %v3420 = vld [vmem:[#allocation17 + $0x84] sm:$0xf]
          %v3421 = vld [vmem:[#allocation17 + $0x88] sm:$0xf]
          %v3422 = vld [vmem:[#allocation17 + $0x8c] sm:$0xf]
          %v3423 = vld [vmem:[#allocation17 + $0x90] sm:$0xf]
          %v3424 = vld [vmem:[#allocation17 + $0x94] sm:$0xf]
          %v3425 = vld [vmem:[#allocation17 + $0x98] sm:$0xf]
          %v3426 = vld [vmem:[#allocation17 + $0x9c] sm:$0xf]
          %v3427 = vld [vmem:[#allocation17 + $0xa0] sm:$0xf]
          %v3428 = vld [vmem:[#allocation17 + $0xa4] sm:$0xf]
          %v3429 = vld [vmem:[#allocation17 + $0xa8] sm:$0xf]
          %v3430 = vld [vmem:[#allocation17 + $0xac] sm:$0xf]
          %v3431 = vld [vmem:[#allocation17 + $0xb0] sm:$0xf]
          %v3432 = vld [vmem:[#allocation17 + $0xb4] sm:$0xf]
          %v3433 = vld [vmem:[#allocation17 + $0xb8] sm:$0xf]
          %v3434 = vld [vmem:[#allocation17 + $0xbc] sm:$0xf]
          %v3435 = vld [vmem:[#allocation17 + $0xc0] sm:$0xf]
          %v3436 = vld [vmem:[#allocation17 + $0xc4] sm:$0xf]
          %v3437 = vld [vmem:[#allocation17 + $0xc8] sm:$0xf]
          %v3438 = vld [vmem:[#allocation17 + $0xcc] sm:$0xf]
          %v3439 = vld [vmem:[#allocation17 + $0xd0] sm:$0xf]
          %v3440 = vld [vmem:[#allocation17 + $0xd4] sm:$0xf]
          %v3441 = vld [vmem:[#allocation17 + $0xd8] sm:$0xf]
          %v3442 = vld [vmem:[#allocation17 + $0xdc] sm:$0xf]
          %v3443 = vld [vmem:[#allocation17 + $0xe0] sm:$0xf]
          %v3444 = vld [vmem:[#allocation17 + $0xe4] sm:$0xf]
          %v3445 = vld [vmem:[#allocation17 + $0xe8] sm:$0xf]
          %v3446 = vld [vmem:[#allocation17 + $0xec] sm:$0xf]
          %v3447 = vld [vmem:[#allocation17 + $0xf0] sm:$0xf]
          %v3448 = vld [vmem:[#allocation17 + $0xf4] sm:$0xf]
          %v3449 = vld [vmem:[#allocation17 + $0xf8] sm:$0xf]
          %v3450 = vld [vmem:[#allocation17 + $0xfc] sm:$0xf]
          %v3451 = vld [vmem:[#allocation18] sm:$0x1]
          %v3516 = vunpack.c.l.b16 %v3387
          %v3517 = vunpack.c.l.b16 %v3388
          %v3518 = vunpack.c.l.b16 %v3389
          %v3519 = vunpack.c.l.b16 %v3390
          %v3520 = vunpack.c.l.b16 %v3391
          %v3521 = vunpack.c.l.b16 %v3392
          %v3522 = vunpack.c.l.b16 %v3393
          %v3523 = vunpack.c.l.b16 %v3394
          %v3524 = vunpack.c.l.b16 %v3395
          %v3525 = vunpack.c.l.b16 %v3396
          %v3526 = vunpack.c.l.b16 %v3397
          %v3527 = vunpack.c.l.b16 %v3398
          %v3528 = vunpack.c.l.b16 %v3399
          %v3529 = vunpack.c.l.b16 %v3400
          %v3530 = vunpack.c.l.b16 %v3401
          %v3531 = vunpack.c.l.b16 %v3402
          %v3532 = vunpack.c.l.b16 %v3403
          %v3533 = vunpack.c.l.b16 %v3404
          %v3534 = vunpack.c.l.b16 %v3405
          %v3535 = vunpack.c.l.b16 %v3406
          %v3536 = vunpack.c.l.b16 %v3407
          %v3537 = vunpack.c.l.b16 %v3408
          %v3538 = vunpack.c.l.b16 %v3409
          %v3539 = vunpack.c.l.b16 %v3410
          %v3540 = vunpack.c.l.b16 %v3411
          %v3541 = vunpack.c.l.b16 %v3412
          %v3542 = vunpack.c.l.b16 %v3413
          %v3543 = vunpack.c.l.b16 %v3414
          %v3544 = vunpack.c.l.b16 %v3415
          %v3545 = vunpack.c.l.b16 %v3416
          %v3546 = vunpack.c.l.b16 %v3417
          %v3547 = vunpack.c.l.b16 %v3418
          %v3548 = vunpack.c.l.b16 %v3419
          %v3549 = vunpack.c.l.b16 %v3420
          %v3550 = vunpack.c.l.b16 %v3421
          %v3551 = vunpack.c.l.b16 %v3422
          %v3552 = vunpack.c.l.b16 %v3423
          %v3553 = vunpack.c.l.b16 %v3424
          %v3554 = vunpack.c.l.b16 %v3425
          %v3555 = vunpack.c.l.b16 %v3426
          %v3556 = vunpack.c.l.b16 %v3427
          %v3557 = vunpack.c.l.b16 %v3428
          %v3558 = vunpack.c.l.b16 %v3429
          %v3559 = vunpack.c.l.b16 %v3430
          %v3560 = vunpack.c.l.b16 %v3431
          %v3561 = vunpack.c.l.b16 %v3432
          %v3562 = vunpack.c.l.b16 %v3433
          %v3563 = vunpack.c.l.b16 %v3434
          %v3564 = vunpack.c.l.b16 %v3435
          %v3565 = vunpack.c.l.b16 %v3436
          %v3566 = vunpack.c.l.b16 %v3437
          %v3567 = vunpack.c.l.b16 %v3438
          %v3568 = vunpack.c.l.b16 %v3439
          %v3569 = vunpack.c.l.b16 %v3440
          %v3570 = vunpack.c.l.b16 %v3441
          %v3571 = vunpack.c.l.b16 %v3442
          %v3572 = vunpack.c.l.b16 %v3443
          %v3573 = vunpack.c.l.b16 %v3444
          %v3574 = vunpack.c.l.b16 %v3445
          %v3575 = vunpack.c.l.b16 %v3446
          %v3576 = vunpack.c.l.b16 %v3447
          %v3577 = vunpack.c.l.b16 %v3448
          %v3578 = vunpack.c.l.b16 %v3449
          %v3579 = vunpack.c.l.b16 %v3450
          %v3580 = vpack.c.b16 %v3517, %v3516
          %v3581 = vpack.c.b16 %v3519, %v3518
          %v3582 = vpack.c.b16 %v3521, %v3520
          %v3583 = vpack.c.b16 %v3523, %v3522
          %v3584 = vpack.c.b16 %v3525, %v3524
          %v3585 = vpack.c.b16 %v3527, %v3526
          %v3586 = vpack.c.b16 %v3529, %v3528
          %v3587 = vpack.c.b16 %v3531, %v3530
          %v3588 = vpack.c.b16 %v3533, %v3532
          %v3589 = vpack.c.b16 %v3535, %v3534
          %v3590 = vpack.c.b16 %v3537, %v3536
          %v3591 = vpack.c.b16 %v3539, %v3538
          %v3592 = vpack.c.b16 %v3541, %v3540
          %v3593 = vpack.c.b16 %v3543, %v3542
          %v3594 = vpack.c.b16 %v3545, %v3544
          %v3595 = vpack.c.b16 %v3547, %v3546
          %v3596 = vpack.c.b16 %v3549, %v3548
          %v3597 = vpack.c.b16 %v3551, %v3550
          %v3598 = vpack.c.b16 %v3553, %v3552
          %v3599 = vpack.c.b16 %v3555, %v3554
          %v3600 = vpack.c.b16 %v3557, %v3556
          %v3601 = vpack.c.b16 %v3559, %v3558
          %v3602 = vpack.c.b16 %v3561, %v3560
          %v3603 = vpack.c.b16 %v3563, %v3562
          %v3604 = vpack.c.b16 %v3565, %v3564
          %v3605 = vpack.c.b16 %v3567, %v3566
          %v3606 = vpack.c.b16 %v3569, %v3568
          %v3607 = vpack.c.b16 %v3571, %v3570
          %v3608 = vpack.c.b16 %v3573, %v3572
          %v3609 = vpack.c.b16 %v3575, %v3574
          %v3610 = vpack.c.b16 %v3577, %v3576
          %v3611 = vpack.c.b16 %v3579, %v3578
          %3644 = vmatpush.bf16.msra.mxu0 %v3587
          %3645 = vmatpush.bf16.msra.mxu0 %v3586
          %3646 = vmatpush.bf16.msra.mxu0 %v3585
          %3647 = vmatpush.bf16.msra.mxu0 %v3584
          %3648 = vmatpush.bf16.msra.mxu0 %v3583
          %3649 = vmatpush.bf16.msra.mxu0 %v3582
          %3650 = vmatpush.bf16.msra.mxu0 %v3581
          %3651 = vmatpush.bf16.msra.mxu0 %v3580
          %3652 = vmatmul.bf16.gmra.mxu0 %v3383
          %v3653 = vpop.f32.mrf.mxu0
          %v3654 = vadd.f32 %v3451, %v3653
          %v3655 = vpop.f32.mrf.mxu0
          %3656 = vdwg.mxu0
          %3657 = vmatpush.bf16.msra.mxu0 %v3595
          %3658 = vmatpush.bf16.msra.mxu0 %v3594
          %3659 = vmatpush.bf16.msra.mxu0 %v3593
          %3660 = vmatpush.bf16.msra.mxu0 %v3592
          %3661 = vmatpush.bf16.msra.mxu0 %v3591
          %3662 = vmatpush.bf16.msra.mxu0 %v3590
          %3663 = vmatpush.bf16.msra.mxu0 %v3589
          %3664 = vmatpush.bf16.msra.mxu0 %v3588
          %3665 = vmatmul.bf16.gmra.mxu0 %v3384
          %v3666 = vpop.f32.mrf.mxu0
          %v3667 = vadd.f32 %v3654, %v3666
          %v3668 = vpop.f32.mrf.mxu0
          %3669 = vdwg.mxu0
          %3670 = vmatpush.bf16.msra.mxu0 %v3603
          %3671 = vmatpush.bf16.msra.mxu0 %v3602
          %3672 = vmatpush.bf16.msra.mxu0 %v3601
          %3673 = vmatpush.bf16.msra.mxu0 %v3600
          %3674 = vmatpush.bf16.msra.mxu0 %v3599
          %3675 = vmatpush.bf16.msra.mxu0 %v3598
          %3676 = vmatpush.bf16.msra.mxu0 %v3597
          %3677 = vmatpush.bf16.msra.mxu0 %v3596
          %3678 = vmatmul.bf16.gmra.mxu0 %v3385
          %v3679 = vpop.f32.mrf.mxu0
          %v3680 = vadd.f32 %v3667, %v3679
          %v3681 = vpop.f32.mrf.mxu0
          %3682 = vdwg.mxu0
          %3683 = vmatpush.bf16.msra.mxu0 %v3611
          %3684 = vmatpush.bf16.msra.mxu0 %v3610
          %3685 = vmatpush.bf16.msra.mxu0 %v3609
          %3686 = vmatpush.bf16.msra.mxu0 %v3608
          %3687 = vmatpush.bf16.msra.mxu0 %v3607
          %3688 = vmatpush.bf16.msra.mxu0 %v3606
          %3689 = vmatpush.bf16.msra.mxu0 %v3605
          %3690 = vmatpush.bf16.msra.mxu0 %v3604
          %3691 = vmatmul.bf16.gmra.mxu0 %v3386
          %v3692 = vpop.f32.mrf.mxu0
          %v3693 = vadd.f32 %v3680, %v3692
          %v3694 = vpop.f32.mrf.mxu0
          %3695 = vdwg.mxu0
          %3696 = vst [vmem:[%s355] sm:$0x1] %v3693
        $region64: #{encoder_decoder_forward.2} parent=55 // pred_fallthru
          _
        %s3697 = sand.u32 %s247, 1
        %s3698 = scalar_lea.sflag [#allocation14], %s3697
        %s3699 = sand.u32 %s247, 1
        %s3700 = scalar_lea.vmem [#allocation13], %s3699
        // Predicated region
        $region65: #{encoder_decoder_forward.2} parent=55 // pred_check
          %p3701 = pneg %p257
        $region66: #{encoder_decoder_forward.2} parent=55 // pred_check_branch
          %3703 = sbr.rel (%p3701) target = $region68
        $region67: #{encoder_decoder_forward.2} parent=55 // pred_region
          %3705 = vsyncadd %s3698, 0
          %s3706 = scalar_lea.hbm %s11, %s35
          %s3708 = sshll.u32 %s3700, 4
          %s3709 = int_to_ptr.vmem [resolvable:$true] %s3708
          %s3710 = sshll.u32 %s3706, 4
          %s3711 = int_to_ptr.hbm [resolvable:$true] %s3710
          %3713 = dma.vmem_to_hbm [thread:$0]  %s3709, 16, %s3711, %s3698
        $region68: #{encoder_decoder_forward.2} parent=55 // pred_fallthru
          _
      $region56: #{encoder_decoder_forward.2} parent=5 // pred_fallthru
        _
      %p3714 = scmp.le.s32.totalorder 2, %s26
      // Predicated region
      $region69: #{encoder_decoder_forward.2} parent=5 // pred_check
        %p3715 = pneg %p3714
      $region70: #{encoder_decoder_forward.2} parent=5 // pred_check_branch
        %3717 = sbr.rel (%p3715) target = $region72
      $region71: #{encoder_decoder_forward.2} parent=5 // pred_region
        %s3718 = ssub.s32 %s26, 2
        // Predicated region
        $region73: #{encoder_decoder_forward.2} parent=71 // pred_check
          %p3719 = pneg %p263
        $region74: #{encoder_decoder_forward.2} parent=71 // pred_check_branch
          %3721 = sbr.rel (%p3719) target = $region76
        $region75: #{encoder_decoder_forward.2} parent=71 // pred_region
          %s3722 = sand.u32 %s248, 1
          %s3723 = scalar_lea.sflag [#allocation14], %s3722
          %s3724 = sand.u32 %s248, 1
          %s3725 = scalar_lea.vmem [#allocation13], %s3724
          %3727 = dma.done %s3723, 16
        $region76: #{encoder_decoder_forward.2} parent=71 // pred_fallthru
          _
      $region72: #{encoder_decoder_forward.2} parent=5 // pred_fallthru
        _
    $region6: #{encoder_decoder_forward.2} parent=1 // loop_footer
      %s30 = sadd.s32 1, %s26
    $region7: #{encoder_decoder_forward.2} parent=1 // loop_footer_branch
      %25 = sbr.rel target = $region3
    $region8: #{encoder_decoder_forward.2} parent=1 // loop_exit
      _
    %3728 = vsyncpa [#allocation14], 1
    %s3729 = scalar_lea.sflag [#allocation14], 1
    %3730 = vsyncpa %s3729, 1

</llo_original>
